<compile_context>
chip_gen: v6e
topology: v6e:2x2x1
jax: 0.10.0
libtpu: 0.0.40
codegen_flags: <defaults>
</compile_context>

<pallas_src>
import jax
import jax.numpy as jnp
from jax.experimental import pallas as pl
from jax.experimental.pallas import tpu as pltpu

H = W = 7
PW = W + 2                     # 9: row stride of the 9x9 zero-padded image
NCOLS_IN = H * PW              # 63: W-padded, row-major flattened input cols
HW = H * W                     # 49
LANES = 128
CIN = 192
COUT = 48
NTAPS = 9

# Channel layout of the concatenated (1, 2064, 7, 7) output:
#   x397 (1056) | x404..x530 (19 x 48) | x537 = conv (48) | x544 (48)
_layout = [1056] + [48] * 19 + ["conv"] + [48]
BYPASS_CH, BYPASS_OFF = [], []
CONV_OFF = None
_off = 0
for _item in _layout:
    if _item == "conv":
        CONV_OFF = _off
        _off += COUT
    else:
        BYPASS_CH.append(_item)
        BYPASS_OFF.append(_off)
        _off += _item
TOTAL_CH = _off                # 2064
N_BYPASS = len(BYPASS_CH)      # 21

# Roll-wrap safety: max valid output column (H-1)*PW + (W-1) = 60 plus the max
# tap offset 2*PW + 2 = 20 must stay < LANES, so wrapped lanes only land in
# columns >= LANES - 20 = 108 which are never read back.
assert (H - 1) * PW + (W - 1) + 2 * PW + 2 < LANES


def _conv_cat_kernel(x_ref, w_ref, *rest):
    # x_ref : (CIN, 63)  bf16  VMEM — W-padded rows, col = oy*9 + px
    # w_ref : (432, CIN) bf16  VMEM — row = (dy*3+dx)*48 + o
    # rest  : 21 bypass HBM refs, out HBM ref (2064,49) f32, then scratch:
    #         xp (CIN,128) bf16, stage (48,49) f32, sems DMA(22)
    bypass_refs = rest[:N_BYPASS]
    out_ref = rest[N_BYPASS]
    xp_ref, stage_ref, sems = rest[N_BYPASS + 1:]

    # (1) Kick off the 21 bypass channel-slab copies (HBM->HBM) so they run
    #     underneath the conv compute below.
    copies = []
    for i in range(N_BYPASS):
        cp = pltpu.make_async_copy(
            bypass_refs[i],
            out_ref.at[pl.ds(BYPASS_OFF[i], BYPASS_CH[i])],
            sems.at[i])
        cp.start()
        copies.append(cp)

    # (2) Build the zero-padded, row-stride-9, channel-major image in VMEM:
    #     column p = py*9 + px of the 9x9 padded image (cols 81..127 zero).
    xp_ref[...] = jnp.zeros_like(xp_ref)
    xp_ref[:, PW:PW + NCOLS_IN] = x_ref[...]        # rows py = 1..7

    # (3) All nine taps in one (432,192)@(192,128) bf16 matmul, f32 accum.
    acc = jnp.dot(w_ref[...], xp_ref[...], preferred_element_type=jnp.float32)

    # (4) Combine taps: slab t (tap dy,dx) contributes its column j+off to
    #     output column j, off = dy*9 + dx  ->  static left roll by off lanes.
    out48 = acc[0:COUT]                              # tap (0,0): off = 0
    for t in range(1, NTAPS):
        dy, dx = divmod(t, 3)
        off = dy * PW + dx
        slab = acc[t * COUT:(t + 1) * COUT]
        out48 = out48 + pltpu.roll(slab, shift=LANES - off, axis=1)

    # (5) Compact stride-9 spatial columns into the NCHW-contiguous (48,49)
    #     staging slab: stage[:, oy*7+ox] = out48[:, oy*9+ox].
    for oy in range(H):
        stage_ref[:, oy * W:(oy + 1) * W] = out48[:, oy * PW:oy * PW + W]

    # (6) DMA the conv slab into the concatenated output, then drain all DMAs.
    conv_cp = pltpu.make_async_copy(
        stage_ref, out_ref.at[pl.ds(CONV_OFF, COUT)], sems.at[N_BYPASS])
    conv_cp.start()
    conv_cp.wait()
    for cp in copies:
        cp.wait()


def pack_weight(w_oihw):
    """(COUT, CIN, 3, 3) -> (9*COUT, CIN) bf16, row = (dy*3+dx)*COUT + o.
    Done once at init, outside jit."""
    w = jnp.transpose(w_oihw, (2, 3, 0, 1)).reshape(NTAPS * COUT, CIN)
    return w.astype(jnp.bfloat16)


def conv_cat(w_flat, x536, bypass):
    """bypass: the 21 non-conv tensors (1, C, 7, 7), in concat order."""
    # Conv input: NCHW (1,192,7,7) -> channel-major (192,7,7) -> W-pad ->
    # (192,7,9) -> (192,63) -> bf16.  This is the only XLA pre-fusion.
    x = x536.reshape(CIN, H, W)
    x = jnp.pad(x, ((0, 0), (0, 0), (1, 1)))
    x = x.reshape(CIN, NCOLS_IN).astype(jnp.bfloat16)

    bypass2d = [b.reshape(c, HW) for b, c in zip(bypass, BYPASS_CH)]

    out2d = pl.pallas_call(
        _conv_cat_kernel,
        out_shape=jax.ShapeDtypeStruct((TOTAL_CH, HW), jnp.float32),
        in_specs=(
            [pl.BlockSpec(memory_space=pltpu.MemorySpace.VMEM),    # x
             pl.BlockSpec(memory_space=pltpu.MemorySpace.VMEM)]    # weights
            + [pl.BlockSpec(memory_space=pl.ANY)] * N_BYPASS),     # bypass HBM
        out_specs=pl.BlockSpec(memory_space=pl.ANY),               # HBM output
        scratch_shapes=[
            pltpu.VMEM((CIN, LANES), jnp.bfloat16),   # padded image
            pltpu.VMEM((COUT, HW), jnp.float32),      # conv staging slab
            pltpu.SemaphoreType.DMA((N_BYPASS + 1,)),
        ],
    )(x, w_flat, *bypass2d)

    return out2d.reshape(1, TOTAL_CH, H, W)


@jax.jit
def forward(w_flat, x536, x397, x404, x411, x418, x425, x432, x439, x446,
            x453, x460, x467, x474, x481, x488, x495, x502, x509, x516,
            x523, x530, x544):
    bypass = [x397, x404, x411, x418, x425, x432, x439, x446, x453, x460,
              x467, x474, x481, x488, x495, x502, x509, x516, x523, x530,
              x544]
    return conv_cat(w_flat, x536, bypass)


if __name__ == "__main__":
    key = jax.random.PRNGKey(0)
    keys = jax.random.split(key, 24)

    # Deterministic parameter init (Conv2d(192, 48, 3x3), kaiming-like scale).
    fan_in = CIN * 3 * 3
    weight = jax.random.normal(keys[0], (COUT, CIN, 3, 3), jnp.float32)
    weight = weight * (2.0 / fan_in) ** 0.5
    w_flat = pack_weight(weight)          # packed + bf16-cast once, outside jit

    # Inputs (shapes taken directly from the module).
    x536 = jax.random.normal(keys[1], (1, CIN, H, W), jnp.float32)
    x397 = jax.random.normal(keys[2], (1, 1056, H, W), jnp.float32)
    xs48 = [jax.random.normal(keys[3 + i], (1, 48, H, W), jnp.float32)
            for i in range(20)]
    (x404, x411, x418, x425, x432, x439, x446, x453, x460, x467,
     x474, x481, x488, x495, x502, x509, x516, x523, x530, x544) = xs48

    out = forward(w_flat, x536, x397, x404, x411, x418, x425, x432, x439,
                  x446, x453, x460, x467, x474, x481, x488, x495, x502,
                  x509, x516, x523, x530, x544)
    out = jax.block_until_ready(out)
    assert out.shape == (1, TOTAL_CH, H, W), out.shape

    # Reference: f32 conv on the bf16-rounded operands (same math as the
    # kernel: bf16 operands, f32 accumulation), then the same 22-way concat.
    xb = x536.astype(jnp.bfloat16).astype(jnp.float32)
    wb = weight.astype(jnp.bfloat16).astype(jnp.float32)
    x537_ref = jax.lax.conv_general_dilated(
        xb, wb, window_strides=(1, 1), padding=((1, 1), (1, 1)),
        dimension_numbers=("NCHW", "OIHW", "NCHW"),
        precision=jax.lax.Precision.HIGHEST)
    ref = jnp.concatenate([x397] + xs48[:19] + [x537_ref, xs48[19]], axis=1)
    err = float(jnp.max(jnp.abs(out - ref)))
    assert err < 1e-3, err

    print("KERNEL_OK")
</pallas_src>

<mosaic_0001>
module attributes {stable_mosaic.version = 11 : i64} {
  func.func @_conv_cat_kernel(%arg0: memref<192x63xbf16, #tpu.memory_space<vmem>>, %arg1: memref<432x192xbf16, #tpu.memory_space<vmem>>, %arg2: memref<1056x49xf32, #tpu.memory_space<any>>, %arg3: memref<48x49xf32, #tpu.memory_space<any>>, %arg4: memref<48x49xf32, #tpu.memory_space<any>>, %arg5: memref<48x49xf32, #tpu.memory_space<any>>, %arg6: memref<48x49xf32, #tpu.memory_space<any>>, %arg7: memref<48x49xf32, #tpu.memory_space<any>>, %arg8: memref<48x49xf32, #tpu.memory_space<any>>, %arg9: memref<48x49xf32, #tpu.memory_space<any>>, %arg10: memref<48x49xf32, #tpu.memory_space<any>>, %arg11: memref<48x49xf32, #tpu.memory_space<any>>, %arg12: memref<48x49xf32, #tpu.memory_space<any>>, %arg13: memref<48x49xf32, #tpu.memory_space<any>>, %arg14: memref<48x49xf32, #tpu.memory_space<any>>, %arg15: memref<48x49xf32, #tpu.memory_space<any>>, %arg16: memref<48x49xf32, #tpu.memory_space<any>>, %arg17: memref<48x49xf32, #tpu.memory_space<any>>, %arg18: memref<48x49xf32, #tpu.memory_space<any>>, %arg19: memref<48x49xf32, #tpu.memory_space<any>>, %arg20: memref<48x49xf32, #tpu.memory_space<any>>, %arg21: memref<48x49xf32, #tpu.memory_space<any>>, %arg22: memref<48x49xf32, #tpu.memory_space<any>>, %arg23: memref<2064x49xf32, #tpu.memory_space<any>>, %arg24: memref<192x128xbf16, #tpu.memory_space<vmem>>, %arg25: memref<48x49xf32, #tpu.memory_space<vmem>>, %arg26: memref<22x!tpu.dma_semaphore, #tpu.memory_space<semaphore_mem>>) attributes {dimension_semantics = [], scalar_prefetch = 0 : i64, scratch_operands = 3 : i64, tpu.core_type = #tpu.core_type<tc>} {
    %c0_i32 = arith.constant 0 : i32
    %c0_i32_0 = arith.constant 0 : i32
    %c0_i32_1 = arith.constant 0 : i32
    %0 = tpu.memref_slice %arg23[%c0_i32_0, %c0_i32_1] : memref<2064x49xf32, #tpu.memory_space<any>> -> memref<1056x49xf32, #tpu.memory_space<any>>
    %1 = tpu.memref_slice %arg26[%c0_i32] : memref<22x!tpu.dma_semaphore, #tpu.memory_space<semaphore_mem>> -> memref<1x!tpu.dma_semaphore, #tpu.memory_space<semaphore_mem>>
    %2 = tpu.memref_squeeze %1 : memref<1x!tpu.dma_semaphore, #tpu.memory_space<semaphore_mem>> -> memref<!tpu.dma_semaphore, #tpu.memory_space<semaphore_mem>>
    tpu.enqueue_dma source(%arg2 : memref<1056x49xf32, #tpu.memory_space<any>>) target(%0 : memref<1056x49xf32, #tpu.memory_space<any>>) target_semaphore(%2 : memref<!tpu.dma_semaphore, #tpu.memory_space<semaphore_mem>>)
    %c1_i32 = arith.constant 1 : i32
    %c1056_i32 = arith.constant 1056 : i32
    %c0_i32_2 = arith.constant 0 : i32
    %3 = tpu.memref_slice %arg23[%c1056_i32, %c0_i32_2] : memref<2064x49xf32, #tpu.memory_space<any>> -> memref<48x49xf32, #tpu.memory_space<any>>
    %4 = tpu.memref_slice %arg26[%c1_i32] : memref<22x!tpu.dma_semaphore, #tpu.memory_space<semaphore_mem>> -> memref<1x!tpu.dma_semaphore, #tpu.memory_space<semaphore_mem>>
    %5 = tpu.memref_squeeze %4 : memref<1x!tpu.dma_semaphore, #tpu.memory_space<semaphore_mem>> -> memref<!tpu.dma_semaphore, #tpu.memory_space<semaphore_mem>>
    tpu.enqueue_dma source(%arg3 : memref<48x49xf32, #tpu.memory_space<any>>) target(%3 : memref<48x49xf32, #tpu.memory_space<any>>) target_semaphore(%5 : memref<!tpu.dma_semaphore, #tpu.memory_space<semaphore_mem>>)
    %c2_i32 = arith.constant 2 : i32
    %c1104_i32 = arith.constant 1104 : i32
    %c0_i32_3 = arith.constant 0 : i32
    %6 = tpu.memref_slice %arg23[%c1104_i32, %c0_i32_3] : memref<2064x49xf32, #tpu.memory_space<any>> -> memref<48x49xf32, #tpu.memory_space<any>>
    %7 = tpu.memref_slice %arg26[%c2_i32] : memref<22x!tpu.dma_semaphore, #tpu.memory_space<semaphore_mem>> -> memref<1x!tpu.dma_semaphore, #tpu.memory_space<semaphore_mem>>
    %8 = tpu.memref_squeeze %7 : memref<1x!tpu.dma_semaphore, #tpu.memory_space<semaphore_mem>> -> memref<!tpu.dma_semaphore, #tpu.memory_space<semaphore_mem>>
    tpu.enqueue_dma source(%arg4 : memref<48x49xf32, #tpu.memory_space<any>>) target(%6 : memref<48x49xf32, #tpu.memory_space<any>>) target_semaphore(%8 : memref<!tpu.dma_semaphore, #tpu.memory_space<semaphore_mem>>)
    %c3_i32 = arith.constant 3 : i32
    %c1152_i32 = arith.constant 1152 : i32
    %c0_i32_4 = arith.constant 0 : i32
    %9 = tpu.memref_slice %arg23[%c1152_i32, %c0_i32_4] : memref<2064x49xf32, #tpu.memory_space<any>> -> memref<48x49xf32, #tpu.memory_space<any>>
    %10 = tpu.memref_slice %arg26[%c3_i32] : memref<22x!tpu.dma_semaphore, #tpu.memory_space<semaphore_mem>> -> memref<1x!tpu.dma_semaphore, #tpu.memory_space<semaphore_mem>>
    %11 = tpu.memref_squeeze %10 : memref<1x!tpu.dma_semaphore, #tpu.memory_space<semaphore_mem>> -> memref<!tpu.dma_semaphore, #tpu.memory_space<semaphore_mem>>
    tpu.enqueue_dma source(%arg5 : memref<48x49xf32, #tpu.memory_space<any>>) target(%9 : memref<48x49xf32, #tpu.memory_space<any>>) target_semaphore(%11 : memref<!tpu.dma_semaphore, #tpu.memory_space<semaphore_mem>>)
    %c4_i32 = arith.constant 4 : i32
    %c1200_i32 = arith.constant 1200 : i32
    %c0_i32_5 = arith.constant 0 : i32
    %12 = tpu.memref_slice %arg23[%c1200_i32, %c0_i32_5] : memref<2064x49xf32, #tpu.memory_space<any>> -> memref<48x49xf32, #tpu.memory_space<any>>
    %13 = tpu.memref_slice %arg26[%c4_i32] : memref<22x!tpu.dma_semaphore, #tpu.memory_space<semaphore_mem>> -> memref<1x!tpu.dma_semaphore, #tpu.memory_space<semaphore_mem>>
    %14 = tpu.memref_squeeze %13 : memref<1x!tpu.dma_semaphore, #tpu.memory_space<semaphore_mem>> -> memref<!tpu.dma_semaphore, #tpu.memory_space<semaphore_mem>>
    tpu.enqueue_dma source(%arg6 : memref<48x49xf32, #tpu.memory_space<any>>) target(%12 : memref<48x49xf32, #tpu.memory_space<any>>) target_semaphore(%14 : memref<!tpu.dma_semaphore, #tpu.memory_space<semaphore_mem>>)
    %c5_i32 = arith.constant 5 : i32
    %c1248_i32 = arith.constant 1248 : i32
    %c0_i32_6 = arith.constant 0 : i32
    %15 = tpu.memref_slice %arg23[%c1248_i32, %c0_i32_6] : memref<2064x49xf32, #tpu.memory_space<any>> -> memref<48x49xf32, #tpu.memory_space<any>>
    %16 = tpu.memref_slice %arg26[%c5_i32] : memref<22x!tpu.dma_semaphore, #tpu.memory_space<semaphore_mem>> -> memref<1x!tpu.dma_semaphore, #tpu.memory_space<semaphore_mem>>
    %17 = tpu.memref_squeeze %16 : memref<1x!tpu.dma_semaphore, #tpu.memory_space<semaphore_mem>> -> memref<!tpu.dma_semaphore, #tpu.memory_space<semaphore_mem>>
    tpu.enqueue_dma source(%arg7 : memref<48x49xf32, #tpu.memory_space<any>>) target(%15 : memref<48x49xf32, #tpu.memory_space<any>>) target_semaphore(%17 : memref<!tpu.dma_semaphore, #tpu.memory_space<semaphore_mem>>)
    %c6_i32 = arith.constant 6 : i32
    %c1296_i32 = arith.constant 1296 : i32
    %c0_i32_7 = arith.constant 0 : i32
    %18 = tpu.memref_slice %arg23[%c1296_i32, %c0_i32_7] : memref<2064x49xf32, #tpu.memory_space<any>> -> memref<48x49xf32, #tpu.memory_space<any>>
    %19 = tpu.memref_slice %arg26[%c6_i32] : memref<22x!tpu.dma_semaphore, #tpu.memory_space<semaphore_mem>> -> memref<1x!tpu.dma_semaphore, #tpu.memory_space<semaphore_mem>>
    %20 = tpu.memref_squeeze %19 : memref<1x!tpu.dma_semaphore, #tpu.memory_space<semaphore_mem>> -> memref<!tpu.dma_semaphore, #tpu.memory_space<semaphore_mem>>
    tpu.enqueue_dma source(%arg8 : memref<48x49xf32, #tpu.memory_space<any>>) target(%18 : memref<48x49xf32, #tpu.memory_space<any>>) target_semaphore(%20 : memref<!tpu.dma_semaphore, #tpu.memory_space<semaphore_mem>>)
    %c7_i32 = arith.constant 7 : i32
    %c1344_i32 = arith.constant 1344 : i32
    %c0_i32_8 = arith.constant 0 : i32
    %21 = tpu.memref_slice %arg23[%c1344_i32, %c0_i32_8] : memref<2064x49xf32, #tpu.memory_space<any>> -> memref<48x49xf32, #tpu.memory_space<any>>
    %22 = tpu.memref_slice %arg26[%c7_i32] : memref<22x!tpu.dma_semaphore, #tpu.memory_space<semaphore_mem>> -> memref<1x!tpu.dma_semaphore, #tpu.memory_space<semaphore_mem>>
    %23 = tpu.memref_squeeze %22 : memref<1x!tpu.dma_semaphore, #tpu.memory_space<semaphore_mem>> -> memref<!tpu.dma_semaphore, #tpu.memory_space<semaphore_mem>>
    tpu.enqueue_dma source(%arg9 : memref<48x49xf32, #tpu.memory_space<any>>) target(%21 : memref<48x49xf32, #tpu.memory_space<any>>) target_semaphore(%23 : memref<!tpu.dma_semaphore, #tpu.memory_space<semaphore_mem>>)
    %c8_i32 = arith.constant 8 : i32
    %c1392_i32 = arith.constant 1392 : i32
    %c0_i32_9 = arith.constant 0 : i32
    %24 = tpu.memref_slice %arg23[%c1392_i32, %c0_i32_9] : memref<2064x49xf32, #tpu.memory_space<any>> -> memref<48x49xf32, #tpu.memory_space<any>>
    %25 = tpu.memref_slice %arg26[%c8_i32] : memref<22x!tpu.dma_semaphore, #tpu.memory_space<semaphore_mem>> -> memref<1x!tpu.dma_semaphore, #tpu.memory_space<semaphore_mem>>
    %26 = tpu.memref_squeeze %25 : memref<1x!tpu.dma_semaphore, #tpu.memory_space<semaphore_mem>> -> memref<!tpu.dma_semaphore, #tpu.memory_space<semaphore_mem>>
    tpu.enqueue_dma source(%arg10 : memref<48x49xf32, #tpu.memory_space<any>>) target(%24 : memref<48x49xf32, #tpu.memory_space<any>>) target_semaphore(%26 : memref<!tpu.dma_semaphore, #tpu.memory_space<semaphore_mem>>)
    %c9_i32 = arith.constant 9 : i32
    %c1440_i32 = arith.constant 1440 : i32
    %c0_i32_10 = arith.constant 0 : i32
    %27 = tpu.memref_slice %arg23[%c1440_i32, %c0_i32_10] : memref<2064x49xf32, #tpu.memory_space<any>> -> memref<48x49xf32, #tpu.memory_space<any>>
    %28 = tpu.memref_slice %arg26[%c9_i32] : memref<22x!tpu.dma_semaphore, #tpu.memory_space<semaphore_mem>> -> memref<1x!tpu.dma_semaphore, #tpu.memory_space<semaphore_mem>>
    %29 = tpu.memref_squeeze %28 : memref<1x!tpu.dma_semaphore, #tpu.memory_space<semaphore_mem>> -> memref<!tpu.dma_semaphore, #tpu.memory_space<semaphore_mem>>
    tpu.enqueue_dma source(%arg11 : memref<48x49xf32, #tpu.memory_space<any>>) target(%27 : memref<48x49xf32, #tpu.memory_space<any>>) target_semaphore(%29 : memref<!tpu.dma_semaphore, #tpu.memory_space<semaphore_mem>>)
    %c10_i32 = arith.constant 10 : i32
    %c1488_i32 = arith.constant 1488 : i32
    %c0_i32_11 = arith.constant 0 : i32
    %30 = tpu.memref_slice %arg23[%c1488_i32, %c0_i32_11] : memref<2064x49xf32, #tpu.memory_space<any>> -> memref<48x49xf32, #tpu.memory_space<any>>
    %31 = tpu.memref_slice %arg26[%c10_i32] : memref<22x!tpu.dma_semaphore, #tpu.memory_space<semaphore_mem>> -> memref<1x!tpu.dma_semaphore, #tpu.memory_space<semaphore_mem>>
    %32 = tpu.memref_squeeze %31 : memref<1x!tpu.dma_semaphore, #tpu.memory_space<semaphore_mem>> -> memref<!tpu.dma_semaphore, #tpu.memory_space<semaphore_mem>>
    tpu.enqueue_dma source(%arg12 : memref<48x49xf32, #tpu.memory_space<any>>) target(%30 : memref<48x49xf32, #tpu.memory_space<any>>) target_semaphore(%32 : memref<!tpu.dma_semaphore, #tpu.memory_space<semaphore_mem>>)
    %c11_i32 = arith.constant 11 : i32
    %c1536_i32 = arith.constant 1536 : i32
    %c0_i32_12 = arith.constant 0 : i32
    %33 = tpu.memref_slice %arg23[%c1536_i32, %c0_i32_12] : memref<2064x49xf32, #tpu.memory_space<any>> -> memref<48x49xf32, #tpu.memory_space<any>>
    %34 = tpu.memref_slice %arg26[%c11_i32] : memref<22x!tpu.dma_semaphore, #tpu.memory_space<semaphore_mem>> -> memref<1x!tpu.dma_semaphore, #tpu.memory_space<semaphore_mem>>
    %35 = tpu.memref_squeeze %34 : memref<1x!tpu.dma_semaphore, #tpu.memory_space<semaphore_mem>> -> memref<!tpu.dma_semaphore, #tpu.memory_space<semaphore_mem>>
    tpu.enqueue_dma source(%arg13 : memref<48x49xf32, #tpu.memory_space<any>>) target(%33 : memref<48x49xf32, #tpu.memory_space<any>>) target_semaphore(%35 : memref<!tpu.dma_semaphore, #tpu.memory_space<semaphore_mem>>)
    %c12_i32 = arith.constant 12 : i32
    %c1584_i32 = arith.constant 1584 : i32
    %c0_i32_13 = arith.constant 0 : i32
    %36 = tpu.memref_slice %arg23[%c1584_i32, %c0_i32_13] : memref<2064x49xf32, #tpu.memory_space<any>> -> memref<48x49xf32, #tpu.memory_space<any>>
    %37 = tpu.memref_slice %arg26[%c12_i32] : memref<22x!tpu.dma_semaphore, #tpu.memory_space<semaphore_mem>> -> memref<1x!tpu.dma_semaphore, #tpu.memory_space<semaphore_mem>>
    %38 = tpu.memref_squeeze %37 : memref<1x!tpu.dma_semaphore, #tpu.memory_space<semaphore_mem>> -> memref<!tpu.dma_semaphore, #tpu.memory_space<semaphore_mem>>
    tpu.enqueue_dma source(%arg14 : memref<48x49xf32, #tpu.memory_space<any>>) target(%36 : memref<48x49xf32, #tpu.memory_space<any>>) target_semaphore(%38 : memref<!tpu.dma_semaphore, #tpu.memory_space<semaphore_mem>>)
    %c13_i32 = arith.constant 13 : i32
    %c1632_i32 = arith.constant 1632 : i32
    %c0_i32_14 = arith.constant 0 : i32
    %39 = tpu.memref_slice %arg23[%c1632_i32, %c0_i32_14] : memref<2064x49xf32, #tpu.memory_space<any>> -> memref<48x49xf32, #tpu.memory_space<any>>
    %40 = tpu.memref_slice %arg26[%c13_i32] : memref<22x!tpu.dma_semaphore, #tpu.memory_space<semaphore_mem>> -> memref<1x!tpu.dma_semaphore, #tpu.memory_space<semaphore_mem>>
    %41 = tpu.memref_squeeze %40 : memref<1x!tpu.dma_semaphore, #tpu.memory_space<semaphore_mem>> -> memref<!tpu.dma_semaphore, #tpu.memory_space<semaphore_mem>>
    tpu.enqueue_dma source(%arg15 : memref<48x49xf32, #tpu.memory_space<any>>) target(%39 : memref<48x49xf32, #tpu.memory_space<any>>) target_semaphore(%41 : memref<!tpu.dma_semaphore, #tpu.memory_space<semaphore_mem>>)
    %c14_i32 = arith.constant 14 : i32
    %c1680_i32 = arith.constant 1680 : i32
    %c0_i32_15 = arith.constant 0 : i32
    %42 = tpu.memref_slice %arg23[%c1680_i32, %c0_i32_15] : memref<2064x49xf32, #tpu.memory_space<any>> -> memref<48x49xf32, #tpu.memory_space<any>>
    %43 = tpu.memref_slice %arg26[%c14_i32] : memref<22x!tpu.dma_semaphore, #tpu.memory_space<semaphore_mem>> -> memref<1x!tpu.dma_semaphore, #tpu.memory_space<semaphore_mem>>
    %44 = tpu.memref_squeeze %43 : memref<1x!tpu.dma_semaphore, #tpu.memory_space<semaphore_mem>> -> memref<!tpu.dma_semaphore, #tpu.memory_space<semaphore_mem>>
    tpu.enqueue_dma source(%arg16 : memref<48x49xf32, #tpu.memory_space<any>>) target(%42 : memref<48x49xf32, #tpu.memory_space<any>>) target_semaphore(%44 : memref<!tpu.dma_semaphore, #tpu.memory_space<semaphore_mem>>)
    %c15_i32 = arith.constant 15 : i32
    %c1728_i32 = arith.constant 1728 : i32
    %c0_i32_16 = arith.constant 0 : i32
    %45 = tpu.memref_slice %arg23[%c1728_i32, %c0_i32_16] : memref<2064x49xf32, #tpu.memory_space<any>> -> memref<48x49xf32, #tpu.memory_space<any>>
    %46 = tpu.memref_slice %arg26[%c15_i32] : memref<22x!tpu.dma_semaphore, #tpu.memory_space<semaphore_mem>> -> memref<1x!tpu.dma_semaphore, #tpu.memory_space<semaphore_mem>>
    %47 = tpu.memref_squeeze %46 : memref<1x!tpu.dma_semaphore, #tpu.memory_space<semaphore_mem>> -> memref<!tpu.dma_semaphore, #tpu.memory_space<semaphore_mem>>
    tpu.enqueue_dma source(%arg17 : memref<48x49xf32, #tpu.memory_space<any>>) target(%45 : memref<48x49xf32, #tpu.memory_space<any>>) target_semaphore(%47 : memref<!tpu.dma_semaphore, #tpu.memory_space<semaphore_mem>>)
    %c16_i32 = arith.constant 16 : i32
    %c1776_i32 = arith.constant 1776 : i32
    %c0_i32_17 = arith.constant 0 : i32
    %48 = tpu.memref_slice %arg23[%c1776_i32, %c0_i32_17] : memref<2064x49xf32, #tpu.memory_space<any>> -> memref<48x49xf32, #tpu.memory_space<any>>
    %49 = tpu.memref_slice %arg26[%c16_i32] : memref<22x!tpu.dma_semaphore, #tpu.memory_space<semaphore_mem>> -> memref<1x!tpu.dma_semaphore, #tpu.memory_space<semaphore_mem>>
    %50 = tpu.memref_squeeze %49 : memref<1x!tpu.dma_semaphore, #tpu.memory_space<semaphore_mem>> -> memref<!tpu.dma_semaphore, #tpu.memory_space<semaphore_mem>>
    tpu.enqueue_dma source(%arg18 : memref<48x49xf32, #tpu.memory_space<any>>) target(%48 : memref<48x49xf32, #tpu.memory_space<any>>) target_semaphore(%50 : memref<!tpu.dma_semaphore, #tpu.memory_space<semaphore_mem>>)
    %c17_i32 = arith.constant 17 : i32
    %c1824_i32 = arith.constant 1824 : i32
    %c0_i32_18 = arith.constant 0 : i32
    %51 = tpu.memref_slice %arg23[%c1824_i32, %c0_i32_18] : memref<2064x49xf32, #tpu.memory_space<any>> -> memref<48x49xf32, #tpu.memory_space<any>>
    %52 = tpu.memref_slice %arg26[%c17_i32] : memref<22x!tpu.dma_semaphore, #tpu.memory_space<semaphore_mem>> -> memref<1x!tpu.dma_semaphore, #tpu.memory_space<semaphore_mem>>
    %53 = tpu.memref_squeeze %52 : memref<1x!tpu.dma_semaphore, #tpu.memory_space<semaphore_mem>> -> memref<!tpu.dma_semaphore, #tpu.memory_space<semaphore_mem>>
    tpu.enqueue_dma source(%arg19 : memref<48x49xf32, #tpu.memory_space<any>>) target(%51 : memref<48x49xf32, #tpu.memory_space<any>>) target_semaphore(%53 : memref<!tpu.dma_semaphore, #tpu.memory_space<semaphore_mem>>)
    %c18_i32 = arith.constant 18 : i32
    %c1872_i32 = arith.constant 1872 : i32
    %c0_i32_19 = arith.constant 0 : i32
    %54 = tpu.memref_slice %arg23[%c1872_i32, %c0_i32_19] : memref<2064x49xf32, #tpu.memory_space<any>> -> memref<48x49xf32, #tpu.memory_space<any>>
    %55 = tpu.memref_slice %arg26[%c18_i32] : memref<22x!tpu.dma_semaphore, #tpu.memory_space<semaphore_mem>> -> memref<1x!tpu.dma_semaphore, #tpu.memory_space<semaphore_mem>>
    %56 = tpu.memref_squeeze %55 : memref<1x!tpu.dma_semaphore, #tpu.memory_space<semaphore_mem>> -> memref<!tpu.dma_semaphore, #tpu.memory_space<semaphore_mem>>
    tpu.enqueue_dma source(%arg20 : memref<48x49xf32, #tpu.memory_space<any>>) target(%54 : memref<48x49xf32, #tpu.memory_space<any>>) target_semaphore(%56 : memref<!tpu.dma_semaphore, #tpu.memory_space<semaphore_mem>>)
    %c19_i32 = arith.constant 19 : i32
    %c1920_i32 = arith.constant 1920 : i32
    %c0_i32_20 = arith.constant 0 : i32
    %57 = tpu.memref_slice %arg23[%c1920_i32, %c0_i32_20] : memref<2064x49xf32, #tpu.memory_space<any>> -> memref<48x49xf32, #tpu.memory_space<any>>
    %58 = tpu.memref_slice %arg26[%c19_i32] : memref<22x!tpu.dma_semaphore, #tpu.memory_space<semaphore_mem>> -> memref<1x!tpu.dma_semaphore, #tpu.memory_space<semaphore_mem>>
    %59 = tpu.memref_squeeze %58 : memref<1x!tpu.dma_semaphore, #tpu.memory_space<semaphore_mem>> -> memref<!tpu.dma_semaphore, #tpu.memory_space<semaphore_mem>>
    tpu.enqueue_dma source(%arg21 : memref<48x49xf32, #tpu.memory_space<any>>) target(%57 : memref<48x49xf32, #tpu.memory_space<any>>) target_semaphore(%59 : memref<!tpu.dma_semaphore, #tpu.memory_space<semaphore_mem>>)
    %c20_i32 = arith.constant 20 : i32
    %c2016_i32 = arith.constant 2016 : i32
    %c0_i32_21 = arith.constant 0 : i32
    %60 = tpu.memref_slice %arg23[%c2016_i32, %c0_i32_21] : memref<2064x49xf32, #tpu.memory_space<any>> -> memref<48x49xf32, #tpu.memory_space<any>>
    %61 = tpu.memref_slice %arg26[%c20_i32] : memref<22x!tpu.dma_semaphore, #tpu.memory_space<semaphore_mem>> -> memref<1x!tpu.dma_semaphore, #tpu.memory_space<semaphore_mem>>
    %62 = tpu.memref_squeeze %61 : memref<1x!tpu.dma_semaphore, #tpu.memory_space<semaphore_mem>> -> memref<!tpu.dma_semaphore, #tpu.memory_space<semaphore_mem>>
    tpu.enqueue_dma source(%arg22 : memref<48x49xf32, #tpu.memory_space<any>>) target(%60 : memref<48x49xf32, #tpu.memory_space<any>>) target_semaphore(%62 : memref<!tpu.dma_semaphore, #tpu.memory_space<semaphore_mem>>)
    %cst = arith.constant 0.000000e+00 : bf16
    %63 = vector.broadcast %cst : bf16 to vector<192x128xbf16>
    %c0 = arith.constant 0 : index
    %c0_22 = arith.constant 0 : index
    %64 = vector.load %arg24[%c0, %c0_22] : memref<192x128xbf16, #tpu.memory_space<vmem>>, vector<192x128xbf16>
    tpu.vector_store %arg24[%c0, %c0_22], %63 {strides = array<i32>} : memref<192x128xbf16, #tpu.memory_space<vmem>>, vector<192x128xbf16>,
    %c0_23 = arith.constant 0 : index
    %c0_24 = arith.constant 0 : index
    %65 = vector.load %arg0[%c0_23, %c0_24] : memref<192x63xbf16, #tpu.memory_space<vmem>>, vector<192x63xbf16>
    %c0_25 = arith.constant 0 : index
    %c9 = arith.constant 9 : index
    %66 = vector.load %arg24[%c0_25, %c9] : memref<192x128xbf16, #tpu.memory_space<vmem>>, vector<192x63xbf16>
    tpu.vector_store %arg24[%c0_25, %c9], %65 {strides = array<i32>} : memref<192x128xbf16, #tpu.memory_space<vmem>>, vector<192x63xbf16>,
    %c0_26 = arith.constant 0 : index
    %c0_27 = arith.constant 0 : index
    %67 = vector.load %arg1[%c0_26, %c0_27] : memref<432x192xbf16, #tpu.memory_space<vmem>>, vector<432x192xbf16>
    %c0_28 = arith.constant 0 : index
    %c0_29 = arith.constant 0 : index
    %68 = vector.load %arg24[%c0_28, %c0_29] : memref<192x128xbf16, #tpu.memory_space<vmem>>, vector<192x128xbf16>
    %cst_30 = arith.constant dense<0.000000e+00> : vector<432x128xf32>
    %69 = tpu.matmul %67, %68, %cst_30 {dimension_numbers = #tpu.dot_dimension_numbers<[1], [0], [0], [1], [0, 0, 1, 1], [], []>} : vector<432x192xbf16>, vector<192x128xbf16>, vector<432x128xf32> -> vector<432x128xf32>
    %70 = vector.extract_strided_slice %69 {offsets = [0, 0], sizes = [48, 128], strides = [1, 1]} : vector<432x128xf32> to vector<48x128xf32>
    %71 = vector.extract_strided_slice %69 {offsets = [48, 0], sizes = [48, 128], strides = [1, 1]} : vector<432x128xf32> to vector<48x128xf32>
    %c127_i32 = arith.constant 127 : i32
    %72 = tpu.dynamic_rotate %71 by %c127_i32 dim 1 : vector<48x128xf32>, i32 -> vector<48x128xf32>
    %73 = arith.addf %70, %72 : vector<48x128xf32>
    %74 = vector.extract_strided_slice %69 {offsets = [96, 0], sizes = [48, 128], strides = [1, 1]} : vector<432x128xf32> to vector<48x128xf32>
    %c126_i32 = arith.constant 126 : i32
    %75 = tpu.dynamic_rotate %74 by %c126_i32 dim 1 : vector<48x128xf32>, i32 -> vector<48x128xf32>
    %76 = arith.addf %73, %75 : vector<48x128xf32>
    %77 = vector.extract_strided_slice %69 {offsets = [144, 0], sizes = [48, 128], strides = [1, 1]} : vector<432x128xf32> to vector<48x128xf32>
    %c119_i32 = arith.constant 119 : i32
    %78 = tpu.dynamic_rotate %77 by %c119_i32 dim 1 : vector<48x128xf32>, i32 -> vector<48x128xf32>
    %79 = arith.addf %76, %78 : vector<48x128xf32>
    %80 = vector.extract_strided_slice %69 {offsets = [192, 0], sizes = [48, 128], strides = [1, 1]} : vector<432x128xf32> to vector<48x128xf32>
    %c118_i32 = arith.constant 118 : i32
    %81 = tpu.dynamic_rotate %80 by %c118_i32 dim 1 : vector<48x128xf32>, i32 -> vector<48x128xf32>
    %82 = arith.addf %79, %81 : vector<48x128xf32>
    %83 = vector.extract_strided_slice %69 {offsets = [240, 0], sizes = [48, 128], strides = [1, 1]} : vector<432x128xf32> to vector<48x128xf32>
    %c117_i32 = arith.constant 117 : i32
    %84 = tpu.dynamic_rotate %83 by %c117_i32 dim 1 : vector<48x128xf32>, i32 -> vector<48x128xf32>
    %85 = arith.addf %82, %84 : vector<48x128xf32>
    %86 = vector.extract_strided_slice %69 {offsets = [288, 0], sizes = [48, 128], strides = [1, 1]} : vector<432x128xf32> to vector<48x128xf32>
    %c110_i32 = arith.constant 110 : i32
    %87 = tpu.dynamic_rotate %86 by %c110_i32 dim 1 : vector<48x128xf32>, i32 -> vector<48x128xf32>
    %88 = arith.addf %85, %87 : vector<48x128xf32>
    %89 = vector.extract_strided_slice %69 {offsets = [336, 0], sizes = [48, 128], strides = [1, 1]} : vector<432x128xf32> to vector<48x128xf32>
    %c109_i32 = arith.constant 109 : i32
    %90 = tpu.dynamic_rotate %89 by %c109_i32 dim 1 : vector<48x128xf32>, i32 -> vector<48x128xf32>
    %91 = arith.addf %88, %90 : vector<48x128xf32>
    %92 = vector.extract_strided_slice %69 {offsets = [384, 0], sizes = [48, 128], strides = [1, 1]} : vector<432x128xf32> to vector<48x128xf32>
    %c108_i32 = arith.constant 108 : i32
    %93 = tpu.dynamic_rotate %92 by %c108_i32 dim 1 : vector<48x128xf32>, i32 -> vector<48x128xf32>
    %94 = arith.addf %91, %93 : vector<48x128xf32>
    %95 = vector.extract_strided_slice %94 {offsets = [0, 0], sizes = [48, 7], strides = [1, 1]} : vector<48x128xf32> to vector<48x7xf32>
    %c0_31 = arith.constant 0 : index
    %c0_32 = arith.constant 0 : index
    %96 = vector.load %arg25[%c0_31, %c0_32] : memref<48x49xf32, #tpu.memory_space<vmem>>, vector<48x7xf32>
    tpu.vector_store %arg25[%c0_31, %c0_32], %95 {strides = array<i32>} : memref<48x49xf32, #tpu.memory_space<vmem>>, vector<48x7xf32>,
    %97 = vector.extract_strided_slice %94 {offsets = [0, 9], sizes = [48, 7], strides = [1, 1]} : vector<48x128xf32> to vector<48x7xf32>
    %c0_33 = arith.constant 0 : index
    %c7 = arith.constant 7 : index
    %98 = vector.load %arg25[%c0_33, %c7] : memref<48x49xf32, #tpu.memory_space<vmem>>, vector<48x7xf32>
    tpu.vector_store %arg25[%c0_33, %c7], %97 {strides = array<i32>} : memref<48x49xf32, #tpu.memory_space<vmem>>, vector<48x7xf32>,
    %99 = vector.extract_strided_slice %94 {offsets = [0, 18], sizes = [48, 7], strides = [1, 1]} : vector<48x128xf32> to vector<48x7xf32>
    %c0_34 = arith.constant 0 : index
    %c14 = arith.constant 14 : index
    %100 = vector.load %arg25[%c0_34, %c14] : memref<48x49xf32, #tpu.memory_space<vmem>>, vector<48x7xf32>
    tpu.vector_store %arg25[%c0_34, %c14], %99 {strides = array<i32>} : memref<48x49xf32, #tpu.memory_space<vmem>>, vector<48x7xf32>,
    %101 = vector.extract_strided_slice %94 {offsets = [0, 27], sizes = [48, 7], strides = [1, 1]} : vector<48x128xf32> to vector<48x7xf32>
    %c0_35 = arith.constant 0 : index
    %c21 = arith.constant 21 : index
    %102 = vector.load %arg25[%c0_35, %c21] : memref<48x49xf32, #tpu.memory_space<vmem>>, vector<48x7xf32>
    tpu.vector_store %arg25[%c0_35, %c21], %101 {strides = array<i32>} : memref<48x49xf32, #tpu.memory_space<vmem>>, vector<48x7xf32>,
    %103 = vector.extract_strided_slice %94 {offsets = [0, 36], sizes = [48, 7], strides = [1, 1]} : vector<48x128xf32> to vector<48x7xf32>
    %c0_36 = arith.constant 0 : index
    %c28 = arith.constant 28 : index
    %104 = vector.load %arg25[%c0_36, %c28] : memref<48x49xf32, #tpu.memory_space<vmem>>, vector<48x7xf32>
    tpu.vector_store %arg25[%c0_36, %c28], %103 {strides = array<i32>} : memref<48x49xf32, #tpu.memory_space<vmem>>, vector<48x7xf32>,
    %105 = vector.extract_strided_slice %94 {offsets = [0, 45], sizes = [48, 7], strides = [1, 1]} : vector<48x128xf32> to vector<48x7xf32>
    %c0_37 = arith.constant 0 : index
    %c35 = arith.constant 35 : index
    %106 = vector.load %arg25[%c0_37, %c35] : memref<48x49xf32, #tpu.memory_space<vmem>>, vector<48x7xf32>
    tpu.vector_store %arg25[%c0_37, %c35], %105 {strides = array<i32>} : memref<48x49xf32, #tpu.memory_space<vmem>>, vector<48x7xf32>,
    %107 = vector.extract_strided_slice %94 {offsets = [0, 54], sizes = [48, 7], strides = [1, 1]} : vector<48x128xf32> to vector<48x7xf32>
    %c0_38 = arith.constant 0 : index
    %c42 = arith.constant 42 : index
    %108 = vector.load %arg25[%c0_38, %c42] : memref<48x49xf32, #tpu.memory_space<vmem>>, vector<48x7xf32>
    tpu.vector_store %arg25[%c0_38, %c42], %107 {strides = array<i32>} : memref<48x49xf32, #tpu.memory_space<vmem>>, vector<48x7xf32>,
    %c21_i32 = arith.constant 21 : i32
    %c1968_i32 = arith.constant 1968 : i32
    %c0_i32_39 = arith.constant 0 : i32
    %109 = tpu.memref_slice %arg23[%c1968_i32, %c0_i32_39] : memref<2064x49xf32, #tpu.memory_space<any>> -> memref<48x49xf32, #tpu.memory_space<any>>
    %110 = tpu.memref_slice %arg26[%c21_i32] : memref<22x!tpu.dma_semaphore, #tpu.memory_space<semaphore_mem>> -> memref<1x!tpu.dma_semaphore, #tpu.memory_space<semaphore_mem>>
    %111 = tpu.memref_squeeze %110 : memref<1x!tpu.dma_semaphore, #tpu.memory_space<semaphore_mem>> -> memref<!tpu.dma_semaphore, #tpu.memory_space<semaphore_mem>>
    tpu.enqueue_dma source(%arg25 : memref<48x49xf32, #tpu.memory_space<vmem>>) target(%109 : memref<48x49xf32, #tpu.memory_space<any>>) target_semaphore(%111 : memref<!tpu.dma_semaphore, #tpu.memory_space<semaphore_mem>>)
    %c21_i32_40 = arith.constant 21 : i32
    %c1968_i32_41 = arith.constant 1968 : i32
    %c0_i32_42 = arith.constant 0 : i32
    %112 = tpu.memref_slice %arg23[%c1968_i32_41, %c0_i32_42] : memref<2064x49xf32, #tpu.memory_space<any>> -> memref<48x49xf32, #tpu.memory_space<any>>
    %113 = tpu.memref_slice %arg26[%c21_i32_40] : memref<22x!tpu.dma_semaphore, #tpu.memory_space<semaphore_mem>> -> memref<1x!tpu.dma_semaphore, #tpu.memory_space<semaphore_mem>>
    %114 = tpu.memref_squeeze %113 : memref<1x!tpu.dma_semaphore, #tpu.memory_space<semaphore_mem>> -> memref<!tpu.dma_semaphore, #tpu.memory_space<semaphore_mem>>
    tpu.wait_dma2 semaphore(%114 : memref<!tpu.dma_semaphore, #tpu.memory_space<semaphore_mem>>) src(%arg25 : memref<48x49xf32, #tpu.memory_space<vmem>>) dst(%112 : memref<48x49xf32, #tpu.memory_space<any>>)
    %c0_i32_43 = arith.constant 0 : i32
    %c0_i32_44 = arith.constant 0 : i32
    %c0_i32_45 = arith.constant 0 : i32
    %115 = tpu.memref_slice %arg23[%c0_i32_44, %c0_i32_45] : memref<2064x49xf32, #tpu.memory_space<any>> -> memref<1056x49xf32, #tpu.memory_space<any>>
    %116 = tpu.memref_slice %arg26[%c0_i32_43] : memref<22x!tpu.dma_semaphore, #tpu.memory_space<semaphore_mem>> -> memref<1x!tpu.dma_semaphore, #tpu.memory_space<semaphore_mem>>
    %117 = tpu.memref_squeeze %116 : memref<1x!tpu.dma_semaphore, #tpu.memory_space<semaphore_mem>> -> memref<!tpu.dma_semaphore, #tpu.memory_space<semaphore_mem>>
    tpu.wait_dma2 semaphore(%117 : memref<!tpu.dma_semaphore, #tpu.memory_space<semaphore_mem>>) src(%arg2 : memref<1056x49xf32, #tpu.memory_space<any>>) dst(%115 : memref<1056x49xf32, #tpu.memory_space<any>>)
    %c1_i32_46 = arith.constant 1 : i32
    %c1056_i32_47 = arith.constant 1056 : i32
    %c0_i32_48 = arith.constant 0 : i32
    %118 = tpu.memref_slice %arg23[%c1056_i32_47, %c0_i32_48] : memref<2064x49xf32, #tpu.memory_space<any>> -> memref<48x49xf32, #tpu.memory_space<any>>
    %119 = tpu.memref_slice %arg26[%c1_i32_46] : memref<22x!tpu.dma_semaphore, #tpu.memory_space<semaphore_mem>> -> memref<1x!tpu.dma_semaphore, #tpu.memory_space<semaphore_mem>>
    %120 = tpu.memref_squeeze %119 : memref<1x!tpu.dma_semaphore, #tpu.memory_space<semaphore_mem>> -> memref<!tpu.dma_semaphore, #tpu.memory_space<semaphore_mem>>
    tpu.wait_dma2 semaphore(%120 : memref<!tpu.dma_semaphore, #tpu.memory_space<semaphore_mem>>) src(%arg3 : memref<48x49xf32, #tpu.memory_space<any>>) dst(%118 : memref<48x49xf32, #tpu.memory_space<any>>)
    %c2_i32_49 = arith.constant 2 : i32
    %c1104_i32_50 = arith.constant 1104 : i32
    %c0_i32_51 = arith.constant 0 : i32
    %121 = tpu.memref_slice %arg23[%c1104_i32_50, %c0_i32_51] : memref<2064x49xf32, #tpu.memory_space<any>> -> memref<48x49xf32, #tpu.memory_space<any>>
    %122 = tpu.memref_slice %arg26[%c2_i32_49] : memref<22x!tpu.dma_semaphore, #tpu.memory_space<semaphore_mem>> -> memref<1x!tpu.dma_semaphore, #tpu.memory_space<semaphore_mem>>
    %123 = tpu.memref_squeeze %122 : memref<1x!tpu.dma_semaphore, #tpu.memory_space<semaphore_mem>> -> memref<!tpu.dma_semaphore, #tpu.memory_space<semaphore_mem>>
    tpu.wait_dma2 semaphore(%123 : memref<!tpu.dma_semaphore, #tpu.memory_space<semaphore_mem>>) src(%arg4 : memref<48x49xf32, #tpu.memory_space<any>>) dst(%121 : memref<48x49xf32, #tpu.memory_space<any>>)
    %c3_i32_52 = arith.constant 3 : i32
    %c1152_i32_53 = arith.constant 1152 : i32
    %c0_i32_54 = arith.constant 0 : i32
    %124 = tpu.memref_slice %arg23[%c1152_i32_53, %c0_i32_54] : memref<2064x49xf32, #tpu.memory_space<any>> -> memref<48x49xf32, #tpu.memory_space<any>>
    %125 = tpu.memref_slice %arg26[%c3_i32_52] : memref<22x!tpu.dma_semaphore, #tpu.memory_space<semaphore_mem>> -> memref<1x!tpu.dma_semaphore, #tpu.memory_space<semaphore_mem>>
    %126 = tpu.memref_squeeze %125 : memref<1x!tpu.dma_semaphore, #tpu.memory_space<semaphore_mem>> -> memref<!tpu.dma_semaphore, #tpu.memory_space<semaphore_mem>>
    tpu.wait_dma2 semaphore(%126 : memref<!tpu.dma_semaphore, #tpu.memory_space<semaphore_mem>>) src(%arg5 : memref<48x49xf32, #tpu.memory_space<any>>) dst(%124 : memref<48x49xf32, #tpu.memory_space<any>>)
    %c4_i32_55 = arith.constant 4 : i32
    %c1200_i32_56 = arith.constant 1200 : i32
    %c0_i32_57 = arith.constant 0 : i32
    %127 = tpu.memref_slice %arg23[%c1200_i32_56, %c0_i32_57] : memref<2064x49xf32, #tpu.memory_space<any>> -> memref<48x49xf32, #tpu.memory_space<any>>
    %128 = tpu.memref_slice %arg26[%c4_i32_55] : memref<22x!tpu.dma_semaphore, #tpu.memory_space<semaphore_mem>> -> memref<1x!tpu.dma_semaphore, #tpu.memory_space<semaphore_mem>>
    %129 = tpu.memref_squeeze %128 : memref<1x!tpu.dma_semaphore, #tpu.memory_space<semaphore_mem>> -> memref<!tpu.dma_semaphore, #tpu.memory_space<semaphore_mem>>
    tpu.wait_dma2 semaphore(%129 : memref<!tpu.dma_semaphore, #tpu.memory_space<semaphore_mem>>) src(%arg6 : memref<48x49xf32, #tpu.memory_space<any>>) dst(%127 : memref<48x49xf32, #tpu.memory_space<any>>)
    %c5_i32_58 = arith.constant 5 : i32
    %c1248_i32_59 = arith.constant 1248 : i32
    %c0_i32_60 = arith.constant 0 : i32
    %130 = tpu.memref_slice %arg23[%c1248_i32_59, %c0_i32_60] : memref<2064x49xf32, #tpu.memory_space<any>> -> memref<48x49xf32, #tpu.memory_space<any>>
    %131 = tpu.memref_slice %arg26[%c5_i32_58] : memref<22x!tpu.dma_semaphore, #tpu.memory_space<semaphore_mem>> -> memref<1x!tpu.dma_semaphore, #tpu.memory_space<semaphore_mem>>
    %132 = tpu.memref_squeeze %131 : memref<1x!tpu.dma_semaphore, #tpu.memory_space<semaphore_mem>> -> memref<!tpu.dma_semaphore, #tpu.memory_space<semaphore_mem>>
    tpu.wait_dma2 semaphore(%132 : memref<!tpu.dma_semaphore, #tpu.memory_space<semaphore_mem>>) src(%arg7 : memref<48x49xf32, #tpu.memory_space<any>>) dst(%130 : memref<48x49xf32, #tpu.memory_space<any>>)
    %c6_i32_61 = arith.constant 6 : i32
    %c1296_i32_62 = arith.constant 1296 : i32
    %c0_i32_63 = arith.constant 0 : i32
    %133 = tpu.memref_slice %arg23[%c1296_i32_62, %c0_i32_63] : memref<2064x49xf32, #tpu.memory_space<any>> -> memref<48x49xf32, #tpu.memory_space<any>>
    %134 = tpu.memref_slice %arg26[%c6_i32_61] : memref<22x!tpu.dma_semaphore, #tpu.memory_space<semaphore_mem>> -> memref<1x!tpu.dma_semaphore, #tpu.memory_space<semaphore_mem>>
    %135 = tpu.memref_squeeze %134 : memref<1x!tpu.dma_semaphore, #tpu.memory_space<semaphore_mem>> -> memref<!tpu.dma_semaphore, #tpu.memory_space<semaphore_mem>>
    tpu.wait_dma2 semaphore(%135 : memref<!tpu.dma_semaphore, #tpu.memory_space<semaphore_mem>>) src(%arg8 : memref<48x49xf32, #tpu.memory_space<any>>) dst(%133 : memref<48x49xf32, #tpu.memory_space<any>>)
    %c7_i32_64 = arith.constant 7 : i32
    %c1344_i32_65 = arith.constant 1344 : i32
    %c0_i32_66 = arith.constant 0 : i32
    %136 = tpu.memref_slice %arg23[%c1344_i32_65, %c0_i32_66] : memref<2064x49xf32, #tpu.memory_space<any>> -> memref<48x49xf32, #tpu.memory_space<any>>
    %137 = tpu.memref_slice %arg26[%c7_i32_64] : memref<22x!tpu.dma_semaphore, #tpu.memory_space<semaphore_mem>> -> memref<1x!tpu.dma_semaphore, #tpu.memory_space<semaphore_mem>>
    %138 = tpu.memref_squeeze %137 : memref<1x!tpu.dma_semaphore, #tpu.memory_space<semaphore_mem>> -> memref<!tpu.dma_semaphore, #tpu.memory_space<semaphore_mem>>
    tpu.wait_dma2 semaphore(%138 : memref<!tpu.dma_semaphore, #tpu.memory_space<semaphore_mem>>) src(%arg9 : memref<48x49xf32, #tpu.memory_space<any>>) dst(%136 : memref<48x49xf32, #tpu.memory_space<any>>)
    %c8_i32_67 = arith.constant 8 : i32
    %c1392_i32_68 = arith.constant 1392 : i32
    %c0_i32_69 = arith.constant 0 : i32
    %139 = tpu.memref_slice %arg23[%c1392_i32_68, %c0_i32_69] : memref<2064x49xf32, #tpu.memory_space<any>> -> memref<48x49xf32, #tpu.memory_space<any>>
    %140 = tpu.memref_slice %arg26[%c8_i32_67] : memref<22x!tpu.dma_semaphore, #tpu.memory_space<semaphore_mem>> -> memref<1x!tpu.dma_semaphore, #tpu.memory_space<semaphore_mem>>
    %141 = tpu.memref_squeeze %140 : memref<1x!tpu.dma_semaphore, #tpu.memory_space<semaphore_mem>> -> memref<!tpu.dma_semaphore, #tpu.memory_space<semaphore_mem>>
    tpu.wait_dma2 semaphore(%141 : memref<!tpu.dma_semaphore, #tpu.memory_space<semaphore_mem>>) src(%arg10 : memref<48x49xf32, #tpu.memory_space<any>>) dst(%139 : memref<48x49xf32, #tpu.memory_space<any>>)
    %c9_i32_70 = arith.constant 9 : i32
    %c1440_i32_71 = arith.constant 1440 : i32
    %c0_i32_72 = arith.constant 0 : i32
    %142 = tpu.memref_slice %arg23[%c1440_i32_71, %c0_i32_72] : memref<2064x49xf32, #tpu.memory_space<any>> -> memref<48x49xf32, #tpu.memory_space<any>>
    %143 = tpu.memref_slice %arg26[%c9_i32_70] : memref<22x!tpu.dma_semaphore, #tpu.memory_space<semaphore_mem>> -> memref<1x!tpu.dma_semaphore, #tpu.memory_space<semaphore_mem>>
    %144 = tpu.memref_squeeze %143 : memref<1x!tpu.dma_semaphore, #tpu.memory_space<semaphore_mem>> -> memref<!tpu.dma_semaphore, #tpu.memory_space<semaphore_mem>>
    tpu.wait_dma2 semaphore(%144 : memref<!tpu.dma_semaphore, #tpu.memory_space<semaphore_mem>>) src(%arg11 : memref<48x49xf32, #tpu.memory_space<any>>) dst(%142 : memref<48x49xf32, #tpu.memory_space<any>>)
    %c10_i32_73 = arith.constant 10 : i32
    %c1488_i32_74 = arith.constant 1488 : i32
    %c0_i32_75 = arith.constant 0 : i32
    %145 = tpu.memref_slice %arg23[%c1488_i32_74, %c0_i32_75] : memref<2064x49xf32, #tpu.memory_space<any>> -> memref<48x49xf32, #tpu.memory_space<any>>
    %146 = tpu.memref_slice %arg26[%c10_i32_73] : memref<22x!tpu.dma_semaphore, #tpu.memory_space<semaphore_mem>> -> memref<1x!tpu.dma_semaphore, #tpu.memory_space<semaphore_mem>>
    %147 = tpu.memref_squeeze %146 : memref<1x!tpu.dma_semaphore, #tpu.memory_space<semaphore_mem>> -> memref<!tpu.dma_semaphore, #tpu.memory_space<semaphore_mem>>
    tpu.wait_dma2 semaphore(%147 : memref<!tpu.dma_semaphore, #tpu.memory_space<semaphore_mem>>) src(%arg12 : memref<48x49xf32, #tpu.memory_space<any>>) dst(%145 : memref<48x49xf32, #tpu.memory_space<any>>)
    %c11_i32_76 = arith.constant 11 : i32
    %c1536_i32_77 = arith.constant 1536 : i32
    %c0_i32_78 = arith.constant 0 : i32
    %148 = tpu.memref_slice %arg23[%c1536_i32_77, %c0_i32_78] : memref<2064x49xf32, #tpu.memory_space<any>> -> memref<48x49xf32, #tpu.memory_space<any>>
    %149 = tpu.memref_slice %arg26[%c11_i32_76] : memref<22x!tpu.dma_semaphore, #tpu.memory_space<semaphore_mem>> -> memref<1x!tpu.dma_semaphore, #tpu.memory_space<semaphore_mem>>
    %150 = tpu.memref_squeeze %149 : memref<1x!tpu.dma_semaphore, #tpu.memory_space<semaphore_mem>> -> memref<!tpu.dma_semaphore, #tpu.memory_space<semaphore_mem>>
    tpu.wait_dma2 semaphore(%150 : memref<!tpu.dma_semaphore, #tpu.memory_space<semaphore_mem>>) src(%arg13 : memref<48x49xf32, #tpu.memory_space<any>>) dst(%148 : memref<48x49xf32, #tpu.memory_space<any>>)
    %c12_i32_79 = arith.constant 12 : i32
    %c1584_i32_80 = arith.constant 1584 : i32
    %c0_i32_81 = arith.constant 0 : i32
    %151 = tpu.memref_slice %arg23[%c1584_i32_80, %c0_i32_81] : memref<2064x49xf32, #tpu.memory_space<any>> -> memref<48x49xf32, #tpu.memory_space<any>>
    %152 = tpu.memref_slice %arg26[%c12_i32_79] : memref<22x!tpu.dma_semaphore, #tpu.memory_space<semaphore_mem>> -> memref<1x!tpu.dma_semaphore, #tpu.memory_space<semaphore_mem>>
    %153 = tpu.memref_squeeze %152 : memref<1x!tpu.dma_semaphore, #tpu.memory_space<semaphore_mem>> -> memref<!tpu.dma_semaphore, #tpu.memory_space<semaphore_mem>>
    tpu.wait_dma2 semaphore(%153 : memref<!tpu.dma_semaphore, #tpu.memory_space<semaphore_mem>>) src(%arg14 : memref<48x49xf32, #tpu.memory_space<any>>) dst(%151 : memref<48x49xf32, #tpu.memory_space<any>>)
    %c13_i32_82 = arith.constant 13 : i32
    %c1632_i32_83 = arith.constant 1632 : i32
    %c0_i32_84 = arith.constant 0 : i32
    %154 = tpu.memref_slice %arg23[%c1632_i32_83, %c0_i32_84] : memref<2064x49xf32, #tpu.memory_space<any>> -> memref<48x49xf32, #tpu.memory_space<any>>
    %155 = tpu.memref_slice %arg26[%c13_i32_82] : memref<22x!tpu.dma_semaphore, #tpu.memory_space<semaphore_mem>> -> memref<1x!tpu.dma_semaphore, #tpu.memory_space<semaphore_mem>>
    %156 = tpu.memref_squeeze %155 : memref<1x!tpu.dma_semaphore, #tpu.memory_space<semaphore_mem>> -> memref<!tpu.dma_semaphore, #tpu.memory_space<semaphore_mem>>
    tpu.wait_dma2 semaphore(%156 : memref<!tpu.dma_semaphore, #tpu.memory_space<semaphore_mem>>) src(%arg15 : memref<48x49xf32, #tpu.memory_space<any>>) dst(%154 : memref<48x49xf32, #tpu.memory_space<any>>)
    %c14_i32_85 = arith.constant 14 : i32
    %c1680_i32_86 = arith.constant 1680 : i32
    %c0_i32_87 = arith.constant 0 : i32
    %157 = tpu.memref_slice %arg23[%c1680_i32_86, %c0_i32_87] : memref<2064x49xf32, #tpu.memory_space<any>> -> memref<48x49xf32, #tpu.memory_space<any>>
    %158 = tpu.memref_slice %arg26[%c14_i32_85] : memref<22x!tpu.dma_semaphore, #tpu.memory_space<semaphore_mem>> -> memref<1x!tpu.dma_semaphore, #tpu.memory_space<semaphore_mem>>
    %159 = tpu.memref_squeeze %158 : memref<1x!tpu.dma_semaphore, #tpu.memory_space<semaphore_mem>> -> memref<!tpu.dma_semaphore, #tpu.memory_space<semaphore_mem>>
    tpu.wait_dma2 semaphore(%159 : memref<!tpu.dma_semaphore, #tpu.memory_space<semaphore_mem>>) src(%arg16 : memref<48x49xf32, #tpu.memory_space<any>>) dst(%157 : memref<48x49xf32, #tpu.memory_space<any>>)
    %c15_i32_88 = arith.constant 15 : i32
    %c1728_i32_89 = arith.constant 1728 : i32
    %c0_i32_90 = arith.constant 0 : i32
    %160 = tpu.memref_slice %arg23[%c1728_i32_89, %c0_i32_90] : memref<2064x49xf32, #tpu.memory_space<any>> -> memref<48x49xf32, #tpu.memory_space<any>>
    %161 = tpu.memref_slice %arg26[%c15_i32_88] : memref<22x!tpu.dma_semaphore, #tpu.memory_space<semaphore_mem>> -> memref<1x!tpu.dma_semaphore, #tpu.memory_space<semaphore_mem>>
    %162 = tpu.memref_squeeze %161 : memref<1x!tpu.dma_semaphore, #tpu.memory_space<semaphore_mem>> -> memref<!tpu.dma_semaphore, #tpu.memory_space<semaphore_mem>>
    tpu.wait_dma2 semaphore(%162 : memref<!tpu.dma_semaphore, #tpu.memory_space<semaphore_mem>>) src(%arg17 : memref<48x49xf32, #tpu.memory_space<any>>) dst(%160 : memref<48x49xf32, #tpu.memory_space<any>>)
    %c16_i32_91 = arith.constant 16 : i32
    %c1776_i32_92 = arith.constant 1776 : i32
    %c0_i32_93 = arith.constant 0 : i32
    %163 = tpu.memref_slice %arg23[%c1776_i32_92, %c0_i32_93] : memref<2064x49xf32, #tpu.memory_space<any>> -> memref<48x49xf32, #tpu.memory_space<any>>
    %164 = tpu.memref_slice %arg26[%c16_i32_91] : memref<22x!tpu.dma_semaphore, #tpu.memory_space<semaphore_mem>> -> memref<1x!tpu.dma_semaphore, #tpu.memory_space<semaphore_mem>>
    %165 = tpu.memref_squeeze %164 : memref<1x!tpu.dma_semaphore, #tpu.memory_space<semaphore_mem>> -> memref<!tpu.dma_semaphore, #tpu.memory_space<semaphore_mem>>
    tpu.wait_dma2 semaphore(%165 : memref<!tpu.dma_semaphore, #tpu.memory_space<semaphore_mem>>) src(%arg18 : memref<48x49xf32, #tpu.memory_space<any>>) dst(%163 : memref<48x49xf32, #tpu.memory_space<any>>)
    %c17_i32_94 = arith.constant 17 : i32
    %c1824_i32_95 = arith.constant 1824 : i32
    %c0_i32_96 = arith.constant 0 : i32
    %166 = tpu.memref_slice %arg23[%c1824_i32_95, %c0_i32_96] : memref<2064x49xf32, #tpu.memory_space<any>> -> memref<48x49xf32, #tpu.memory_space<any>>
    %167 = tpu.memref_slice %arg26[%c17_i32_94] : memref<22x!tpu.dma_semaphore, #tpu.memory_space<semaphore_mem>> -> memref<1x!tpu.dma_semaphore, #tpu.memory_space<semaphore_mem>>
    %168 = tpu.memref_squeeze %167 : memref<1x!tpu.dma_semaphore, #tpu.memory_space<semaphore_mem>> -> memref<!tpu.dma_semaphore, #tpu.memory_space<semaphore_mem>>
    tpu.wait_dma2 semaphore(%168 : memref<!tpu.dma_semaphore, #tpu.memory_space<semaphore_mem>>) src(%arg19 : memref<48x49xf32, #tpu.memory_space<any>>) dst(%166 : memref<48x49xf32, #tpu.memory_space<any>>)
    %c18_i32_97 = arith.constant 18 : i32
    %c1872_i32_98 = arith.constant 1872 : i32
    %c0_i32_99 = arith.constant 0 : i32
    %169 = tpu.memref_slice %arg23[%c1872_i32_98, %c0_i32_99] : memref<2064x49xf32, #tpu.memory_space<any>> -> memref<48x49xf32, #tpu.memory_space<any>>
    %170 = tpu.memref_slice %arg26[%c18_i32_97] : memref<22x!tpu.dma_semaphore, #tpu.memory_space<semaphore_mem>> -> memref<1x!tpu.dma_semaphore, #tpu.memory_space<semaphore_mem>>
    %171 = tpu.memref_squeeze %170 : memref<1x!tpu.dma_semaphore, #tpu.memory_space<semaphore_mem>> -> memref<!tpu.dma_semaphore, #tpu.memory_space<semaphore_mem>>
    tpu.wait_dma2 semaphore(%171 : memref<!tpu.dma_semaphore, #tpu.memory_space<semaphore_mem>>) src(%arg20 : memref<48x49xf32, #tpu.memory_space<any>>) dst(%169 : memref<48x49xf32, #tpu.memory_space<any>>)
    %c19_i32_100 = arith.constant 19 : i32
    %c1920_i32_101 = arith.constant 1920 : i32
    %c0_i32_102 = arith.constant 0 : i32
    %172 = tpu.memref_slice %arg23[%c1920_i32_101, %c0_i32_102] : memref<2064x49xf32, #tpu.memory_space<any>> -> memref<48x49xf32, #tpu.memory_space<any>>
    %173 = tpu.memref_slice %arg26[%c19_i32_100] : memref<22x!tpu.dma_semaphore, #tpu.memory_space<semaphore_mem>> -> memref<1x!tpu.dma_semaphore, #tpu.memory_space<semaphore_mem>>
    %174 = tpu.memref_squeeze %173 : memref<1x!tpu.dma_semaphore, #tpu.memory_space<semaphore_mem>> -> memref<!tpu.dma_semaphore, #tpu.memory_space<semaphore_mem>>
    tpu.wait_dma2 semaphore(%174 : memref<!tpu.dma_semaphore, #tpu.memory_space<semaphore_mem>>) src(%arg21 : memref<48x49xf32, #tpu.memory_space<any>>) dst(%172 : memref<48x49xf32, #tpu.memory_space<any>>)
    %c20_i32_103 = arith.constant 20 : i32
    %c2016_i32_104 = arith.constant 2016 : i32
    %c0_i32_105 = arith.constant 0 : i32
    %175 = tpu.memref_slice %arg23[%c2016_i32_104, %c0_i32_105] : memref<2064x49xf32, #tpu.memory_space<any>> -> memref<48x49xf32, #tpu.memory_space<any>>
    %176 = tpu.memref_slice %arg26[%c20_i32_103] : memref<22x!tpu.dma_semaphore, #tpu.memory_space<semaphore_mem>> -> memref<1x!tpu.dma_semaphore, #tpu.memory_space<semaphore_mem>>
    %177 = tpu.memref_squeeze %176 : memref<1x!tpu.dma_semaphore, #tpu.memory_space<semaphore_mem>> -> memref<!tpu.dma_semaphore, #tpu.memory_space<semaphore_mem>>
    tpu.wait_dma2 semaphore(%177 : memref<!tpu.dma_semaphore, #tpu.memory_space<semaphore_mem>>) src(%arg22 : memref<48x49xf32, #tpu.memory_space<any>>) dst(%175 : memref<48x49xf32, #tpu.memory_space<any>>)
    return
  }
}

</mosaic_0001>

<llo_original>
// kernel: forward.1
$region0: #{forward.1}
  #allocation0 [shape = 'u32[]', space=smem, size = 0x4, offset = 0x4, fixed_abs, tag = 'smem constant byte address 0x4 - core index']
  #allocation1 [shape = 'u32[144,128]{1,0:T(1,128)}', space=vmem, size = 0x12000, scoped, tag = 'internal scratch']
  #allocation2 [shape = 'bf16[192,128]{1,0:T(8,128)(2,1)}', space=vmem, size = 0xc000, scoped, tag = 'scratch operand']
  #allocation3 [shape = 'f32[48,49]{1,0:T(8,128)}', space=vmem, size = 0x6000, scoped, tag = 'scratch operand']
  #allocation4 [shape = 's32[22]{0}', space=sflag, size = 0x58, scoped, tag = 'scratch operand']
  #allocation5 [shape = 's32[]', space=sflag, size = 0x4, offset = 0, fixed_abs, tag = 'sflag constant byte address 0x0 - dummy sync flag']
  #allocation6 [shape = 's32[]', space=sflag, size = 0x4, offset = 0, fixed_abs, tag = 'sflag constant byte address 0x0 - dummy sync flag']
  #allocation7 [shape = 's32[]', space=sflag, size = 0x4, offset = 0, fixed_abs, tag = 'sflag constant byte address 0x0 - dummy sync flag']
  #allocation8 [shape = 's32[]', space=sflag, size = 0x4, offset = 0, fixed_abs, tag = 'sflag constant byte address 0x0 - dummy sync flag']
  #allocation9 [shape = 's32[]', space=sflag, size = 0x4, offset = 0, fixed_abs, tag = 'sflag constant byte address 0x0 - dummy sync flag']
  #allocation10 [shape = 's32[]', space=sflag, size = 0x4, offset = 0, fixed_abs, tag = 'sflag constant byte address 0x0 - dummy sync flag']
  #allocation11 [shape = 's32[]', space=sflag, size = 0x4, offset = 0, fixed_abs, tag = 'sflag constant byte address 0x0 - dummy sync flag']
  #allocation12 [shape = 's32[]', space=sflag, size = 0x4, offset = 0, fixed_abs, tag = 'sflag constant byte address 0x0 - dummy sync flag']
  #allocation13 [shape = 's32[]', space=sflag, size = 0x4, offset = 0, fixed_abs, tag = 'sflag constant byte address 0x0 - dummy sync flag']
  #allocation14 [shape = 's32[]', space=sflag, size = 0x4, offset = 0, fixed_abs, tag = 'sflag constant byte address 0x0 - dummy sync flag']
  #allocation15 [shape = 's32[]', space=sflag, size = 0x4, offset = 0, fixed_abs, tag = 'sflag constant byte address 0x0 - dummy sync flag']
  #allocation16 [shape = 's32[]', space=sflag, size = 0x4, offset = 0, fixed_abs, tag = 'sflag constant byte address 0x0 - dummy sync flag']
  #allocation17 [shape = 's32[]', space=sflag, size = 0x4, offset = 0, fixed_abs, tag = 'sflag constant byte address 0x0 - dummy sync flag']
  #allocation18 [shape = 's32[]', space=sflag, size = 0x4, offset = 0, fixed_abs, tag = 'sflag constant byte address 0x0 - dummy sync flag']
  #allocation19 [shape = 's32[]', space=sflag, size = 0x4, offset = 0, fixed_abs, tag = 'sflag constant byte address 0x0 - dummy sync flag']
  #allocation20 [shape = 's32[]', space=sflag, size = 0x4, offset = 0, fixed_abs, tag = 'sflag constant byte address 0x0 - dummy sync flag']
  #allocation21 [shape = 's32[]', space=sflag, size = 0x4, offset = 0, fixed_abs, tag = 'sflag constant byte address 0x0 - dummy sync flag']
  #allocation22 [shape = 's32[]', space=sflag, size = 0x4, offset = 0, fixed_abs, tag = 'sflag constant byte address 0x0 - dummy sync flag']
  #allocation23 [shape = 's32[]', space=sflag, size = 0x4, offset = 0, fixed_abs, tag = 'sflag constant byte address 0x0 - dummy sync flag']
  #allocation24 [shape = 's32[]', space=sflag, size = 0x4, offset = 0, fixed_abs, tag = 'sflag constant byte address 0x0 - dummy sync flag']
  #allocation25 [shape = 's32[]', space=sflag, size = 0x4, offset = 0, fixed_abs, tag = 'sflag constant byte address 0x0 - dummy sync flag']
  #allocation26 [shape = 's32[]', space=sflag, size = 0x4, offset = 0, fixed_abs, tag = 'sflag constant byte address 0x0 - dummy sync flag']
  %s0 = inlined_call_operand.vmem [shape: bf16[192,63], index: 0, kind: input, shape index: {}]
  %s1 = inlined_call_operand.vmem [shape: bf16[432,192], index: 1, kind: input, shape index: {}]
  %s2 = inlined_call_operand.vmem [shape: f32[1056,49], index: 2, kind: input, shape index: {}]
  %s3 = inlined_call_operand.vmem [shape: f32[48,49], index: 3, kind: input, shape index: {}]
  %s4 = inlined_call_operand.vmem [shape: f32[48,49], index: 4, kind: input, shape index: {}]
  %s5 = inlined_call_operand.vmem [shape: f32[48,49], index: 5, kind: input, shape index: {}]
  %s6 = inlined_call_operand.vmem [shape: f32[48,49], index: 6, kind: input, shape index: {}]
  %s7 = inlined_call_operand.vmem [shape: f32[48,49], index: 7, kind: input, shape index: {}]
  %s8 = inlined_call_operand.vmem [shape: f32[48,49], index: 8, kind: input, shape index: {}]
  %s9 = inlined_call_operand.vmem [shape: f32[48,49], index: 9, kind: input, shape index: {}]
  %s10 = inlined_call_operand.vmem [shape: f32[48,49], index: 10, kind: input, shape index: {}]
  %s11 = inlined_call_operand.vmem [shape: f32[48,49], index: 11, kind: input, shape index: {}]
  %s12 = inlined_call_operand.vmem [shape: f32[48,49], index: 12, kind: input, shape index: {}]
  %s13 = inlined_call_operand.vmem [shape: f32[48,49], index: 13, kind: input, shape index: {}]
  %s14 = inlined_call_operand.vmem [shape: f32[48,49], index: 14, kind: input, shape index: {}]
  %s15 = inlined_call_operand.vmem [shape: f32[48,49], index: 15, kind: input, shape index: {}]
  %s16 = inlined_call_operand.vmem [shape: f32[48,49], index: 16, kind: input, shape index: {}]
  %s17 = inlined_call_operand.vmem [shape: f32[48,49], index: 17, kind: input, shape index: {}]
  %s18 = inlined_call_operand.vmem [shape: f32[48,49], index: 18, kind: input, shape index: {}]
  %s19 = inlined_call_operand.vmem [shape: f32[48,49], index: 19, kind: input, shape index: {}]
  %s20 = inlined_call_operand.vmem [shape: f32[48,49], index: 20, kind: input, shape index: {}]
  %s21 = inlined_call_operand.vmem [shape: f32[48,49], index: 21, kind: input, shape index: {}]
  %s22 = inlined_call_operand.vmem [shape: f32[48,49], index: 22, kind: input, shape index: {}]
  %s23 = inlined_call_operand.vmem [shape: f32[2064,49], index: 23, kind: output, shape index: {}]
  %s24 = sld [smem:[#allocation0]]
  $region758: #{forward.1} parent=0
    _
  %s26 = ssub.s32 1, %s24
  %s27 = scalar_select 0, %s26, %s24
  // Predicated region
  $region2: #{forward.1} parent=0 // pred_check
    _
  $region3: #{forward.1} parent=0 // pred_check_branch
    %29 = sbr.rel (0) target = $region5
  $region4: #{forward.1} parent=0 // pred_region
    _
  $region5: #{forward.1} parent=0 // pred_fallthru
    _
  // Predicated region
  $region6: #{forward.1} parent=0 // pred_check
    _
  $region7: #{forward.1} parent=0 // pred_check_branch
    %31 = sbr.rel (0) target = $region9
  $region8: #{forward.1} parent=0 // pred_region
    _
  $region9: #{forward.1} parent=0 // pred_fallthru
    _
  %p34 = scmp.lt.u32.totalorder 1056, 8
  %p35 = pneg %p34
  // Predicated region
  $region10: #{forward.1} parent=0 // pred_check
    _
  $region11: #{forward.1} parent=0 // pred_check_branch
    %37 = sbr.rel (%p34) target = $region13
  $region12: #{forward.1} parent=0 // pred_region
    %s53 = sand.u32 1056, 7
    %p54 = scmp.eq.s32.totalorder %s53, 0
    // Predicated region
    $region25: #{forward.1} parent=12 // pred_check
      %p55 = pneg %p54
    $region26: #{forward.1} parent=12 // pred_check_branch
      %57 = sbr.rel (%p55) target = $region28
    $region27: #{forward.1} parent=12 // pred_region
      loop: start=0, step=1, limit=1
      $region29: #{forward.1} parent=27 // loop_pre_header
        _
      $region30: #{forward.1} parent=27 // loop_header
        %s59 = sphi 0, %s63
        %p60 = scmp.ge.s32.totalorder %s59, 1
        %s64 = sphi %s2, %s2
        %s65 = sphi %s23, %s23
      $region31: #{forward.1} parent=27 // loop_header_branch
        %62 = sbr.rel (%p60) target = $region35
      $region32: #{forward.1} parent=27 // loop_body
        %v66 = vld [vmem:[%s64] sm:$0xff]
        %67 = vst [vmem:[%s65] sm:$0xff] %v66
        %v68 = vld [vmem:[%s64 + $0x8] sm:$0xff]
        %69 = vst [vmem:[%s65 + $0x8] sm:$0xff] %v68
        %v70 = vld [vmem:[%s64 + $0x10] sm:$0xff]
        %71 = vst [vmem:[%s65 + $0x10] sm:$0xff] %v70
        %v72 = vld [vmem:[%s64 + $0x18] sm:$0xff]
        %73 = vst [vmem:[%s65 + $0x18] sm:$0xff] %v72
        %v74 = vld [vmem:[%s64 + $0x20] sm:$0xff]
        %75 = vst [vmem:[%s65 + $0x20] sm:$0xff] %v74
        %v76 = vld [vmem:[%s64 + $0x28] sm:$0xff]
        %77 = vst [vmem:[%s65 + $0x28] sm:$0xff] %v76
        %v78 = vld [vmem:[%s64 + $0x30] sm:$0xff]
        %79 = vst [vmem:[%s65 + $0x30] sm:$0xff] %v78
        %v80 = vld [vmem:[%s64 + $0x38] sm:$0xff]
        %81 = vst [vmem:[%s65 + $0x38] sm:$0xff] %v80
        %v82 = vld [vmem:[%s64 + $0x40] sm:$0xff]
        %83 = vst [vmem:[%s65 + $0x40] sm:$0xff] %v82
        %v84 = vld [vmem:[%s64 + $0x48] sm:$0xff]
        %85 = vst [vmem:[%s65 + $0x48] sm:$0xff] %v84
        %v86 = vld [vmem:[%s64 + $0x50] sm:$0xff]
        %87 = vst [vmem:[%s65 + $0x50] sm:$0xff] %v86
        %v88 = vld [vmem:[%s64 + $0x58] sm:$0xff]
        %89 = vst [vmem:[%s65 + $0x58] sm:$0xff] %v88
        %v90 = vld [vmem:[%s64 + $0x60] sm:$0xff]
        %91 = vst [vmem:[%s65 + $0x60] sm:$0xff] %v90
        %v92 = vld [vmem:[%s64 + $0x68] sm:$0xff]
        %93 = vst [vmem:[%s65 + $0x68] sm:$0xff] %v92
        %v94 = vld [vmem:[%s64 + $0x70] sm:$0xff]
        %95 = vst [vmem:[%s65 + $0x70] sm:$0xff] %v94
        %v96 = vld [vmem:[%s64 + $0x78] sm:$0xff]
        %97 = vst [vmem:[%s65 + $0x78] sm:$0xff] %v96
        %v98 = vld [vmem:[%s64 + $0x80] sm:$0xff]
        %99 = vst [vmem:[%s65 + $0x80] sm:$0xff] %v98
        %v100 = vld [vmem:[%s64 + $0x88] sm:$0xff]
        %101 = vst [vmem:[%s65 + $0x88] sm:$0xff] %v100
        %v102 = vld [vmem:[%s64 + $0x90] sm:$0xff]
        %103 = vst [vmem:[%s65 + $0x90] sm:$0xff] %v102
        %v104 = vld [vmem:[%s64 + $0x98] sm:$0xff]
        %105 = vst [vmem:[%s65 + $0x98] sm:$0xff] %v104
        %v106 = vld [vmem:[%s64 + $0xa0] sm:$0xff]
        %107 = vst [vmem:[%s65 + $0xa0] sm:$0xff] %v106
        %v108 = vld [vmem:[%s64 + $0xa8] sm:$0xff]
        %109 = vst [vmem:[%s65 + $0xa8] sm:$0xff] %v108
        %v110 = vld [vmem:[%s64 + $0xb0] sm:$0xff]
        %111 = vst [vmem:[%s65 + $0xb0] sm:$0xff] %v110
        %v112 = vld [vmem:[%s64 + $0xb8] sm:$0xff]
        %113 = vst [vmem:[%s65 + $0xb8] sm:$0xff] %v112
        %v114 = vld [vmem:[%s64 + $0xc0] sm:$0xff]
        %115 = vst [vmem:[%s65 + $0xc0] sm:$0xff] %v114
        %v116 = vld [vmem:[%s64 + $0xc8] sm:$0xff]
        %117 = vst [vmem:[%s65 + $0xc8] sm:$0xff] %v116
        %v118 = vld [vmem:[%s64 + $0xd0] sm:$0xff]
        %119 = vst [vmem:[%s65 + $0xd0] sm:$0xff] %v118
        %v120 = vld [vmem:[%s64 + $0xd8] sm:$0xff]
        %121 = vst [vmem:[%s65 + $0xd8] sm:$0xff] %v120
        %v122 = vld [vmem:[%s64 + $0xe0] sm:$0xff]
        %123 = vst [vmem:[%s65 + $0xe0] sm:$0xff] %v122
        %v124 = vld [vmem:[%s64 + $0xe8] sm:$0xff]
        %125 = vst [vmem:[%s65 + $0xe8] sm:$0xff] %v124
        %v126 = vld [vmem:[%s64 + $0xf0] sm:$0xff]
        %127 = vst [vmem:[%s65 + $0xf0] sm:$0xff] %v126
        %v128 = vld [vmem:[%s64 + $0xf8] sm:$0xff]
        %129 = vst [vmem:[%s65 + $0xf8] sm:$0xff] %v128
        %v130 = vld [vmem:[%s64 + $0x100] sm:$0xff]
        %131 = vst [vmem:[%s65 + $0x100] sm:$0xff] %v130
        %v132 = vld [vmem:[%s64 + $0x108] sm:$0xff]
        %133 = vst [vmem:[%s65 + $0x108] sm:$0xff] %v132
        %v134 = vld [vmem:[%s64 + $0x110] sm:$0xff]
        %135 = vst [vmem:[%s65 + $0x110] sm:$0xff] %v134
        %v136 = vld [vmem:[%s64 + $0x118] sm:$0xff]
        %137 = vst [vmem:[%s65 + $0x118] sm:$0xff] %v136
        %v138 = vld [vmem:[%s64 + $0x120] sm:$0xff]
        %139 = vst [vmem:[%s65 + $0x120] sm:$0xff] %v138
        %v140 = vld [vmem:[%s64 + $0x128] sm:$0xff]
        %141 = vst [vmem:[%s65 + $0x128] sm:$0xff] %v140
        %v142 = vld [vmem:[%s64 + $0x130] sm:$0xff]
        %143 = vst [vmem:[%s65 + $0x130] sm:$0xff] %v142
        %v144 = vld [vmem:[%s64 + $0x138] sm:$0xff]
        %145 = vst [vmem:[%s65 + $0x138] sm:$0xff] %v144
        %v146 = vld [vmem:[%s64 + $0x140] sm:$0xff]
        %147 = vst [vmem:[%s65 + $0x140] sm:$0xff] %v146
        %v148 = vld [vmem:[%s64 + $0x148] sm:$0xff]
        %149 = vst [vmem:[%s65 + $0x148] sm:$0xff] %v148
        %v150 = vld [vmem:[%s64 + $0x150] sm:$0xff]
        %151 = vst [vmem:[%s65 + $0x150] sm:$0xff] %v150
        %v152 = vld [vmem:[%s64 + $0x158] sm:$0xff]
        %153 = vst [vmem:[%s65 + $0x158] sm:$0xff] %v152
        %v154 = vld [vmem:[%s64 + $0x160] sm:$0xff]
        %155 = vst [vmem:[%s65 + $0x160] sm:$0xff] %v154
        %v156 = vld [vmem:[%s64 + $0x168] sm:$0xff]
        %157 = vst [vmem:[%s65 + $0x168] sm:$0xff] %v156
        %v158 = vld [vmem:[%s64 + $0x170] sm:$0xff]
        %159 = vst [vmem:[%s65 + $0x170] sm:$0xff] %v158
        %v160 = vld [vmem:[%s64 + $0x178] sm:$0xff]
        %161 = vst [vmem:[%s65 + $0x178] sm:$0xff] %v160
        %v162 = vld [vmem:[%s64 + $0x180] sm:$0xff]
        %163 = vst [vmem:[%s65 + $0x180] sm:$0xff] %v162
        %v164 = vld [vmem:[%s64 + $0x188] sm:$0xff]
        %165 = vst [vmem:[%s65 + $0x188] sm:$0xff] %v164
        %v166 = vld [vmem:[%s64 + $0x190] sm:$0xff]
        %167 = vst [vmem:[%s65 + $0x190] sm:$0xff] %v166
        %v168 = vld [vmem:[%s64 + $0x198] sm:$0xff]
        %169 = vst [vmem:[%s65 + $0x198] sm:$0xff] %v168
        %v170 = vld [vmem:[%s64 + $0x1a0] sm:$0xff]
        %171 = vst [vmem:[%s65 + $0x1a0] sm:$0xff] %v170
        %v172 = vld [vmem:[%s64 + $0x1a8] sm:$0xff]
        %173 = vst [vmem:[%s65 + $0x1a8] sm:$0xff] %v172
        %v174 = vld [vmem:[%s64 + $0x1b0] sm:$0xff]
        %175 = vst [vmem:[%s65 + $0x1b0] sm:$0xff] %v174
        %v176 = vld [vmem:[%s64 + $0x1b8] sm:$0xff]
        %177 = vst [vmem:[%s65 + $0x1b8] sm:$0xff] %v176
        %v178 = vld [vmem:[%s64 + $0x1c0] sm:$0xff]
        %179 = vst [vmem:[%s65 + $0x1c0] sm:$0xff] %v178
        %v180 = vld [vmem:[%s64 + $0x1c8] sm:$0xff]
        %181 = vst [vmem:[%s65 + $0x1c8] sm:$0xff] %v180
        %v182 = vld [vmem:[%s64 + $0x1d0] sm:$0xff]
        %183 = vst [vmem:[%s65 + $0x1d0] sm:$0xff] %v182
        %v184 = vld [vmem:[%s64 + $0x1d8] sm:$0xff]
        %185 = vst [vmem:[%s65 + $0x1d8] sm:$0xff] %v184
        %v186 = vld [vmem:[%s64 + $0x1e0] sm:$0xff]
        %187 = vst [vmem:[%s65 + $0x1e0] sm:$0xff] %v186
        %v188 = vld [vmem:[%s64 + $0x1e8] sm:$0xff]
        %189 = vst [vmem:[%s65 + $0x1e8] sm:$0xff] %v188
        %v190 = vld [vmem:[%s64 + $0x1f0] sm:$0xff]
        %191 = vst [vmem:[%s65 + $0x1f0] sm:$0xff] %v190
        %v192 = vld [vmem:[%s64 + $0x1f8] sm:$0xff]
        %193 = vst [vmem:[%s65 + $0x1f8] sm:$0xff] %v192
        %v194 = vld [vmem:[%s64 + $0x200] sm:$0xff]
        %195 = vst [vmem:[%s65 + $0x200] sm:$0xff] %v194
        %v196 = vld [vmem:[%s64 + $0x208] sm:$0xff]
        %197 = vst [vmem:[%s65 + $0x208] sm:$0xff] %v196
        %v198 = vld [vmem:[%s64 + $0x210] sm:$0xff]
        %199 = vst [vmem:[%s65 + $0x210] sm:$0xff] %v198
        %v200 = vld [vmem:[%s64 + $0x218] sm:$0xff]
        %201 = vst [vmem:[%s65 + $0x218] sm:$0xff] %v200
        %v202 = vld [vmem:[%s64 + $0x220] sm:$0xff]
        %203 = vst [vmem:[%s65 + $0x220] sm:$0xff] %v202
        %v204 = vld [vmem:[%s64 + $0x228] sm:$0xff]
        %205 = vst [vmem:[%s65 + $0x228] sm:$0xff] %v204
        %v206 = vld [vmem:[%s64 + $0x230] sm:$0xff]
        %207 = vst [vmem:[%s65 + $0x230] sm:$0xff] %v206
        %v208 = vld [vmem:[%s64 + $0x238] sm:$0xff]
        %209 = vst [vmem:[%s65 + $0x238] sm:$0xff] %v208
        %v210 = vld [vmem:[%s64 + $0x240] sm:$0xff]
        %211 = vst [vmem:[%s65 + $0x240] sm:$0xff] %v210
        %v212 = vld [vmem:[%s64 + $0x248] sm:$0xff]
        %213 = vst [vmem:[%s65 + $0x248] sm:$0xff] %v212
        %v214 = vld [vmem:[%s64 + $0x250] sm:$0xff]
        %215 = vst [vmem:[%s65 + $0x250] sm:$0xff] %v214
        %v216 = vld [vmem:[%s64 + $0x258] sm:$0xff]
        %217 = vst [vmem:[%s65 + $0x258] sm:$0xff] %v216
        %v218 = vld [vmem:[%s64 + $0x260] sm:$0xff]
        %219 = vst [vmem:[%s65 + $0x260] sm:$0xff] %v218
        %v220 = vld [vmem:[%s64 + $0x268] sm:$0xff]
        %221 = vst [vmem:[%s65 + $0x268] sm:$0xff] %v220
        %v222 = vld [vmem:[%s64 + $0x270] sm:$0xff]
        %223 = vst [vmem:[%s65 + $0x270] sm:$0xff] %v222
        %v224 = vld [vmem:[%s64 + $0x278] sm:$0xff]
        %225 = vst [vmem:[%s65 + $0x278] sm:$0xff] %v224
        %v226 = vld [vmem:[%s64 + $0x280] sm:$0xff]
        %227 = vst [vmem:[%s65 + $0x280] sm:$0xff] %v226
        %v228 = vld [vmem:[%s64 + $0x288] sm:$0xff]
        %229 = vst [vmem:[%s65 + $0x288] sm:$0xff] %v228
        %v230 = vld [vmem:[%s64 + $0x290] sm:$0xff]
        %231 = vst [vmem:[%s65 + $0x290] sm:$0xff] %v230
        %v232 = vld [vmem:[%s64 + $0x298] sm:$0xff]
        %233 = vst [vmem:[%s65 + $0x298] sm:$0xff] %v232
        %v234 = vld [vmem:[%s64 + $0x2a0] sm:$0xff]
        %235 = vst [vmem:[%s65 + $0x2a0] sm:$0xff] %v234
        %v236 = vld [vmem:[%s64 + $0x2a8] sm:$0xff]
        %237 = vst [vmem:[%s65 + $0x2a8] sm:$0xff] %v236
        %v238 = vld [vmem:[%s64 + $0x2b0] sm:$0xff]
        %239 = vst [vmem:[%s65 + $0x2b0] sm:$0xff] %v238
        %v240 = vld [vmem:[%s64 + $0x2b8] sm:$0xff]
        %241 = vst [vmem:[%s65 + $0x2b8] sm:$0xff] %v240
        %v242 = vld [vmem:[%s64 + $0x2c0] sm:$0xff]
        %243 = vst [vmem:[%s65 + $0x2c0] sm:$0xff] %v242
        %v244 = vld [vmem:[%s64 + $0x2c8] sm:$0xff]
        %245 = vst [vmem:[%s65 + $0x2c8] sm:$0xff] %v244
        %v246 = vld [vmem:[%s64 + $0x2d0] sm:$0xff]
        %247 = vst [vmem:[%s65 + $0x2d0] sm:$0xff] %v246
        %v248 = vld [vmem:[%s64 + $0x2d8] sm:$0xff]
        %249 = vst [vmem:[%s65 + $0x2d8] sm:$0xff] %v248
        %v250 = vld [vmem:[%s64 + $0x2e0] sm:$0xff]
        %251 = vst [vmem:[%s65 + $0x2e0] sm:$0xff] %v250
        %v252 = vld [vmem:[%s64 + $0x2e8] sm:$0xff]
        %253 = vst [vmem:[%s65 + $0x2e8] sm:$0xff] %v252
        %v254 = vld [vmem:[%s64 + $0x2f0] sm:$0xff]
        %255 = vst [vmem:[%s65 + $0x2f0] sm:$0xff] %v254
        %v256 = vld [vmem:[%s64 + $0x2f8] sm:$0xff]
        %257 = vst [vmem:[%s65 + $0x2f8] sm:$0xff] %v256
        %v258 = vld [vmem:[%s64 + $0x300] sm:$0xff]
        %259 = vst [vmem:[%s65 + $0x300] sm:$0xff] %v258
        %v260 = vld [vmem:[%s64 + $0x308] sm:$0xff]
        %261 = vst [vmem:[%s65 + $0x308] sm:$0xff] %v260
        %v262 = vld [vmem:[%s64 + $0x310] sm:$0xff]
        %263 = vst [vmem:[%s65 + $0x310] sm:$0xff] %v262
        %v264 = vld [vmem:[%s64 + $0x318] sm:$0xff]
        %265 = vst [vmem:[%s65 + $0x318] sm:$0xff] %v264
        %v266 = vld [vmem:[%s64 + $0x320] sm:$0xff]
        %267 = vst [vmem:[%s65 + $0x320] sm:$0xff] %v266
        %v268 = vld [vmem:[%s64 + $0x328] sm:$0xff]
        %269 = vst [vmem:[%s65 + $0x328] sm:$0xff] %v268
        %v270 = vld [vmem:[%s64 + $0x330] sm:$0xff]
        %271 = vst [vmem:[%s65 + $0x330] sm:$0xff] %v270
        %v272 = vld [vmem:[%s64 + $0x338] sm:$0xff]
        %273 = vst [vmem:[%s65 + $0x338] sm:$0xff] %v272
        %v274 = vld [vmem:[%s64 + $0x340] sm:$0xff]
        %275 = vst [vmem:[%s65 + $0x340] sm:$0xff] %v274
        %v276 = vld [vmem:[%s64 + $0x348] sm:$0xff]
        %277 = vst [vmem:[%s65 + $0x348] sm:$0xff] %v276
        %v278 = vld [vmem:[%s64 + $0x350] sm:$0xff]
        %279 = vst [vmem:[%s65 + $0x350] sm:$0xff] %v278
        %v280 = vld [vmem:[%s64 + $0x358] sm:$0xff]
        %281 = vst [vmem:[%s65 + $0x358] sm:$0xff] %v280
        %v282 = vld [vmem:[%s64 + $0x360] sm:$0xff]
        %283 = vst [vmem:[%s65 + $0x360] sm:$0xff] %v282
        %v284 = vld [vmem:[%s64 + $0x368] sm:$0xff]
        %285 = vst [vmem:[%s65 + $0x368] sm:$0xff] %v284
        %v286 = vld [vmem:[%s64 + $0x370] sm:$0xff]
        %287 = vst [vmem:[%s65 + $0x370] sm:$0xff] %v286
        %v288 = vld [vmem:[%s64 + $0x378] sm:$0xff]
        %289 = vst [vmem:[%s65 + $0x378] sm:$0xff] %v288
        %v290 = vld [vmem:[%s64 + $0x380] sm:$0xff]
        %291 = vst [vmem:[%s65 + $0x380] sm:$0xff] %v290
        %v292 = vld [vmem:[%s64 + $0x388] sm:$0xff]
        %293 = vst [vmem:[%s65 + $0x388] sm:$0xff] %v292
        %v294 = vld [vmem:[%s64 + $0x390] sm:$0xff]
        %295 = vst [vmem:[%s65 + $0x390] sm:$0xff] %v294
        %v296 = vld [vmem:[%s64 + $0x398] sm:$0xff]
        %297 = vst [vmem:[%s65 + $0x398] sm:$0xff] %v296
        %v298 = vld [vmem:[%s64 + $0x3a0] sm:$0xff]
        %299 = vst [vmem:[%s65 + $0x3a0] sm:$0xff] %v298
        %v300 = vld [vmem:[%s64 + $0x3a8] sm:$0xff]
        %301 = vst [vmem:[%s65 + $0x3a8] sm:$0xff] %v300
        %v302 = vld [vmem:[%s64 + $0x3b0] sm:$0xff]
        %303 = vst [vmem:[%s65 + $0x3b0] sm:$0xff] %v302
        %v304 = vld [vmem:[%s64 + $0x3b8] sm:$0xff]
        %305 = vst [vmem:[%s65 + $0x3b8] sm:$0xff] %v304
        %v306 = vld [vmem:[%s64 + $0x3c0] sm:$0xff]
        %307 = vst [vmem:[%s65 + $0x3c0] sm:$0xff] %v306
        %v308 = vld [vmem:[%s64 + $0x3c8] sm:$0xff]
        %309 = vst [vmem:[%s65 + $0x3c8] sm:$0xff] %v308
        %v310 = vld [vmem:[%s64 + $0x3d0] sm:$0xff]
        %311 = vst [vmem:[%s65 + $0x3d0] sm:$0xff] %v310
        %v312 = vld [vmem:[%s64 + $0x3d8] sm:$0xff]
        %313 = vst [vmem:[%s65 + $0x3d8] sm:$0xff] %v312
        %v314 = vld [vmem:[%s64 + $0x3e0] sm:$0xff]
        %315 = vst [vmem:[%s65 + $0x3e0] sm:$0xff] %v314
        %v316 = vld [vmem:[%s64 + $0x3e8] sm:$0xff]
        %317 = vst [vmem:[%s65 + $0x3e8] sm:$0xff] %v316
        %v318 = vld [vmem:[%s64 + $0x3f0] sm:$0xff]
        %319 = vst [vmem:[%s65 + $0x3f0] sm:$0xff] %v318
        %v320 = vld [vmem:[%s64 + $0x3f8] sm:$0xff]
        %321 = vst [vmem:[%s65 + $0x3f8] sm:$0xff] %v320
        %v322 = vld [vmem:[%s64 + $0x400] sm:$0xff]
        %323 = vst [vmem:[%s65 + $0x400] sm:$0xff] %v322
        %v324 = vld [vmem:[%s64 + $0x408] sm:$0xff]
        %325 = vst [vmem:[%s65 + $0x408] sm:$0xff] %v324
        %v326 = vld [vmem:[%s64 + $0x410] sm:$0xff]
        %327 = vst [vmem:[%s65 + $0x410] sm:$0xff] %v326
        %v328 = vld [vmem:[%s64 + $0x418] sm:$0xff]
        %329 = vst [vmem:[%s65 + $0x418] sm:$0xff] %v328
      $region33: #{forward.1} parent=27 // loop_footer
        %s63 = sadd.s32 1, %s59
      $region34: #{forward.1} parent=27 // loop_footer_branch
        %58 = sbr.rel target = $region30
      $region35: #{forward.1} parent=27 // loop_exit
        _
    $region28: #{forward.1} parent=12 // pred_fallthru
      _
    %p330 = pneg %p54
    // Predicated region
    $region36: #{forward.1} parent=12 // pred_check
      _
    $region37: #{forward.1} parent=12 // pred_check_branch
      %332 = sbr.rel (%p54) target = $region39
    $region38: #{forward.1} parent=12 // pred_region
      %s333 = sand.u32 1056, 7
    $region39: #{forward.1} parent=12 // pred_fallthru
      _
  $region13: #{forward.1} parent=0 // pred_fallthru
    _
  // Predicated region
  $region14: #{forward.1} parent=0 // pred_check
    %p38 = pneg %p34
  $region15: #{forward.1} parent=0 // pred_check_branch
    %40 = sbr.rel (%p38) target = $region17
  $region16: #{forward.1} parent=0 // pred_region
    %s41 = sshll.u32 1, 1056
    %s42 = ssub.s32 %s41, 1
    loop: start=0, step=1, limit=1
    $region18: #{forward.1} parent=16 // loop_pre_header
      _
    $region19: #{forward.1} parent=16 // loop_header
      %s44 = sphi 0, %s48
      %p45 = scmp.ge.s32.totalorder %s44, 1
      %s49 = sphi %s2, %s2
      %s50 = sphi %s23, %s23
    $region20: #{forward.1} parent=16 // loop_header_branch
      %47 = sbr.rel (%p45) target = $region24
    $region21: #{forward.1} parent=16 // loop_body
      %v51 = vld [vmem:[%s49] sm:%s42]
      %52 = vst [vmem:[%s50] sm:%s42] %v51
    $region22: #{forward.1} parent=16 // loop_footer
      %s48 = sadd.s32 1, %s44
    $region23: #{forward.1} parent=16 // loop_footer_branch
      %43 = sbr.rel target = $region19
    $region24: #{forward.1} parent=16 // loop_exit
      _
  $region17: #{forward.1} parent=0 // pred_fallthru
    _
  // Predicated region
  $region40: #{forward.1} parent=0 // pred_check
    _
  $region41: #{forward.1} parent=0 // pred_check_branch
    %336 = sbr.rel (0) target = $region43
  $region42: #{forward.1} parent=0 // pred_region
    %337 = vsyncadd [#allocation4], 16896
  $region43: #{forward.1} parent=0 // pred_fallthru
    _
  %s338 = scalar_lea.vmem %s23, 1056
  %s339 = scalar_lea.sflag [#allocation4], 1
  %p341 = scmp.lt.u32.totalorder 48, 8
  %p342 = pneg %p341
  // Predicated region
  $region44: #{forward.1} parent=0 // pred_check
    _
  $region45: #{forward.1} parent=0 // pred_check_branch
    %344 = sbr.rel (%p341) target = $region47
  $region46: #{forward.1} parent=0 // pred_region
    %s360 = sand.u32 48, 7
    %p361 = scmp.eq.s32.totalorder %s360, 0
    // Predicated region
    $region59: #{forward.1} parent=46 // pred_check
      %p362 = pneg %p361
    $region60: #{forward.1} parent=46 // pred_check_branch
      %364 = sbr.rel (%p362) target = $region62
    $region61: #{forward.1} parent=46 // pred_region
      loop: start=0, step=1, limit=1
      $region63: #{forward.1} parent=61 // loop_pre_header
        _
      $region64: #{forward.1} parent=61 // loop_header
        %s366 = sphi 0, %s370
        %p367 = scmp.ge.s32.totalorder %s366, 1
        %s371 = sphi %s3, %s3
        %s372 = sphi %s338, %s338
      $region65: #{forward.1} parent=61 // loop_header_branch
        %369 = sbr.rel (%p367) target = $region69
      $region66: #{forward.1} parent=61 // loop_body
        %v373 = vld [vmem:[%s371] sm:$0xff]
        %374 = vst [vmem:[%s372] sm:$0xff] %v373
        %v375 = vld [vmem:[%s371 + $0x8] sm:$0xff]
        %376 = vst [vmem:[%s372 + $0x8] sm:$0xff] %v375
        %v377 = vld [vmem:[%s371 + $0x10] sm:$0xff]
        %378 = vst [vmem:[%s372 + $0x10] sm:$0xff] %v377
        %v379 = vld [vmem:[%s371 + $0x18] sm:$0xff]
        %380 = vst [vmem:[%s372 + $0x18] sm:$0xff] %v379
        %v381 = vld [vmem:[%s371 + $0x20] sm:$0xff]
        %382 = vst [vmem:[%s372 + $0x20] sm:$0xff] %v381
        %v383 = vld [vmem:[%s371 + $0x28] sm:$0xff]
        %384 = vst [vmem:[%s372 + $0x28] sm:$0xff] %v383
      $region67: #{forward.1} parent=61 // loop_footer
        %s370 = sadd.s32 1, %s366
      $region68: #{forward.1} parent=61 // loop_footer_branch
        %365 = sbr.rel target = $region64
      $region69: #{forward.1} parent=61 // loop_exit
        _
    $region62: #{forward.1} parent=46 // pred_fallthru
      _
    %p385 = pneg %p361
    // Predicated region
    $region70: #{forward.1} parent=46 // pred_check
      _
    $region71: #{forward.1} parent=46 // pred_check_branch
      %387 = sbr.rel (%p361) target = $region73
    $region72: #{forward.1} parent=46 // pred_region
      %s388 = sand.u32 48, 7
    $region73: #{forward.1} parent=46 // pred_fallthru
      _
  $region47: #{forward.1} parent=0 // pred_fallthru
    _
  // Predicated region
  $region48: #{forward.1} parent=0 // pred_check
    %p345 = pneg %p341
  $region49: #{forward.1} parent=0 // pred_check_branch
    %347 = sbr.rel (%p345) target = $region51
  $region50: #{forward.1} parent=0 // pred_region
    %s348 = sshll.u32 1, 48
    %s349 = ssub.s32 %s348, 1
    loop: start=0, step=1, limit=1
    $region52: #{forward.1} parent=50 // loop_pre_header
      _
    $region53: #{forward.1} parent=50 // loop_header
      %s351 = sphi 0, %s355
      %p352 = scmp.ge.s32.totalorder %s351, 1
      %s356 = sphi %s3, %s3
      %s357 = sphi %s338, %s338
    $region54: #{forward.1} parent=50 // loop_header_branch
      %354 = sbr.rel (%p352) target = $region58
    $region55: #{forward.1} parent=50 // loop_body
      %v358 = vld [vmem:[%s356] sm:%s349]
      %359 = vst [vmem:[%s357] sm:%s349] %v358
    $region56: #{forward.1} parent=50 // loop_footer
      %s355 = sadd.s32 1, %s351
    $region57: #{forward.1} parent=50 // loop_footer_branch
      %350 = sbr.rel target = $region53
    $region58: #{forward.1} parent=50 // loop_exit
      _
  $region51: #{forward.1} parent=0 // pred_fallthru
    _
  // Predicated region
  $region74: #{forward.1} parent=0 // pred_check
    _
  $region75: #{forward.1} parent=0 // pred_check_branch
    %391 = sbr.rel (0) target = $region77
  $region76: #{forward.1} parent=0 // pred_region
    %392 = vsyncadd %s339, 768
  $region77: #{forward.1} parent=0 // pred_fallthru
    _
  %s393 = scalar_lea.vmem %s23, 1104
  %s394 = scalar_lea.sflag [#allocation4], 2
  %p396 = scmp.lt.u32.totalorder 48, 8
  %p397 = pneg %p396
  // Predicated region
  $region78: #{forward.1} parent=0 // pred_check
    _
  $region79: #{forward.1} parent=0 // pred_check_branch
    %399 = sbr.rel (%p396) target = $region81
  $region80: #{forward.1} parent=0 // pred_region
    %s415 = sand.u32 48, 7
    %p416 = scmp.eq.s32.totalorder %s415, 0
    // Predicated region
    $region93: #{forward.1} parent=80 // pred_check
      %p417 = pneg %p416
    $region94: #{forward.1} parent=80 // pred_check_branch
      %419 = sbr.rel (%p417) target = $region96
    $region95: #{forward.1} parent=80 // pred_region
      loop: start=0, step=1, limit=1
      $region97: #{forward.1} parent=95 // loop_pre_header
        _
      $region98: #{forward.1} parent=95 // loop_header
        %s421 = sphi 0, %s425
        %p422 = scmp.ge.s32.totalorder %s421, 1
        %s426 = sphi %s4, %s4
        %s427 = sphi %s393, %s393
      $region99: #{forward.1} parent=95 // loop_header_branch
        %424 = sbr.rel (%p422) target = $region103
      $region100: #{forward.1} parent=95 // loop_body
        %v428 = vld [vmem:[%s426] sm:$0xff]
        %429 = vst [vmem:[%s427] sm:$0xff] %v428
        %v430 = vld [vmem:[%s426 + $0x8] sm:$0xff]
        %431 = vst [vmem:[%s427 + $0x8] sm:$0xff] %v430
        %v432 = vld [vmem:[%s426 + $0x10] sm:$0xff]
        %433 = vst [vmem:[%s427 + $0x10] sm:$0xff] %v432
        %v434 = vld [vmem:[%s426 + $0x18] sm:$0xff]
        %435 = vst [vmem:[%s427 + $0x18] sm:$0xff] %v434
        %v436 = vld [vmem:[%s426 + $0x20] sm:$0xff]
        %437 = vst [vmem:[%s427 + $0x20] sm:$0xff] %v436
        %v438 = vld [vmem:[%s426 + $0x28] sm:$0xff]
        %439 = vst [vmem:[%s427 + $0x28] sm:$0xff] %v438
      $region101: #{forward.1} parent=95 // loop_footer
        %s425 = sadd.s32 1, %s421
      $region102: #{forward.1} parent=95 // loop_footer_branch
        %420 = sbr.rel target = $region98
      $region103: #{forward.1} parent=95 // loop_exit
        _
    $region96: #{forward.1} parent=80 // pred_fallthru
      _
    %p440 = pneg %p416
    // Predicated region
    $region104: #{forward.1} parent=80 // pred_check
      _
    $region105: #{forward.1} parent=80 // pred_check_branch
      %442 = sbr.rel (%p416) target = $region107
    $region106: #{forward.1} parent=80 // pred_region
      %s443 = sand.u32 48, 7
    $region107: #{forward.1} parent=80 // pred_fallthru
      _
  $region81: #{forward.1} parent=0 // pred_fallthru
    _
  // Predicated region
  $region82: #{forward.1} parent=0 // pred_check
    %p400 = pneg %p396
  $region83: #{forward.1} parent=0 // pred_check_branch
    %402 = sbr.rel (%p400) target = $region85
  $region84: #{forward.1} parent=0 // pred_region
    %s403 = sshll.u32 1, 48
    %s404 = ssub.s32 %s403, 1
    loop: start=0, step=1, limit=1
    $region86: #{forward.1} parent=84 // loop_pre_header
      _
    $region87: #{forward.1} parent=84 // loop_header
      %s406 = sphi 0, %s410
      %p407 = scmp.ge.s32.totalorder %s406, 1
      %s411 = sphi %s4, %s4
      %s412 = sphi %s393, %s393
    $region88: #{forward.1} parent=84 // loop_header_branch
      %409 = sbr.rel (%p407) target = $region92
    $region89: #{forward.1} parent=84 // loop_body
      %v413 = vld [vmem:[%s411] sm:%s404]
      %414 = vst [vmem:[%s412] sm:%s404] %v413
    $region90: #{forward.1} parent=84 // loop_footer
      %s410 = sadd.s32 1, %s406
    $region91: #{forward.1} parent=84 // loop_footer_branch
      %405 = sbr.rel target = $region87
    $region92: #{forward.1} parent=84 // loop_exit
      _
  $region85: #{forward.1} parent=0 // pred_fallthru
    _
  // Predicated region
  $region108: #{forward.1} parent=0 // pred_check
    _
  $region109: #{forward.1} parent=0 // pred_check_branch
    %446 = sbr.rel (0) target = $region111
  $region110: #{forward.1} parent=0 // pred_region
    %447 = vsyncadd %s394, 768
  $region111: #{forward.1} parent=0 // pred_fallthru
    _
  %s448 = scalar_lea.vmem %s23, 1152
  %s449 = scalar_lea.sflag [#allocation4], 3
  %p451 = scmp.lt.u32.totalorder 48, 8
  %p452 = pneg %p451
  // Predicated region
  $region112: #{forward.1} parent=0 // pred_check
    _
  $region113: #{forward.1} parent=0 // pred_check_branch
    %454 = sbr.rel (%p451) target = $region115
  $region114: #{forward.1} parent=0 // pred_region
    %s470 = sand.u32 48, 7
    %p471 = scmp.eq.s32.totalorder %s470, 0
    // Predicated region
    $region127: #{forward.1} parent=114 // pred_check
      %p472 = pneg %p471
    $region128: #{forward.1} parent=114 // pred_check_branch
      %474 = sbr.rel (%p472) target = $region130
    $region129: #{forward.1} parent=114 // pred_region
      loop: start=0, step=1, limit=1
      $region131: #{forward.1} parent=129 // loop_pre_header
        _
      $region132: #{forward.1} parent=129 // loop_header
        %s476 = sphi 0, %s480
        %p477 = scmp.ge.s32.totalorder %s476, 1
        %s481 = sphi %s5, %s5
        %s482 = sphi %s448, %s448
      $region133: #{forward.1} parent=129 // loop_header_branch
        %479 = sbr.rel (%p477) target = $region137
      $region134: #{forward.1} parent=129 // loop_body
        %v483 = vld [vmem:[%s481] sm:$0xff]
        %484 = vst [vmem:[%s482] sm:$0xff] %v483
        %v485 = vld [vmem:[%s481 + $0x8] sm:$0xff]
        %486 = vst [vmem:[%s482 + $0x8] sm:$0xff] %v485
        %v487 = vld [vmem:[%s481 + $0x10] sm:$0xff]
        %488 = vst [vmem:[%s482 + $0x10] sm:$0xff] %v487
        %v489 = vld [vmem:[%s481 + $0x18] sm:$0xff]
        %490 = vst [vmem:[%s482 + $0x18] sm:$0xff] %v489
        %v491 = vld [vmem:[%s481 + $0x20] sm:$0xff]
        %492 = vst [vmem:[%s482 + $0x20] sm:$0xff] %v491
        %v493 = vld [vmem:[%s481 + $0x28] sm:$0xff]
        %494 = vst [vmem:[%s482 + $0x28] sm:$0xff] %v493
      $region135: #{forward.1} parent=129 // loop_footer
        %s480 = sadd.s32 1, %s476
      $region136: #{forward.1} parent=129 // loop_footer_branch
        %475 = sbr.rel target = $region132
      $region137: #{forward.1} parent=129 // loop_exit
        _
    $region130: #{forward.1} parent=114 // pred_fallthru
      _
    %p495 = pneg %p471
    // Predicated region
    $region138: #{forward.1} parent=114 // pred_check
      _
    $region139: #{forward.1} parent=114 // pred_check_branch
      %497 = sbr.rel (%p471) target = $region141
    $region140: #{forward.1} parent=114 // pred_region
      %s498 = sand.u32 48, 7
    $region141: #{forward.1} parent=114 // pred_fallthru
      _
  $region115: #{forward.1} parent=0 // pred_fallthru
    _
  // Predicated region
  $region116: #{forward.1} parent=0 // pred_check
    %p455 = pneg %p451
  $region117: #{forward.1} parent=0 // pred_check_branch
    %457 = sbr.rel (%p455) target = $region119
  $region118: #{forward.1} parent=0 // pred_region
    %s458 = sshll.u32 1, 48
    %s459 = ssub.s32 %s458, 1
    loop: start=0, step=1, limit=1
    $region120: #{forward.1} parent=118 // loop_pre_header
      _
    $region121: #{forward.1} parent=118 // loop_header
      %s461 = sphi 0, %s465
      %p462 = scmp.ge.s32.totalorder %s461, 1
      %s466 = sphi %s5, %s5
      %s467 = sphi %s448, %s448
    $region122: #{forward.1} parent=118 // loop_header_branch
      %464 = sbr.rel (%p462) target = $region126
    $region123: #{forward.1} parent=118 // loop_body
      %v468 = vld [vmem:[%s466] sm:%s459]
      %469 = vst [vmem:[%s467] sm:%s459] %v468
    $region124: #{forward.1} parent=118 // loop_footer
      %s465 = sadd.s32 1, %s461
    $region125: #{forward.1} parent=118 // loop_footer_branch
      %460 = sbr.rel target = $region121
    $region126: #{forward.1} parent=118 // loop_exit
      _
  $region119: #{forward.1} parent=0 // pred_fallthru
    _
  // Predicated region
  $region142: #{forward.1} parent=0 // pred_check
    _
  $region143: #{forward.1} parent=0 // pred_check_branch
    %501 = sbr.rel (0) target = $region145
  $region144: #{forward.1} parent=0 // pred_region
    %502 = vsyncadd %s449, 768
  $region145: #{forward.1} parent=0 // pred_fallthru
    _
  %s503 = scalar_lea.vmem %s23, 1200
  %s504 = scalar_lea.sflag [#allocation4], 4
  %p506 = scmp.lt.u32.totalorder 48, 8
  %p507 = pneg %p506
  // Predicated region
  $region146: #{forward.1} parent=0 // pred_check
    _
  $region147: #{forward.1} parent=0 // pred_check_branch
    %509 = sbr.rel (%p506) target = $region149
  $region148: #{forward.1} parent=0 // pred_region
    %s525 = sand.u32 48, 7
    %p526 = scmp.eq.s32.totalorder %s525, 0
    // Predicated region
    $region161: #{forward.1} parent=148 // pred_check
      %p527 = pneg %p526
    $region162: #{forward.1} parent=148 // pred_check_branch
      %529 = sbr.rel (%p527) target = $region164
    $region163: #{forward.1} parent=148 // pred_region
      loop: start=0, step=1, limit=1
      $region165: #{forward.1} parent=163 // loop_pre_header
        _
      $region166: #{forward.1} parent=163 // loop_header
        %s531 = sphi 0, %s535
        %p532 = scmp.ge.s32.totalorder %s531, 1
        %s536 = sphi %s6, %s6
        %s537 = sphi %s503, %s503
      $region167: #{forward.1} parent=163 // loop_header_branch
        %534 = sbr.rel (%p532) target = $region171
      $region168: #{forward.1} parent=163 // loop_body
        %v538 = vld [vmem:[%s536] sm:$0xff]
        %539 = vst [vmem:[%s537] sm:$0xff] %v538
        %v540 = vld [vmem:[%s536 + $0x8] sm:$0xff]
        %541 = vst [vmem:[%s537 + $0x8] sm:$0xff] %v540
        %v542 = vld [vmem:[%s536 + $0x10] sm:$0xff]
        %543 = vst [vmem:[%s537 + $0x10] sm:$0xff] %v542
        %v544 = vld [vmem:[%s536 + $0x18] sm:$0xff]
        %545 = vst [vmem:[%s537 + $0x18] sm:$0xff] %v544
        %v546 = vld [vmem:[%s536 + $0x20] sm:$0xff]
        %547 = vst [vmem:[%s537 + $0x20] sm:$0xff] %v546
        %v548 = vld [vmem:[%s536 + $0x28] sm:$0xff]
        %549 = vst [vmem:[%s537 + $0x28] sm:$0xff] %v548
      $region169: #{forward.1} parent=163 // loop_footer
        %s535 = sadd.s32 1, %s531
      $region170: #{forward.1} parent=163 // loop_footer_branch
        %530 = sbr.rel target = $region166
      $region171: #{forward.1} parent=163 // loop_exit
        _
    $region164: #{forward.1} parent=148 // pred_fallthru
      _
    %p550 = pneg %p526
    // Predicated region
    $region172: #{forward.1} parent=148 // pred_check
      _
    $region173: #{forward.1} parent=148 // pred_check_branch
      %552 = sbr.rel (%p526) target = $region175
    $region174: #{forward.1} parent=148 // pred_region
      %s553 = sand.u32 48, 7
    $region175: #{forward.1} parent=148 // pred_fallthru
      _
  $region149: #{forward.1} parent=0 // pred_fallthru
    _
  // Predicated region
  $region150: #{forward.1} parent=0 // pred_check
    %p510 = pneg %p506
  $region151: #{forward.1} parent=0 // pred_check_branch
    %512 = sbr.rel (%p510) target = $region153
  $region152: #{forward.1} parent=0 // pred_region
    %s513 = sshll.u32 1, 48
    %s514 = ssub.s32 %s513, 1
    loop: start=0, step=1, limit=1
    $region154: #{forward.1} parent=152 // loop_pre_header
      _
    $region155: #{forward.1} parent=152 // loop_header
      %s516 = sphi 0, %s520
      %p517 = scmp.ge.s32.totalorder %s516, 1
      %s521 = sphi %s6, %s6
      %s522 = sphi %s503, %s503
    $region156: #{forward.1} parent=152 // loop_header_branch
      %519 = sbr.rel (%p517) target = $region160
    $region157: #{forward.1} parent=152 // loop_body
      %v523 = vld [vmem:[%s521] sm:%s514]
      %524 = vst [vmem:[%s522] sm:%s514] %v523
    $region158: #{forward.1} parent=152 // loop_footer
      %s520 = sadd.s32 1, %s516
    $region159: #{forward.1} parent=152 // loop_footer_branch
      %515 = sbr.rel target = $region155
    $region160: #{forward.1} parent=152 // loop_exit
      _
  $region153: #{forward.1} parent=0 // pred_fallthru
    _
  // Predicated region
  $region176: #{forward.1} parent=0 // pred_check
    _
  $region177: #{forward.1} parent=0 // pred_check_branch
    %556 = sbr.rel (0) target = $region179
  $region178: #{forward.1} parent=0 // pred_region
    %557 = vsyncadd %s504, 768
  $region179: #{forward.1} parent=0 // pred_fallthru
    _
  %s558 = scalar_lea.vmem %s23, 1248
  %s559 = scalar_lea.sflag [#allocation4], 5
  %p561 = scmp.lt.u32.totalorder 48, 8
  %p562 = pneg %p561
  // Predicated region
  $region180: #{forward.1} parent=0 // pred_check
    _
  $region181: #{forward.1} parent=0 // pred_check_branch
    %564 = sbr.rel (%p561) target = $region183
  $region182: #{forward.1} parent=0 // pred_region
    %s580 = sand.u32 48, 7
    %p581 = scmp.eq.s32.totalorder %s580, 0
    // Predicated region
    $region195: #{forward.1} parent=182 // pred_check
      %p582 = pneg %p581
    $region196: #{forward.1} parent=182 // pred_check_branch
      %584 = sbr.rel (%p582) target = $region198
    $region197: #{forward.1} parent=182 // pred_region
      loop: start=0, step=1, limit=1
      $region199: #{forward.1} parent=197 // loop_pre_header
        _
      $region200: #{forward.1} parent=197 // loop_header
        %s586 = sphi 0, %s590
        %p587 = scmp.ge.s32.totalorder %s586, 1
        %s591 = sphi %s7, %s7
        %s592 = sphi %s558, %s558
      $region201: #{forward.1} parent=197 // loop_header_branch
        %589 = sbr.rel (%p587) target = $region205
      $region202: #{forward.1} parent=197 // loop_body
        %v593 = vld [vmem:[%s591] sm:$0xff]
        %594 = vst [vmem:[%s592] sm:$0xff] %v593
        %v595 = vld [vmem:[%s591 + $0x8] sm:$0xff]
        %596 = vst [vmem:[%s592 + $0x8] sm:$0xff] %v595
        %v597 = vld [vmem:[%s591 + $0x10] sm:$0xff]
        %598 = vst [vmem:[%s592 + $0x10] sm:$0xff] %v597
        %v599 = vld [vmem:[%s591 + $0x18] sm:$0xff]
        %600 = vst [vmem:[%s592 + $0x18] sm:$0xff] %v599
        %v601 = vld [vmem:[%s591 + $0x20] sm:$0xff]
        %602 = vst [vmem:[%s592 + $0x20] sm:$0xff] %v601
        %v603 = vld [vmem:[%s591 + $0x28] sm:$0xff]
        %604 = vst [vmem:[%s592 + $0x28] sm:$0xff] %v603
      $region203: #{forward.1} parent=197 // loop_footer
        %s590 = sadd.s32 1, %s586
      $region204: #{forward.1} parent=197 // loop_footer_branch
        %585 = sbr.rel target = $region200
      $region205: #{forward.1} parent=197 // loop_exit
        _
    $region198: #{forward.1} parent=182 // pred_fallthru
      _
    %p605 = pneg %p581
    // Predicated region
    $region206: #{forward.1} parent=182 // pred_check
      _
    $region207: #{forward.1} parent=182 // pred_check_branch
      %607 = sbr.rel (%p581) target = $region209
    $region208: #{forward.1} parent=182 // pred_region
      %s608 = sand.u32 48, 7
    $region209: #{forward.1} parent=182 // pred_fallthru
      _
  $region183: #{forward.1} parent=0 // pred_fallthru
    _
  // Predicated region
  $region184: #{forward.1} parent=0 // pred_check
    %p565 = pneg %p561
  $region185: #{forward.1} parent=0 // pred_check_branch
    %567 = sbr.rel (%p565) target = $region187
  $region186: #{forward.1} parent=0 // pred_region
    %s568 = sshll.u32 1, 48
    %s569 = ssub.s32 %s568, 1
    loop: start=0, step=1, limit=1
    $region188: #{forward.1} parent=186 // loop_pre_header
      _
    $region189: #{forward.1} parent=186 // loop_header
      %s571 = sphi 0, %s575
      %p572 = scmp.ge.s32.totalorder %s571, 1
      %s576 = sphi %s7, %s7
      %s577 = sphi %s558, %s558
    $region190: #{forward.1} parent=186 // loop_header_branch
      %574 = sbr.rel (%p572) target = $region194
    $region191: #{forward.1} parent=186 // loop_body
      %v578 = vld [vmem:[%s576] sm:%s569]
      %579 = vst [vmem:[%s577] sm:%s569] %v578
    $region192: #{forward.1} parent=186 // loop_footer
      %s575 = sadd.s32 1, %s571
    $region193: #{forward.1} parent=186 // loop_footer_branch
      %570 = sbr.rel target = $region189
    $region194: #{forward.1} parent=186 // loop_exit
      _
  $region187: #{forward.1} parent=0 // pred_fallthru
    _
  // Predicated region
  $region210: #{forward.1} parent=0 // pred_check
    _
  $region211: #{forward.1} parent=0 // pred_check_branch
    %611 = sbr.rel (0) target = $region213
  $region212: #{forward.1} parent=0 // pred_region
    %612 = vsyncadd %s559, 768
  $region213: #{forward.1} parent=0 // pred_fallthru
    _
  %s613 = scalar_lea.vmem %s23, 1296
  %s614 = scalar_lea.sflag [#allocation4], 6
  %p616 = scmp.lt.u32.totalorder 48, 8
  %p617 = pneg %p616
  // Predicated region
  $region214: #{forward.1} parent=0 // pred_check
    _
  $region215: #{forward.1} parent=0 // pred_check_branch
    %619 = sbr.rel (%p616) target = $region217
  $region216: #{forward.1} parent=0 // pred_region
    %s635 = sand.u32 48, 7
    %p636 = scmp.eq.s32.totalorder %s635, 0
    // Predicated region
    $region229: #{forward.1} parent=216 // pred_check
      %p637 = pneg %p636
    $region230: #{forward.1} parent=216 // pred_check_branch
      %639 = sbr.rel (%p637) target = $region232
    $region231: #{forward.1} parent=216 // pred_region
      loop: start=0, step=1, limit=1
      $region233: #{forward.1} parent=231 // loop_pre_header
        _
      $region234: #{forward.1} parent=231 // loop_header
        %s641 = sphi 0, %s645
        %p642 = scmp.ge.s32.totalorder %s641, 1
        %s646 = sphi %s8, %s8
        %s647 = sphi %s613, %s613
      $region235: #{forward.1} parent=231 // loop_header_branch
        %644 = sbr.rel (%p642) target = $region239
      $region236: #{forward.1} parent=231 // loop_body
        %v648 = vld [vmem:[%s646] sm:$0xff]
        %649 = vst [vmem:[%s647] sm:$0xff] %v648
        %v650 = vld [vmem:[%s646 + $0x8] sm:$0xff]
        %651 = vst [vmem:[%s647 + $0x8] sm:$0xff] %v650
        %v652 = vld [vmem:[%s646 + $0x10] sm:$0xff]
        %653 = vst [vmem:[%s647 + $0x10] sm:$0xff] %v652
        %v654 = vld [vmem:[%s646 + $0x18] sm:$0xff]
        %655 = vst [vmem:[%s647 + $0x18] sm:$0xff] %v654
        %v656 = vld [vmem:[%s646 + $0x20] sm:$0xff]
        %657 = vst [vmem:[%s647 + $0x20] sm:$0xff] %v656
        %v658 = vld [vmem:[%s646 + $0x28] sm:$0xff]
        %659 = vst [vmem:[%s647 + $0x28] sm:$0xff] %v658
      $region237: #{forward.1} parent=231 // loop_footer
        %s645 = sadd.s32 1, %s641
      $region238: #{forward.1} parent=231 // loop_footer_branch
        %640 = sbr.rel target = $region234
      $region239: #{forward.1} parent=231 // loop_exit
        _
    $region232: #{forward.1} parent=216 // pred_fallthru
      _
    %p660 = pneg %p636
    // Predicated region
    $region240: #{forward.1} parent=216 // pred_check
      _
    $region241: #{forward.1} parent=216 // pred_check_branch
      %662 = sbr.rel (%p636) target = $region243
    $region242: #{forward.1} parent=216 // pred_region
      %s663 = sand.u32 48, 7
    $region243: #{forward.1} parent=216 // pred_fallthru
      _
  $region217: #{forward.1} parent=0 // pred_fallthru
    _
  // Predicated region
  $region218: #{forward.1} parent=0 // pred_check
    %p620 = pneg %p616
  $region219: #{forward.1} parent=0 // pred_check_branch
    %622 = sbr.rel (%p620) target = $region221
  $region220: #{forward.1} parent=0 // pred_region
    %s623 = sshll.u32 1, 48
    %s624 = ssub.s32 %s623, 1
    loop: start=0, step=1, limit=1
    $region222: #{forward.1} parent=220 // loop_pre_header
      _
    $region223: #{forward.1} parent=220 // loop_header
      %s626 = sphi 0, %s630
      %p627 = scmp.ge.s32.totalorder %s626, 1
      %s631 = sphi %s8, %s8
      %s632 = sphi %s613, %s613
    $region224: #{forward.1} parent=220 // loop_header_branch
      %629 = sbr.rel (%p627) target = $region228
    $region225: #{forward.1} parent=220 // loop_body
      %v633 = vld [vmem:[%s631] sm:%s624]
      %634 = vst [vmem:[%s632] sm:%s624] %v633
    $region226: #{forward.1} parent=220 // loop_footer
      %s630 = sadd.s32 1, %s626
    $region227: #{forward.1} parent=220 // loop_footer_branch
      %625 = sbr.rel target = $region223
    $region228: #{forward.1} parent=220 // loop_exit
      _
  $region221: #{forward.1} parent=0 // pred_fallthru
    _
  // Predicated region
  $region244: #{forward.1} parent=0 // pred_check
    _
  $region245: #{forward.1} parent=0 // pred_check_branch
    %666 = sbr.rel (0) target = $region247
  $region246: #{forward.1} parent=0 // pred_region
    %667 = vsyncadd %s614, 768
  $region247: #{forward.1} parent=0 // pred_fallthru
    _
  %s668 = scalar_lea.vmem %s23, 1344
  %s669 = scalar_lea.sflag [#allocation4], 7
  %p671 = scmp.lt.u32.totalorder 48, 8
  %p672 = pneg %p671
  // Predicated region
  $region248: #{forward.1} parent=0 // pred_check
    _
  $region249: #{forward.1} parent=0 // pred_check_branch
    %674 = sbr.rel (%p671) target = $region251
  $region250: #{forward.1} parent=0 // pred_region
    %s690 = sand.u32 48, 7
    %p691 = scmp.eq.s32.totalorder %s690, 0
    // Predicated region
    $region263: #{forward.1} parent=250 // pred_check
      %p692 = pneg %p691
    $region264: #{forward.1} parent=250 // pred_check_branch
      %694 = sbr.rel (%p692) target = $region266
    $region265: #{forward.1} parent=250 // pred_region
      loop: start=0, step=1, limit=1
      $region267: #{forward.1} parent=265 // loop_pre_header
        _
      $region268: #{forward.1} parent=265 // loop_header
        %s696 = sphi 0, %s700
        %p697 = scmp.ge.s32.totalorder %s696, 1
        %s701 = sphi %s9, %s9
        %s702 = sphi %s668, %s668
      $region269: #{forward.1} parent=265 // loop_header_branch
        %699 = sbr.rel (%p697) target = $region273
      $region270: #{forward.1} parent=265 // loop_body
        %v703 = vld [vmem:[%s701] sm:$0xff]
        %704 = vst [vmem:[%s702] sm:$0xff] %v703
        %v705 = vld [vmem:[%s701 + $0x8] sm:$0xff]
        %706 = vst [vmem:[%s702 + $0x8] sm:$0xff] %v705
        %v707 = vld [vmem:[%s701 + $0x10] sm:$0xff]
        %708 = vst [vmem:[%s702 + $0x10] sm:$0xff] %v707
        %v709 = vld [vmem:[%s701 + $0x18] sm:$0xff]
        %710 = vst [vmem:[%s702 + $0x18] sm:$0xff] %v709
        %v711 = vld [vmem:[%s701 + $0x20] sm:$0xff]
        %712 = vst [vmem:[%s702 + $0x20] sm:$0xff] %v711
        %v713 = vld [vmem:[%s701 + $0x28] sm:$0xff]
        %714 = vst [vmem:[%s702 + $0x28] sm:$0xff] %v713
      $region271: #{forward.1} parent=265 // loop_footer
        %s700 = sadd.s32 1, %s696
      $region272: #{forward.1} parent=265 // loop_footer_branch
        %695 = sbr.rel target = $region268
      $region273: #{forward.1} parent=265 // loop_exit
        _
    $region266: #{forward.1} parent=250 // pred_fallthru
      _
    %p715 = pneg %p691
    // Predicated region
    $region274: #{forward.1} parent=250 // pred_check
      _
    $region275: #{forward.1} parent=250 // pred_check_branch
      %717 = sbr.rel (%p691) target = $region277
    $region276: #{forward.1} parent=250 // pred_region
      %s718 = sand.u32 48, 7
    $region277: #{forward.1} parent=250 // pred_fallthru
      _
  $region251: #{forward.1} parent=0 // pred_fallthru
    _
  // Predicated region
  $region252: #{forward.1} parent=0 // pred_check
    %p675 = pneg %p671
  $region253: #{forward.1} parent=0 // pred_check_branch
    %677 = sbr.rel (%p675) target = $region255
  $region254: #{forward.1} parent=0 // pred_region
    %s678 = sshll.u32 1, 48
    %s679 = ssub.s32 %s678, 1
    loop: start=0, step=1, limit=1
    $region256: #{forward.1} parent=254 // loop_pre_header
      _
    $region257: #{forward.1} parent=254 // loop_header
      %s681 = sphi 0, %s685
      %p682 = scmp.ge.s32.totalorder %s681, 1
      %s686 = sphi %s9, %s9
      %s687 = sphi %s668, %s668
    $region258: #{forward.1} parent=254 // loop_header_branch
      %684 = sbr.rel (%p682) target = $region262
    $region259: #{forward.1} parent=254 // loop_body
      %v688 = vld [vmem:[%s686] sm:%s679]
      %689 = vst [vmem:[%s687] sm:%s679] %v688
    $region260: #{forward.1} parent=254 // loop_footer
      %s685 = sadd.s32 1, %s681
    $region261: #{forward.1} parent=254 // loop_footer_branch
      %680 = sbr.rel target = $region257
    $region262: #{forward.1} parent=254 // loop_exit
      _
  $region255: #{forward.1} parent=0 // pred_fallthru
    _
  // Predicated region
  $region278: #{forward.1} parent=0 // pred_check
    _
  $region279: #{forward.1} parent=0 // pred_check_branch
    %721 = sbr.rel (0) target = $region281
  $region280: #{forward.1} parent=0 // pred_region
    %722 = vsyncadd %s669, 768
  $region281: #{forward.1} parent=0 // pred_fallthru
    _
  %s723 = scalar_lea.vmem %s23, 1392
  %s724 = scalar_lea.sflag [#allocation4], 8
  %p726 = scmp.lt.u32.totalorder 48, 8
  %p727 = pneg %p726
  // Predicated region
  $region282: #{forward.1} parent=0 // pred_check
    _
  $region283: #{forward.1} parent=0 // pred_check_branch
    %729 = sbr.rel (%p726) target = $region285
  $region284: #{forward.1} parent=0 // pred_region
    %s745 = sand.u32 48, 7
    %p746 = scmp.eq.s32.totalorder %s745, 0
    // Predicated region
    $region297: #{forward.1} parent=284 // pred_check
      %p747 = pneg %p746
    $region298: #{forward.1} parent=284 // pred_check_branch
      %749 = sbr.rel (%p747) target = $region300
    $region299: #{forward.1} parent=284 // pred_region
      loop: start=0, step=1, limit=1
      $region301: #{forward.1} parent=299 // loop_pre_header
        _
      $region302: #{forward.1} parent=299 // loop_header
        %s751 = sphi 0, %s755
        %p752 = scmp.ge.s32.totalorder %s751, 1
        %s756 = sphi %s10, %s10
        %s757 = sphi %s723, %s723
      $region303: #{forward.1} parent=299 // loop_header_branch
        %754 = sbr.rel (%p752) target = $region307
      $region304: #{forward.1} parent=299 // loop_body
        %v758 = vld [vmem:[%s756] sm:$0xff]
        %759 = vst [vmem:[%s757] sm:$0xff] %v758
        %v760 = vld [vmem:[%s756 + $0x8] sm:$0xff]
        %761 = vst [vmem:[%s757 + $0x8] sm:$0xff] %v760
        %v762 = vld [vmem:[%s756 + $0x10] sm:$0xff]
        %763 = vst [vmem:[%s757 + $0x10] sm:$0xff] %v762
        %v764 = vld [vmem:[%s756 + $0x18] sm:$0xff]
        %765 = vst [vmem:[%s757 + $0x18] sm:$0xff] %v764
        %v766 = vld [vmem:[%s756 + $0x20] sm:$0xff]
        %767 = vst [vmem:[%s757 + $0x20] sm:$0xff] %v766
        %v768 = vld [vmem:[%s756 + $0x28] sm:$0xff]
        %769 = vst [vmem:[%s757 + $0x28] sm:$0xff] %v768
      $region305: #{forward.1} parent=299 // loop_footer
        %s755 = sadd.s32 1, %s751
      $region306: #{forward.1} parent=299 // loop_footer_branch
        %750 = sbr.rel target = $region302
      $region307: #{forward.1} parent=299 // loop_exit
        _
    $region300: #{forward.1} parent=284 // pred_fallthru
      _
    %p770 = pneg %p746
    // Predicated region
    $region308: #{forward.1} parent=284 // pred_check
      _
    $region309: #{forward.1} parent=284 // pred_check_branch
      %772 = sbr.rel (%p746) target = $region311
    $region310: #{forward.1} parent=284 // pred_region
      %s773 = sand.u32 48, 7
    $region311: #{forward.1} parent=284 // pred_fallthru
      _
  $region285: #{forward.1} parent=0 // pred_fallthru
    _
  // Predicated region
  $region286: #{forward.1} parent=0 // pred_check
    %p730 = pneg %p726
  $region287: #{forward.1} parent=0 // pred_check_branch
    %732 = sbr.rel (%p730) target = $region289
  $region288: #{forward.1} parent=0 // pred_region
    %s733 = sshll.u32 1, 48
    %s734 = ssub.s32 %s733, 1
    loop: start=0, step=1, limit=1
    $region290: #{forward.1} parent=288 // loop_pre_header
      _
    $region291: #{forward.1} parent=288 // loop_header
      %s736 = sphi 0, %s740
      %p737 = scmp.ge.s32.totalorder %s736, 1
      %s741 = sphi %s10, %s10
      %s742 = sphi %s723, %s723
    $region292: #{forward.1} parent=288 // loop_header_branch
      %739 = sbr.rel (%p737) target = $region296
    $region293: #{forward.1} parent=288 // loop_body
      %v743 = vld [vmem:[%s741] sm:%s734]
      %744 = vst [vmem:[%s742] sm:%s734] %v743
    $region294: #{forward.1} parent=288 // loop_footer
      %s740 = sadd.s32 1, %s736
    $region295: #{forward.1} parent=288 // loop_footer_branch
      %735 = sbr.rel target = $region291
    $region296: #{forward.1} parent=288 // loop_exit
      _
  $region289: #{forward.1} parent=0 // pred_fallthru
    _
  // Predicated region
  $region312: #{forward.1} parent=0 // pred_check
    _
  $region313: #{forward.1} parent=0 // pred_check_branch
    %776 = sbr.rel (0) target = $region315
  $region314: #{forward.1} parent=0 // pred_region
    %777 = vsyncadd %s724, 768
  $region315: #{forward.1} parent=0 // pred_fallthru
    _
  %s778 = scalar_lea.vmem %s23, 1440
  %s779 = scalar_lea.sflag [#allocation4], 9
  %p781 = scmp.lt.u32.totalorder 48, 8
  %p782 = pneg %p781
  // Predicated region
  $region316: #{forward.1} parent=0 // pred_check
    _
  $region317: #{forward.1} parent=0 // pred_check_branch
    %784 = sbr.rel (%p781) target = $region319
  $region318: #{forward.1} parent=0 // pred_region
    %s800 = sand.u32 48, 7
    %p801 = scmp.eq.s32.totalorder %s800, 0
    // Predicated region
    $region331: #{forward.1} parent=318 // pred_check
      %p802 = pneg %p801
    $region332: #{forward.1} parent=318 // pred_check_branch
      %804 = sbr.rel (%p802) target = $region334
    $region333: #{forward.1} parent=318 // pred_region
      loop: start=0, step=1, limit=1
      $region335: #{forward.1} parent=333 // loop_pre_header
        _
      $region336: #{forward.1} parent=333 // loop_header
        %s806 = sphi 0, %s810
        %p807 = scmp.ge.s32.totalorder %s806, 1
        %s811 = sphi %s11, %s11
        %s812 = sphi %s778, %s778
      $region337: #{forward.1} parent=333 // loop_header_branch
        %809 = sbr.rel (%p807) target = $region341
      $region338: #{forward.1} parent=333 // loop_body
        %v813 = vld [vmem:[%s811] sm:$0xff]
        %814 = vst [vmem:[%s812] sm:$0xff] %v813
        %v815 = vld [vmem:[%s811 + $0x8] sm:$0xff]
        %816 = vst [vmem:[%s812 + $0x8] sm:$0xff] %v815
        %v817 = vld [vmem:[%s811 + $0x10] sm:$0xff]
        %818 = vst [vmem:[%s812 + $0x10] sm:$0xff] %v817
        %v819 = vld [vmem:[%s811 + $0x18] sm:$0xff]
        %820 = vst [vmem:[%s812 + $0x18] sm:$0xff] %v819
        %v821 = vld [vmem:[%s811 + $0x20] sm:$0xff]
        %822 = vst [vmem:[%s812 + $0x20] sm:$0xff] %v821
        %v823 = vld [vmem:[%s811 + $0x28] sm:$0xff]
        %824 = vst [vmem:[%s812 + $0x28] sm:$0xff] %v823
      $region339: #{forward.1} parent=333 // loop_footer
        %s810 = sadd.s32 1, %s806
      $region340: #{forward.1} parent=333 // loop_footer_branch
        %805 = sbr.rel target = $region336
      $region341: #{forward.1} parent=333 // loop_exit
        _
    $region334: #{forward.1} parent=318 // pred_fallthru
      _
    %p825 = pneg %p801
    // Predicated region
    $region342: #{forward.1} parent=318 // pred_check
      _
    $region343: #{forward.1} parent=318 // pred_check_branch
      %827 = sbr.rel (%p801) target = $region345
    $region344: #{forward.1} parent=318 // pred_region
      %s828 = sand.u32 48, 7
    $region345: #{forward.1} parent=318 // pred_fallthru
      _
  $region319: #{forward.1} parent=0 // pred_fallthru
    _
  // Predicated region
  $region320: #{forward.1} parent=0 // pred_check
    %p785 = pneg %p781
  $region321: #{forward.1} parent=0 // pred_check_branch
    %787 = sbr.rel (%p785) target = $region323
  $region322: #{forward.1} parent=0 // pred_region
    %s788 = sshll.u32 1, 48
    %s789 = ssub.s32 %s788, 1
    loop: start=0, step=1, limit=1
    $region324: #{forward.1} parent=322 // loop_pre_header
      _
    $region325: #{forward.1} parent=322 // loop_header
      %s791 = sphi 0, %s795
      %p792 = scmp.ge.s32.totalorder %s791, 1
      %s796 = sphi %s11, %s11
      %s797 = sphi %s778, %s778
    $region326: #{forward.1} parent=322 // loop_header_branch
      %794 = sbr.rel (%p792) target = $region330
    $region327: #{forward.1} parent=322 // loop_body
      %v798 = vld [vmem:[%s796] sm:%s789]
      %799 = vst [vmem:[%s797] sm:%s789] %v798
    $region328: #{forward.1} parent=322 // loop_footer
      %s795 = sadd.s32 1, %s791
    $region329: #{forward.1} parent=322 // loop_footer_branch
      %790 = sbr.rel target = $region325
    $region330: #{forward.1} parent=322 // loop_exit
      _
  $region323: #{forward.1} parent=0 // pred_fallthru
    _
  // Predicated region
  $region346: #{forward.1} parent=0 // pred_check
    _
  $region347: #{forward.1} parent=0 // pred_check_branch
    %831 = sbr.rel (0) target = $region349
  $region348: #{forward.1} parent=0 // pred_region
    %832 = vsyncadd %s779, 768
  $region349: #{forward.1} parent=0 // pred_fallthru
    _
  %s833 = scalar_lea.vmem %s23, 1488
  %s834 = scalar_lea.sflag [#allocation4], 10
  %p836 = scmp.lt.u32.totalorder 48, 8
  %p837 = pneg %p836
  // Predicated region
  $region350: #{forward.1} parent=0 // pred_check
    _
  $region351: #{forward.1} parent=0 // pred_check_branch
    %839 = sbr.rel (%p836) target = $region353
  $region352: #{forward.1} parent=0 // pred_region
    %s855 = sand.u32 48, 7
    %p856 = scmp.eq.s32.totalorder %s855, 0
    // Predicated region
    $region365: #{forward.1} parent=352 // pred_check
      %p857 = pneg %p856
    $region366: #{forward.1} parent=352 // pred_check_branch
      %859 = sbr.rel (%p857) target = $region368
    $region367: #{forward.1} parent=352 // pred_region
      loop: start=0, step=1, limit=1
      $region369: #{forward.1} parent=367 // loop_pre_header
        _
      $region370: #{forward.1} parent=367 // loop_header
        %s861 = sphi 0, %s865
        %p862 = scmp.ge.s32.totalorder %s861, 1
        %s866 = sphi %s12, %s12
        %s867 = sphi %s833, %s833
      $region371: #{forward.1} parent=367 // loop_header_branch
        %864 = sbr.rel (%p862) target = $region375
      $region372: #{forward.1} parent=367 // loop_body
        %v868 = vld [vmem:[%s866] sm:$0xff]
        %869 = vst [vmem:[%s867] sm:$0xff] %v868
        %v870 = vld [vmem:[%s866 + $0x8] sm:$0xff]
        %871 = vst [vmem:[%s867 + $0x8] sm:$0xff] %v870
        %v872 = vld [vmem:[%s866 + $0x10] sm:$0xff]
        %873 = vst [vmem:[%s867 + $0x10] sm:$0xff] %v872
        %v874 = vld [vmem:[%s866 + $0x18] sm:$0xff]
        %875 = vst [vmem:[%s867 + $0x18] sm:$0xff] %v874
        %v876 = vld [vmem:[%s866 + $0x20] sm:$0xff]
        %877 = vst [vmem:[%s867 + $0x20] sm:$0xff] %v876
        %v878 = vld [vmem:[%s866 + $0x28] sm:$0xff]
        %879 = vst [vmem:[%s867 + $0x28] sm:$0xff] %v878
      $region373: #{forward.1} parent=367 // loop_footer
        %s865 = sadd.s32 1, %s861
      $region374: #{forward.1} parent=367 // loop_footer_branch
        %860 = sbr.rel target = $region370
      $region375: #{forward.1} parent=367 // loop_exit
        _
    $region368: #{forward.1} parent=352 // pred_fallthru
      _
    %p880 = pneg %p856
    // Predicated region
    $region376: #{forward.1} parent=352 // pred_check
      _
    $region377: #{forward.1} parent=352 // pred_check_branch
      %882 = sbr.rel (%p856) target = $region379
    $region378: #{forward.1} parent=352 // pred_region
      %s883 = sand.u32 48, 7
    $region379: #{forward.1} parent=352 // pred_fallthru
      _
  $region353: #{forward.1} parent=0 // pred_fallthru
    _
  // Predicated region
  $region354: #{forward.1} parent=0 // pred_check
    %p840 = pneg %p836
  $region355: #{forward.1} parent=0 // pred_check_branch
    %842 = sbr.rel (%p840) target = $region357
  $region356: #{forward.1} parent=0 // pred_region
    %s843 = sshll.u32 1, 48
    %s844 = ssub.s32 %s843, 1
    loop: start=0, step=1, limit=1
    $region358: #{forward.1} parent=356 // loop_pre_header
      _
    $region359: #{forward.1} parent=356 // loop_header
      %s846 = sphi 0, %s850
      %p847 = scmp.ge.s32.totalorder %s846, 1
      %s851 = sphi %s12, %s12
      %s852 = sphi %s833, %s833
    $region360: #{forward.1} parent=356 // loop_header_branch
      %849 = sbr.rel (%p847) target = $region364
    $region361: #{forward.1} parent=356 // loop_body
      %v853 = vld [vmem:[%s851] sm:%s844]
      %854 = vst [vmem:[%s852] sm:%s844] %v853
    $region362: #{forward.1} parent=356 // loop_footer
      %s850 = sadd.s32 1, %s846
    $region363: #{forward.1} parent=356 // loop_footer_branch
      %845 = sbr.rel target = $region359
    $region364: #{forward.1} parent=356 // loop_exit
      _
  $region357: #{forward.1} parent=0 // pred_fallthru
    _
  // Predicated region
  $region380: #{forward.1} parent=0 // pred_check
    _
  $region381: #{forward.1} parent=0 // pred_check_branch
    %886 = sbr.rel (0) target = $region383
  $region382: #{forward.1} parent=0 // pred_region
    %887 = vsyncadd %s834, 768
  $region383: #{forward.1} parent=0 // pred_fallthru
    _
  %s888 = scalar_lea.vmem %s23, 1536
  %s889 = scalar_lea.sflag [#allocation4], 11
  %p891 = scmp.lt.u32.totalorder 48, 8
  %p892 = pneg %p891
  // Predicated region
  $region384: #{forward.1} parent=0 // pred_check
    _
  $region385: #{forward.1} parent=0 // pred_check_branch
    %894 = sbr.rel (%p891) target = $region387
  $region386: #{forward.1} parent=0 // pred_region
    %s910 = sand.u32 48, 7
    %p911 = scmp.eq.s32.totalorder %s910, 0
    // Predicated region
    $region399: #{forward.1} parent=386 // pred_check
      %p912 = pneg %p911
    $region400: #{forward.1} parent=386 // pred_check_branch
      %914 = sbr.rel (%p912) target = $region402
    $region401: #{forward.1} parent=386 // pred_region
      loop: start=0, step=1, limit=1
      $region403: #{forward.1} parent=401 // loop_pre_header
        _
      $region404: #{forward.1} parent=401 // loop_header
        %s916 = sphi 0, %s920
        %p917 = scmp.ge.s32.totalorder %s916, 1
        %s921 = sphi %s13, %s13
        %s922 = sphi %s888, %s888
      $region405: #{forward.1} parent=401 // loop_header_branch
        %919 = sbr.rel (%p917) target = $region409
      $region406: #{forward.1} parent=401 // loop_body
        %v923 = vld [vmem:[%s921] sm:$0xff]
        %924 = vst [vmem:[%s922] sm:$0xff] %v923
        %v925 = vld [vmem:[%s921 + $0x8] sm:$0xff]
        %926 = vst [vmem:[%s922 + $0x8] sm:$0xff] %v925
        %v927 = vld [vmem:[%s921 + $0x10] sm:$0xff]
        %928 = vst [vmem:[%s922 + $0x10] sm:$0xff] %v927
        %v929 = vld [vmem:[%s921 + $0x18] sm:$0xff]
        %930 = vst [vmem:[%s922 + $0x18] sm:$0xff] %v929
        %v931 = vld [vmem:[%s921 + $0x20] sm:$0xff]
        %932 = vst [vmem:[%s922 + $0x20] sm:$0xff] %v931
        %v933 = vld [vmem:[%s921 + $0x28] sm:$0xff]
        %934 = vst [vmem:[%s922 + $0x28] sm:$0xff] %v933
      $region407: #{forward.1} parent=401 // loop_footer
        %s920 = sadd.s32 1, %s916
      $region408: #{forward.1} parent=401 // loop_footer_branch
        %915 = sbr.rel target = $region404
      $region409: #{forward.1} parent=401 // loop_exit
        _
    $region402: #{forward.1} parent=386 // pred_fallthru
      _
    %p935 = pneg %p911
    // Predicated region
    $region410: #{forward.1} parent=386 // pred_check
      _
    $region411: #{forward.1} parent=386 // pred_check_branch
      %937 = sbr.rel (%p911) target = $region413
    $region412: #{forward.1} parent=386 // pred_region
      %s938 = sand.u32 48, 7
    $region413: #{forward.1} parent=386 // pred_fallthru
      _
  $region387: #{forward.1} parent=0 // pred_fallthru
    _
  // Predicated region
  $region388: #{forward.1} parent=0 // pred_check
    %p895 = pneg %p891
  $region389: #{forward.1} parent=0 // pred_check_branch
    %897 = sbr.rel (%p895) target = $region391
  $region390: #{forward.1} parent=0 // pred_region
    %s898 = sshll.u32 1, 48
    %s899 = ssub.s32 %s898, 1
    loop: start=0, step=1, limit=1
    $region392: #{forward.1} parent=390 // loop_pre_header
      _
    $region393: #{forward.1} parent=390 // loop_header
      %s901 = sphi 0, %s905
      %p902 = scmp.ge.s32.totalorder %s901, 1
      %s906 = sphi %s13, %s13
      %s907 = sphi %s888, %s888
    $region394: #{forward.1} parent=390 // loop_header_branch
      %904 = sbr.rel (%p902) target = $region398
    $region395: #{forward.1} parent=390 // loop_body
      %v908 = vld [vmem:[%s906] sm:%s899]
      %909 = vst [vmem:[%s907] sm:%s899] %v908
    $region396: #{forward.1} parent=390 // loop_footer
      %s905 = sadd.s32 1, %s901
    $region397: #{forward.1} parent=390 // loop_footer_branch
      %900 = sbr.rel target = $region393
    $region398: #{forward.1} parent=390 // loop_exit
      _
  $region391: #{forward.1} parent=0 // pred_fallthru
    _
  // Predicated region
  $region414: #{forward.1} parent=0 // pred_check
    _
  $region415: #{forward.1} parent=0 // pred_check_branch
    %941 = sbr.rel (0) target = $region417
  $region416: #{forward.1} parent=0 // pred_region
    %942 = vsyncadd %s889, 768
  $region417: #{forward.1} parent=0 // pred_fallthru
    _
  %s943 = scalar_lea.vmem %s23, 1584
  %s944 = scalar_lea.sflag [#allocation4], 12
  %p946 = scmp.lt.u32.totalorder 48, 8
  %p947 = pneg %p946
  // Predicated region
  $region418: #{forward.1} parent=0 // pred_check
    _
  $region419: #{forward.1} parent=0 // pred_check_branch
    %949 = sbr.rel (%p946) target = $region421
  $region420: #{forward.1} parent=0 // pred_region
    %s965 = sand.u32 48, 7
    %p966 = scmp.eq.s32.totalorder %s965, 0
    // Predicated region
    $region433: #{forward.1} parent=420 // pred_check
      %p967 = pneg %p966
    $region434: #{forward.1} parent=420 // pred_check_branch
      %969 = sbr.rel (%p967) target = $region436
    $region435: #{forward.1} parent=420 // pred_region
      loop: start=0, step=1, limit=1
      $region437: #{forward.1} parent=435 // loop_pre_header
        _
      $region438: #{forward.1} parent=435 // loop_header
        %s971 = sphi 0, %s975
        %p972 = scmp.ge.s32.totalorder %s971, 1
        %s976 = sphi %s14, %s14
        %s977 = sphi %s943, %s943
      $region439: #{forward.1} parent=435 // loop_header_branch
        %974 = sbr.rel (%p972) target = $region443
      $region440: #{forward.1} parent=435 // loop_body
        %v978 = vld [vmem:[%s976] sm:$0xff]
        %979 = vst [vmem:[%s977] sm:$0xff] %v978
        %v980 = vld [vmem:[%s976 + $0x8] sm:$0xff]
        %981 = vst [vmem:[%s977 + $0x8] sm:$0xff] %v980
        %v982 = vld [vmem:[%s976 + $0x10] sm:$0xff]
        %983 = vst [vmem:[%s977 + $0x10] sm:$0xff] %v982
        %v984 = vld [vmem:[%s976 + $0x18] sm:$0xff]
        %985 = vst [vmem:[%s977 + $0x18] sm:$0xff] %v984
        %v986 = vld [vmem:[%s976 + $0x20] sm:$0xff]
        %987 = vst [vmem:[%s977 + $0x20] sm:$0xff] %v986
        %v988 = vld [vmem:[%s976 + $0x28] sm:$0xff]
        %989 = vst [vmem:[%s977 + $0x28] sm:$0xff] %v988
      $region441: #{forward.1} parent=435 // loop_footer
        %s975 = sadd.s32 1, %s971
      $region442: #{forward.1} parent=435 // loop_footer_branch
        %970 = sbr.rel target = $region438
      $region443: #{forward.1} parent=435 // loop_exit
        _
    $region436: #{forward.1} parent=420 // pred_fallthru
      _
    %p990 = pneg %p966
    // Predicated region
    $region444: #{forward.1} parent=420 // pred_check
      _
    $region445: #{forward.1} parent=420 // pred_check_branch
      %992 = sbr.rel (%p966) target = $region447
    $region446: #{forward.1} parent=420 // pred_region
      %s993 = sand.u32 48, 7
    $region447: #{forward.1} parent=420 // pred_fallthru
      _
  $region421: #{forward.1} parent=0 // pred_fallthru
    _
  // Predicated region
  $region422: #{forward.1} parent=0 // pred_check
    %p950 = pneg %p946
  $region423: #{forward.1} parent=0 // pred_check_branch
    %952 = sbr.rel (%p950) target = $region425
  $region424: #{forward.1} parent=0 // pred_region
    %s953 = sshll.u32 1, 48
    %s954 = ssub.s32 %s953, 1
    loop: start=0, step=1, limit=1
    $region426: #{forward.1} parent=424 // loop_pre_header
      _
    $region427: #{forward.1} parent=424 // loop_header
      %s956 = sphi 0, %s960
      %p957 = scmp.ge.s32.totalorder %s956, 1
      %s961 = sphi %s14, %s14
      %s962 = sphi %s943, %s943
    $region428: #{forward.1} parent=424 // loop_header_branch
      %959 = sbr.rel (%p957) target = $region432
    $region429: #{forward.1} parent=424 // loop_body
      %v963 = vld [vmem:[%s961] sm:%s954]
      %964 = vst [vmem:[%s962] sm:%s954] %v963
    $region430: #{forward.1} parent=424 // loop_footer
      %s960 = sadd.s32 1, %s956
    $region431: #{forward.1} parent=424 // loop_footer_branch
      %955 = sbr.rel target = $region427
    $region432: #{forward.1} parent=424 // loop_exit
      _
  $region425: #{forward.1} parent=0 // pred_fallthru
    _
  // Predicated region
  $region448: #{forward.1} parent=0 // pred_check
    _
  $region449: #{forward.1} parent=0 // pred_check_branch
    %996 = sbr.rel (0) target = $region451
  $region450: #{forward.1} parent=0 // pred_region
    %997 = vsyncadd %s944, 768
  $region451: #{forward.1} parent=0 // pred_fallthru
    _
  %s998 = scalar_lea.vmem %s23, 1632
  %s999 = scalar_lea.sflag [#allocation4], 13
  %p1001 = scmp.lt.u32.totalorder 48, 8
  %p1002 = pneg %p1001
  // Predicated region
  $region452: #{forward.1} parent=0 // pred_check
    _
  $region453: #{forward.1} parent=0 // pred_check_branch
    %1004 = sbr.rel (%p1001) target = $region455
  $region454: #{forward.1} parent=0 // pred_region
    %s1020 = sand.u32 48, 7
    %p1021 = scmp.eq.s32.totalorder %s1020, 0
    // Predicated region
    $region467: #{forward.1} parent=454 // pred_check
      %p1022 = pneg %p1021
    $region468: #{forward.1} parent=454 // pred_check_branch
      %1024 = sbr.rel (%p1022) target = $region470
    $region469: #{forward.1} parent=454 // pred_region
      loop: start=0, step=1, limit=1
      $region471: #{forward.1} parent=469 // loop_pre_header
        _
      $region472: #{forward.1} parent=469 // loop_header
        %s1026 = sphi 0, %s1030
        %p1027 = scmp.ge.s32.totalorder %s1026, 1
        %s1031 = sphi %s15, %s15
        %s1032 = sphi %s998, %s998
      $region473: #{forward.1} parent=469 // loop_header_branch
        %1029 = sbr.rel (%p1027) target = $region477
      $region474: #{forward.1} parent=469 // loop_body
        %v1033 = vld [vmem:[%s1031] sm:$0xff]
        %1034 = vst [vmem:[%s1032] sm:$0xff] %v1033
        %v1035 = vld [vmem:[%s1031 + $0x8] sm:$0xff]
        %1036 = vst [vmem:[%s1032 + $0x8] sm:$0xff] %v1035
        %v1037 = vld [vmem:[%s1031 + $0x10] sm:$0xff]
        %1038 = vst [vmem:[%s1032 + $0x10] sm:$0xff] %v1037
        %v1039 = vld [vmem:[%s1031 + $0x18] sm:$0xff]
        %1040 = vst [vmem:[%s1032 + $0x18] sm:$0xff] %v1039
        %v1041 = vld [vmem:[%s1031 + $0x20] sm:$0xff]
        %1042 = vst [vmem:[%s1032 + $0x20] sm:$0xff] %v1041
        %v1043 = vld [vmem:[%s1031 + $0x28] sm:$0xff]
        %1044 = vst [vmem:[%s1032 + $0x28] sm:$0xff] %v1043
      $region475: #{forward.1} parent=469 // loop_footer
        %s1030 = sadd.s32 1, %s1026
      $region476: #{forward.1} parent=469 // loop_footer_branch
        %1025 = sbr.rel target = $region472
      $region477: #{forward.1} parent=469 // loop_exit
        _
    $region470: #{forward.1} parent=454 // pred_fallthru
      _
    %p1045 = pneg %p1021
    // Predicated region
    $region478: #{forward.1} parent=454 // pred_check
      _
    $region479: #{forward.1} parent=454 // pred_check_branch
      %1047 = sbr.rel (%p1021) target = $region481
    $region480: #{forward.1} parent=454 // pred_region
      %s1048 = sand.u32 48, 7
    $region481: #{forward.1} parent=454 // pred_fallthru
      _
  $region455: #{forward.1} parent=0 // pred_fallthru
    _
  // Predicated region
  $region456: #{forward.1} parent=0 // pred_check
    %p1005 = pneg %p1001
  $region457: #{forward.1} parent=0 // pred_check_branch
    %1007 = sbr.rel (%p1005) target = $region459
  $region458: #{forward.1} parent=0 // pred_region
    %s1008 = sshll.u32 1, 48
    %s1009 = ssub.s32 %s1008, 1
    loop: start=0, step=1, limit=1
    $region460: #{forward.1} parent=458 // loop_pre_header
      _
    $region461: #{forward.1} parent=458 // loop_header
      %s1011 = sphi 0, %s1015
      %p1012 = scmp.ge.s32.totalorder %s1011, 1
      %s1016 = sphi %s15, %s15
      %s1017 = sphi %s998, %s998
    $region462: #{forward.1} parent=458 // loop_header_branch
      %1014 = sbr.rel (%p1012) target = $region466
    $region463: #{forward.1} parent=458 // loop_body
      %v1018 = vld [vmem:[%s1016] sm:%s1009]
      %1019 = vst [vmem:[%s1017] sm:%s1009] %v1018
    $region464: #{forward.1} parent=458 // loop_footer
      %s1015 = sadd.s32 1, %s1011
    $region465: #{forward.1} parent=458 // loop_footer_branch
      %1010 = sbr.rel target = $region461
    $region466: #{forward.1} parent=458 // loop_exit
      _
  $region459: #{forward.1} parent=0 // pred_fallthru
    _
  // Predicated region
  $region482: #{forward.1} parent=0 // pred_check
    _
  $region483: #{forward.1} parent=0 // pred_check_branch
    %1051 = sbr.rel (0) target = $region485
  $region484: #{forward.1} parent=0 // pred_region
    %1052 = vsyncadd %s999, 768
  $region485: #{forward.1} parent=0 // pred_fallthru
    _
  %s1053 = scalar_lea.vmem %s23, 1680
  %s1054 = scalar_lea.sflag [#allocation4], 14
  %p1056 = scmp.lt.u32.totalorder 48, 8
  %p1057 = pneg %p1056
  // Predicated region
  $region486: #{forward.1} parent=0 // pred_check
    _
  $region487: #{forward.1} parent=0 // pred_check_branch
    %1059 = sbr.rel (%p1056) target = $region489
  $region488: #{forward.1} parent=0 // pred_region
    %s1075 = sand.u32 48, 7
    %p1076 = scmp.eq.s32.totalorder %s1075, 0
    // Predicated region
    $region501: #{forward.1} parent=488 // pred_check
      %p1077 = pneg %p1076
    $region502: #{forward.1} parent=488 // pred_check_branch
      %1079 = sbr.rel (%p1077) target = $region504
    $region503: #{forward.1} parent=488 // pred_region
      loop: start=0, step=1, limit=1
      $region505: #{forward.1} parent=503 // loop_pre_header
        _
      $region506: #{forward.1} parent=503 // loop_header
        %s1081 = sphi 0, %s1085
        %p1082 = scmp.ge.s32.totalorder %s1081, 1
        %s1086 = sphi %s16, %s16
        %s1087 = sphi %s1053, %s1053
      $region507: #{forward.1} parent=503 // loop_header_branch
        %1084 = sbr.rel (%p1082) target = $region511
      $region508: #{forward.1} parent=503 // loop_body
        %v1088 = vld [vmem:[%s1086] sm:$0xff]
        %1089 = vst [vmem:[%s1087] sm:$0xff] %v1088
        %v1090 = vld [vmem:[%s1086 + $0x8] sm:$0xff]
        %1091 = vst [vmem:[%s1087 + $0x8] sm:$0xff] %v1090
        %v1092 = vld [vmem:[%s1086 + $0x10] sm:$0xff]
        %1093 = vst [vmem:[%s1087 + $0x10] sm:$0xff] %v1092
        %v1094 = vld [vmem:[%s1086 + $0x18] sm:$0xff]
        %1095 = vst [vmem:[%s1087 + $0x18] sm:$0xff] %v1094
        %v1096 = vld [vmem:[%s1086 + $0x20] sm:$0xff]
        %1097 = vst [vmem:[%s1087 + $0x20] sm:$0xff] %v1096
        %v1098 = vld [vmem:[%s1086 + $0x28] sm:$0xff]
        %1099 = vst [vmem:[%s1087 + $0x28] sm:$0xff] %v1098
      $region509: #{forward.1} parent=503 // loop_footer
        %s1085 = sadd.s32 1, %s1081
      $region510: #{forward.1} parent=503 // loop_footer_branch
        %1080 = sbr.rel target = $region506
      $region511: #{forward.1} parent=503 // loop_exit
        _
    $region504: #{forward.1} parent=488 // pred_fallthru
      _
    %p1100 = pneg %p1076
    // Predicated region
    $region512: #{forward.1} parent=488 // pred_check
      _
    $region513: #{forward.1} parent=488 // pred_check_branch
      %1102 = sbr.rel (%p1076) target = $region515
    $region514: #{forward.1} parent=488 // pred_region
      %s1103 = sand.u32 48, 7
    $region515: #{forward.1} parent=488 // pred_fallthru
      _
  $region489: #{forward.1} parent=0 // pred_fallthru
    _
  // Predicated region
  $region490: #{forward.1} parent=0 // pred_check
    %p1060 = pneg %p1056
  $region491: #{forward.1} parent=0 // pred_check_branch
    %1062 = sbr.rel (%p1060) target = $region493
  $region492: #{forward.1} parent=0 // pred_region
    %s1063 = sshll.u32 1, 48
    %s1064 = ssub.s32 %s1063, 1
    loop: start=0, step=1, limit=1
    $region494: #{forward.1} parent=492 // loop_pre_header
      _
    $region495: #{forward.1} parent=492 // loop_header
      %s1066 = sphi 0, %s1070
      %p1067 = scmp.ge.s32.totalorder %s1066, 1
      %s1071 = sphi %s16, %s16
      %s1072 = sphi %s1053, %s1053
    $region496: #{forward.1} parent=492 // loop_header_branch
      %1069 = sbr.rel (%p1067) target = $region500
    $region497: #{forward.1} parent=492 // loop_body
      %v1073 = vld [vmem:[%s1071] sm:%s1064]
      %1074 = vst [vmem:[%s1072] sm:%s1064] %v1073
    $region498: #{forward.1} parent=492 // loop_footer
      %s1070 = sadd.s32 1, %s1066
    $region499: #{forward.1} parent=492 // loop_footer_branch
      %1065 = sbr.rel target = $region495
    $region500: #{forward.1} parent=492 // loop_exit
      _
  $region493: #{forward.1} parent=0 // pred_fallthru
    _
  // Predicated region
  $region516: #{forward.1} parent=0 // pred_check
    _
  $region517: #{forward.1} parent=0 // pred_check_branch
    %1106 = sbr.rel (0) target = $region519
  $region518: #{forward.1} parent=0 // pred_region
    %1107 = vsyncadd %s1054, 768
  $region519: #{forward.1} parent=0 // pred_fallthru
    _
  %s1108 = scalar_lea.vmem %s23, 1728
  %s1109 = scalar_lea.sflag [#allocation4], 15
  %p1111 = scmp.lt.u32.totalorder 48, 8
  %p1112 = pneg %p1111
  // Predicated region
  $region520: #{forward.1} parent=0 // pred_check
    _
  $region521: #{forward.1} parent=0 // pred_check_branch
    %1114 = sbr.rel (%p1111) target = $region523
  $region522: #{forward.1} parent=0 // pred_region
    %s1130 = sand.u32 48, 7
    %p1131 = scmp.eq.s32.totalorder %s1130, 0
    // Predicated region
    $region535: #{forward.1} parent=522 // pred_check
      %p1132 = pneg %p1131
    $region536: #{forward.1} parent=522 // pred_check_branch
      %1134 = sbr.rel (%p1132) target = $region538
    $region537: #{forward.1} parent=522 // pred_region
      loop: start=0, step=1, limit=1
      $region539: #{forward.1} parent=537 // loop_pre_header
        _
      $region540: #{forward.1} parent=537 // loop_header
        %s1136 = sphi 0, %s1140
        %p1137 = scmp.ge.s32.totalorder %s1136, 1
        %s1141 = sphi %s17, %s17
        %s1142 = sphi %s1108, %s1108
      $region541: #{forward.1} parent=537 // loop_header_branch
        %1139 = sbr.rel (%p1137) target = $region545
      $region542: #{forward.1} parent=537 // loop_body
        %v1143 = vld [vmem:[%s1141] sm:$0xff]
        %1144 = vst [vmem:[%s1142] sm:$0xff] %v1143
        %v1145 = vld [vmem:[%s1141 + $0x8] sm:$0xff]
        %1146 = vst [vmem:[%s1142 + $0x8] sm:$0xff] %v1145
        %v1147 = vld [vmem:[%s1141 + $0x10] sm:$0xff]
        %1148 = vst [vmem:[%s1142 + $0x10] sm:$0xff] %v1147
        %v1149 = vld [vmem:[%s1141 + $0x18] sm:$0xff]
        %1150 = vst [vmem:[%s1142 + $0x18] sm:$0xff] %v1149
        %v1151 = vld [vmem:[%s1141 + $0x20] sm:$0xff]
        %1152 = vst [vmem:[%s1142 + $0x20] sm:$0xff] %v1151
        %v1153 = vld [vmem:[%s1141 + $0x28] sm:$0xff]
        %1154 = vst [vmem:[%s1142 + $0x28] sm:$0xff] %v1153
      $region543: #{forward.1} parent=537 // loop_footer
        %s1140 = sadd.s32 1, %s1136
      $region544: #{forward.1} parent=537 // loop_footer_branch
        %1135 = sbr.rel target = $region540
      $region545: #{forward.1} parent=537 // loop_exit
        _
    $region538: #{forward.1} parent=522 // pred_fallthru
      _
    %p1155 = pneg %p1131
    // Predicated region
    $region546: #{forward.1} parent=522 // pred_check
      _
    $region547: #{forward.1} parent=522 // pred_check_branch
      %1157 = sbr.rel (%p1131) target = $region549
    $region548: #{forward.1} parent=522 // pred_region
      %s1158 = sand.u32 48, 7
    $region549: #{forward.1} parent=522 // pred_fallthru
      _
  $region523: #{forward.1} parent=0 // pred_fallthru
    _
  // Predicated region
  $region524: #{forward.1} parent=0 // pred_check
    %p1115 = pneg %p1111
  $region525: #{forward.1} parent=0 // pred_check_branch
    %1117 = sbr.rel (%p1115) target = $region527
  $region526: #{forward.1} parent=0 // pred_region
    %s1118 = sshll.u32 1, 48
    %s1119 = ssub.s32 %s1118, 1
    loop: start=0, step=1, limit=1
    $region528: #{forward.1} parent=526 // loop_pre_header
      _
    $region529: #{forward.1} parent=526 // loop_header
      %s1121 = sphi 0, %s1125
      %p1122 = scmp.ge.s32.totalorder %s1121, 1
      %s1126 = sphi %s17, %s17
      %s1127 = sphi %s1108, %s1108
    $region530: #{forward.1} parent=526 // loop_header_branch
      %1124 = sbr.rel (%p1122) target = $region534
    $region531: #{forward.1} parent=526 // loop_body
      %v1128 = vld [vmem:[%s1126] sm:%s1119]
      %1129 = vst [vmem:[%s1127] sm:%s1119] %v1128
    $region532: #{forward.1} parent=526 // loop_footer
      %s1125 = sadd.s32 1, %s1121
    $region533: #{forward.1} parent=526 // loop_footer_branch
      %1120 = sbr.rel target = $region529
    $region534: #{forward.1} parent=526 // loop_exit
      _
  $region527: #{forward.1} parent=0 // pred_fallthru
    _
  // Predicated region
  $region550: #{forward.1} parent=0 // pred_check
    _
  $region551: #{forward.1} parent=0 // pred_check_branch
    %1161 = sbr.rel (0) target = $region553
  $region552: #{forward.1} parent=0 // pred_region
    %1162 = vsyncadd %s1109, 768
  $region553: #{forward.1} parent=0 // pred_fallthru
    _
  %s1163 = scalar_lea.vmem %s23, 1776
  %s1164 = scalar_lea.sflag [#allocation4], 16
  %p1166 = scmp.lt.u32.totalorder 48, 8
  %p1167 = pneg %p1166
  // Predicated region
  $region554: #{forward.1} parent=0 // pred_check
    _
  $region555: #{forward.1} parent=0 // pred_check_branch
    %1169 = sbr.rel (%p1166) target = $region557
  $region556: #{forward.1} parent=0 // pred_region
    %s1185 = sand.u32 48, 7
    %p1186 = scmp.eq.s32.totalorder %s1185, 0
    // Predicated region
    $region569: #{forward.1} parent=556 // pred_check
      %p1187 = pneg %p1186
    $region570: #{forward.1} parent=556 // pred_check_branch
      %1189 = sbr.rel (%p1187) target = $region572
    $region571: #{forward.1} parent=556 // pred_region
      loop: start=0, step=1, limit=1
      $region573: #{forward.1} parent=571 // loop_pre_header
        _
      $region574: #{forward.1} parent=571 // loop_header
        %s1191 = sphi 0, %s1195
        %p1192 = scmp.ge.s32.totalorder %s1191, 1
        %s1196 = sphi %s18, %s18
        %s1197 = sphi %s1163, %s1163
      $region575: #{forward.1} parent=571 // loop_header_branch
        %1194 = sbr.rel (%p1192) target = $region579
      $region576: #{forward.1} parent=571 // loop_body
        %v1198 = vld [vmem:[%s1196] sm:$0xff]
        %1199 = vst [vmem:[%s1197] sm:$0xff] %v1198
        %v1200 = vld [vmem:[%s1196 + $0x8] sm:$0xff]
        %1201 = vst [vmem:[%s1197 + $0x8] sm:$0xff] %v1200
        %v1202 = vld [vmem:[%s1196 + $0x10] sm:$0xff]
        %1203 = vst [vmem:[%s1197 + $0x10] sm:$0xff] %v1202
        %v1204 = vld [vmem:[%s1196 + $0x18] sm:$0xff]
        %1205 = vst [vmem:[%s1197 + $0x18] sm:$0xff] %v1204
        %v1206 = vld [vmem:[%s1196 + $0x20] sm:$0xff]
        %1207 = vst [vmem:[%s1197 + $0x20] sm:$0xff] %v1206
        %v1208 = vld [vmem:[%s1196 + $0x28] sm:$0xff]
        %1209 = vst [vmem:[%s1197 + $0x28] sm:$0xff] %v1208
      $region577: #{forward.1} parent=571 // loop_footer
        %s1195 = sadd.s32 1, %s1191
      $region578: #{forward.1} parent=571 // loop_footer_branch
        %1190 = sbr.rel target = $region574
      $region579: #{forward.1} parent=571 // loop_exit
        _
    $region572: #{forward.1} parent=556 // pred_fallthru
      _
    %p1210 = pneg %p1186
    // Predicated region
    $region580: #{forward.1} parent=556 // pred_check
      _
    $region581: #{forward.1} parent=556 // pred_check_branch
      %1212 = sbr.rel (%p1186) target = $region583
    $region582: #{forward.1} parent=556 // pred_region
      %s1213 = sand.u32 48, 7
    $region583: #{forward.1} parent=556 // pred_fallthru
      _
  $region557: #{forward.1} parent=0 // pred_fallthru
    _
  // Predicated region
  $region558: #{forward.1} parent=0 // pred_check
    %p1170 = pneg %p1166
  $region559: #{forward.1} parent=0 // pred_check_branch
    %1172 = sbr.rel (%p1170) target = $region561
  $region560: #{forward.1} parent=0 // pred_region
    %s1173 = sshll.u32 1, 48
    %s1174 = ssub.s32 %s1173, 1
    loop: start=0, step=1, limit=1
    $region562: #{forward.1} parent=560 // loop_pre_header
      _
    $region563: #{forward.1} parent=560 // loop_header
      %s1176 = sphi 0, %s1180
      %p1177 = scmp.ge.s32.totalorder %s1176, 1
      %s1181 = sphi %s18, %s18
      %s1182 = sphi %s1163, %s1163
    $region564: #{forward.1} parent=560 // loop_header_branch
      %1179 = sbr.rel (%p1177) target = $region568
    $region565: #{forward.1} parent=560 // loop_body
      %v1183 = vld [vmem:[%s1181] sm:%s1174]
      %1184 = vst [vmem:[%s1182] sm:%s1174] %v1183
    $region566: #{forward.1} parent=560 // loop_footer
      %s1180 = sadd.s32 1, %s1176
    $region567: #{forward.1} parent=560 // loop_footer_branch
      %1175 = sbr.rel target = $region563
    $region568: #{forward.1} parent=560 // loop_exit
      _
  $region561: #{forward.1} parent=0 // pred_fallthru
    _
  // Predicated region
  $region584: #{forward.1} parent=0 // pred_check
    _
  $region585: #{forward.1} parent=0 // pred_check_branch
    %1216 = sbr.rel (0) target = $region587
  $region586: #{forward.1} parent=0 // pred_region
    %1217 = vsyncadd %s1164, 768
  $region587: #{forward.1} parent=0 // pred_fallthru
    _
  %s1218 = scalar_lea.vmem %s23, 1824
  %s1219 = scalar_lea.sflag [#allocation4], 17
  %p1221 = scmp.lt.u32.totalorder 48, 8
  %p1222 = pneg %p1221
  // Predicated region
  $region588: #{forward.1} parent=0 // pred_check
    _
  $region589: #{forward.1} parent=0 // pred_check_branch
    %1224 = sbr.rel (%p1221) target = $region591
  $region590: #{forward.1} parent=0 // pred_region
    %s1240 = sand.u32 48, 7
    %p1241 = scmp.eq.s32.totalorder %s1240, 0
    // Predicated region
    $region603: #{forward.1} parent=590 // pred_check
      %p1242 = pneg %p1241
    $region604: #{forward.1} parent=590 // pred_check_branch
      %1244 = sbr.rel (%p1242) target = $region606
    $region605: #{forward.1} parent=590 // pred_region
      loop: start=0, step=1, limit=1
      $region607: #{forward.1} parent=605 // loop_pre_header
        _
      $region608: #{forward.1} parent=605 // loop_header
        %s1246 = sphi 0, %s1250
        %p1247 = scmp.ge.s32.totalorder %s1246, 1
        %s1251 = sphi %s19, %s19
        %s1252 = sphi %s1218, %s1218
      $region609: #{forward.1} parent=605 // loop_header_branch
        %1249 = sbr.rel (%p1247) target = $region613
      $region610: #{forward.1} parent=605 // loop_body
        %v1253 = vld [vmem:[%s1251] sm:$0xff]
        %1254 = vst [vmem:[%s1252] sm:$0xff] %v1253
        %v1255 = vld [vmem:[%s1251 + $0x8] sm:$0xff]
        %1256 = vst [vmem:[%s1252 + $0x8] sm:$0xff] %v1255
        %v1257 = vld [vmem:[%s1251 + $0x10] sm:$0xff]
        %1258 = vst [vmem:[%s1252 + $0x10] sm:$0xff] %v1257
        %v1259 = vld [vmem:[%s1251 + $0x18] sm:$0xff]
        %1260 = vst [vmem:[%s1252 + $0x18] sm:$0xff] %v1259
        %v1261 = vld [vmem:[%s1251 + $0x20] sm:$0xff]
        %1262 = vst [vmem:[%s1252 + $0x20] sm:$0xff] %v1261
        %v1263 = vld [vmem:[%s1251 + $0x28] sm:$0xff]
        %1264 = vst [vmem:[%s1252 + $0x28] sm:$0xff] %v1263
      $region611: #{forward.1} parent=605 // loop_footer
        %s1250 = sadd.s32 1, %s1246
      $region612: #{forward.1} parent=605 // loop_footer_branch
        %1245 = sbr.rel target = $region608
      $region613: #{forward.1} parent=605 // loop_exit
        _
    $region606: #{forward.1} parent=590 // pred_fallthru
      _
    %p1265 = pneg %p1241
    // Predicated region
    $region614: #{forward.1} parent=590 // pred_check
      _
    $region615: #{forward.1} parent=590 // pred_check_branch
      %1267 = sbr.rel (%p1241) target = $region617
    $region616: #{forward.1} parent=590 // pred_region
      %s1268 = sand.u32 48, 7
    $region617: #{forward.1} parent=590 // pred_fallthru
      _
  $region591: #{forward.1} parent=0 // pred_fallthru
    _
  // Predicated region
  $region592: #{forward.1} parent=0 // pred_check
    %p1225 = pneg %p1221
  $region593: #{forward.1} parent=0 // pred_check_branch
    %1227 = sbr.rel (%p1225) target = $region595
  $region594: #{forward.1} parent=0 // pred_region
    %s1228 = sshll.u32 1, 48
    %s1229 = ssub.s32 %s1228, 1
    loop: start=0, step=1, limit=1
    $region596: #{forward.1} parent=594 // loop_pre_header
      _
    $region597: #{forward.1} parent=594 // loop_header
      %s1231 = sphi 0, %s1235
      %p1232 = scmp.ge.s32.totalorder %s1231, 1
      %s1236 = sphi %s19, %s19
      %s1237 = sphi %s1218, %s1218
    $region598: #{forward.1} parent=594 // loop_header_branch
      %1234 = sbr.rel (%p1232) target = $region602
    $region599: #{forward.1} parent=594 // loop_body
      %v1238 = vld [vmem:[%s1236] sm:%s1229]
      %1239 = vst [vmem:[%s1237] sm:%s1229] %v1238
    $region600: #{forward.1} parent=594 // loop_footer
      %s1235 = sadd.s32 1, %s1231
    $region601: #{forward.1} parent=594 // loop_footer_branch
      %1230 = sbr.rel target = $region597
    $region602: #{forward.1} parent=594 // loop_exit
      _
  $region595: #{forward.1} parent=0 // pred_fallthru
    _
  // Predicated region
  $region618: #{forward.1} parent=0 // pred_check
    _
  $region619: #{forward.1} parent=0 // pred_check_branch
    %1271 = sbr.rel (0) target = $region621
  $region620: #{forward.1} parent=0 // pred_region
    %1272 = vsyncadd %s1219, 768
  $region621: #{forward.1} parent=0 // pred_fallthru
    _
  %s1273 = scalar_lea.vmem %s23, 1872
  %s1274 = scalar_lea.sflag [#allocation4], 18
  %p1276 = scmp.lt.u32.totalorder 48, 8
  %p1277 = pneg %p1276
  // Predicated region
  $region622: #{forward.1} parent=0 // pred_check
    _
  $region623: #{forward.1} parent=0 // pred_check_branch
    %1279 = sbr.rel (%p1276) target = $region625
  $region624: #{forward.1} parent=0 // pred_region
    %s1295 = sand.u32 48, 7
    %p1296 = scmp.eq.s32.totalorder %s1295, 0
    // Predicated region
    $region637: #{forward.1} parent=624 // pred_check
      %p1297 = pneg %p1296
    $region638: #{forward.1} parent=624 // pred_check_branch
      %1299 = sbr.rel (%p1297) target = $region640
    $region639: #{forward.1} parent=624 // pred_region
      loop: start=0, step=1, limit=1
      $region641: #{forward.1} parent=639 // loop_pre_header
        _
      $region642: #{forward.1} parent=639 // loop_header
        %s1301 = sphi 0, %s1305
        %p1302 = scmp.ge.s32.totalorder %s1301, 1
        %s1306 = sphi %s20, %s20
        %s1307 = sphi %s1273, %s1273
      $region643: #{forward.1} parent=639 // loop_header_branch
        %1304 = sbr.rel (%p1302) target = $region647
      $region644: #{forward.1} parent=639 // loop_body
        %v1308 = vld [vmem:[%s1306] sm:$0xff]
        %1309 = vst [vmem:[%s1307] sm:$0xff] %v1308
        %v1310 = vld [vmem:[%s1306 + $0x8] sm:$0xff]
        %1311 = vst [vmem:[%s1307 + $0x8] sm:$0xff] %v1310
        %v1312 = vld [vmem:[%s1306 + $0x10] sm:$0xff]
        %1313 = vst [vmem:[%s1307 + $0x10] sm:$0xff] %v1312
        %v1314 = vld [vmem:[%s1306 + $0x18] sm:$0xff]
        %1315 = vst [vmem:[%s1307 + $0x18] sm:$0xff] %v1314
        %v1316 = vld [vmem:[%s1306 + $0x20] sm:$0xff]
        %1317 = vst [vmem:[%s1307 + $0x20] sm:$0xff] %v1316
        %v1318 = vld [vmem:[%s1306 + $0x28] sm:$0xff]
        %1319 = vst [vmem:[%s1307 + $0x28] sm:$0xff] %v1318
      $region645: #{forward.1} parent=639 // loop_footer
        %s1305 = sadd.s32 1, %s1301
      $region646: #{forward.1} parent=639 // loop_footer_branch
        %1300 = sbr.rel target = $region642
      $region647: #{forward.1} parent=639 // loop_exit
        _
    $region640: #{forward.1} parent=624 // pred_fallthru
      _
    %p1320 = pneg %p1296
    // Predicated region
    $region648: #{forward.1} parent=624 // pred_check
      _
    $region649: #{forward.1} parent=624 // pred_check_branch
      %1322 = sbr.rel (%p1296) target = $region651
    $region650: #{forward.1} parent=624 // pred_region
      %s1323 = sand.u32 48, 7
    $region651: #{forward.1} parent=624 // pred_fallthru
      _
  $region625: #{forward.1} parent=0 // pred_fallthru
    _
  // Predicated region
  $region626: #{forward.1} parent=0 // pred_check
    %p1280 = pneg %p1276
  $region627: #{forward.1} parent=0 // pred_check_branch
    %1282 = sbr.rel (%p1280) target = $region629
  $region628: #{forward.1} parent=0 // pred_region
    %s1283 = sshll.u32 1, 48
    %s1284 = ssub.s32 %s1283, 1
    loop: start=0, step=1, limit=1
    $region630: #{forward.1} parent=628 // loop_pre_header
      _
    $region631: #{forward.1} parent=628 // loop_header
      %s1286 = sphi 0, %s1290
      %p1287 = scmp.ge.s32.totalorder %s1286, 1
      %s1291 = sphi %s20, %s20
      %s1292 = sphi %s1273, %s1273
    $region632: #{forward.1} parent=628 // loop_header_branch
      %1289 = sbr.rel (%p1287) target = $region636
    $region633: #{forward.1} parent=628 // loop_body
      %v1293 = vld [vmem:[%s1291] sm:%s1284]
      %1294 = vst [vmem:[%s1292] sm:%s1284] %v1293
    $region634: #{forward.1} parent=628 // loop_footer
      %s1290 = sadd.s32 1, %s1286
    $region635: #{forward.1} parent=628 // loop_footer_branch
      %1285 = sbr.rel target = $region631
    $region636: #{forward.1} parent=628 // loop_exit
      _
  $region629: #{forward.1} parent=0 // pred_fallthru
    _
  // Predicated region
  $region652: #{forward.1} parent=0 // pred_check
    _
  $region653: #{forward.1} parent=0 // pred_check_branch
    %1326 = sbr.rel (0) target = $region655
  $region654: #{forward.1} parent=0 // pred_region
    %1327 = vsyncadd %s1274, 768
  $region655: #{forward.1} parent=0 // pred_fallthru
    _
  %s1328 = scalar_lea.vmem %s23, 1920
  %s1329 = scalar_lea.sflag [#allocation4], 19
  %p1331 = scmp.lt.u32.totalorder 48, 8
  %p1332 = pneg %p1331
  // Predicated region
  $region656: #{forward.1} parent=0 // pred_check
    _
  $region657: #{forward.1} parent=0 // pred_check_branch
    %1334 = sbr.rel (%p1331) target = $region659
  $region658: #{forward.1} parent=0 // pred_region
    %s1350 = sand.u32 48, 7
    %p1351 = scmp.eq.s32.totalorder %s1350, 0
    // Predicated region
    $region671: #{forward.1} parent=658 // pred_check
      %p1352 = pneg %p1351
    $region672: #{forward.1} parent=658 // pred_check_branch
      %1354 = sbr.rel (%p1352) target = $region674
    $region673: #{forward.1} parent=658 // pred_region
      loop: start=0, step=1, limit=1
      $region675: #{forward.1} parent=673 // loop_pre_header
        _
      $region676: #{forward.1} parent=673 // loop_header
        %s1356 = sphi 0, %s1360
        %p1357 = scmp.ge.s32.totalorder %s1356, 1
        %s1361 = sphi %s21, %s21
        %s1362 = sphi %s1328, %s1328
      $region677: #{forward.1} parent=673 // loop_header_branch
        %1359 = sbr.rel (%p1357) target = $region681
      $region678: #{forward.1} parent=673 // loop_body
        %v1363 = vld [vmem:[%s1361] sm:$0xff]
        %1364 = vst [vmem:[%s1362] sm:$0xff] %v1363
        %v1365 = vld [vmem:[%s1361 + $0x8] sm:$0xff]
        %1366 = vst [vmem:[%s1362 + $0x8] sm:$0xff] %v1365
        %v1367 = vld [vmem:[%s1361 + $0x10] sm:$0xff]
        %1368 = vst [vmem:[%s1362 + $0x10] sm:$0xff] %v1367
        %v1369 = vld [vmem:[%s1361 + $0x18] sm:$0xff]
        %1370 = vst [vmem:[%s1362 + $0x18] sm:$0xff] %v1369
        %v1371 = vld [vmem:[%s1361 + $0x20] sm:$0xff]
        %1372 = vst [vmem:[%s1362 + $0x20] sm:$0xff] %v1371
        %v1373 = vld [vmem:[%s1361 + $0x28] sm:$0xff]
        %1374 = vst [vmem:[%s1362 + $0x28] sm:$0xff] %v1373
      $region679: #{forward.1} parent=673 // loop_footer
        %s1360 = sadd.s32 1, %s1356
      $region680: #{forward.1} parent=673 // loop_footer_branch
        %1355 = sbr.rel target = $region676
      $region681: #{forward.1} parent=673 // loop_exit
        _
    $region674: #{forward.1} parent=658 // pred_fallthru
      _
    %p1375 = pneg %p1351
    // Predicated region
    $region682: #{forward.1} parent=658 // pred_check
      _
    $region683: #{forward.1} parent=658 // pred_check_branch
      %1377 = sbr.rel (%p1351) target = $region685
    $region684: #{forward.1} parent=658 // pred_region
      %s1378 = sand.u32 48, 7
    $region685: #{forward.1} parent=658 // pred_fallthru
      _
  $region659: #{forward.1} parent=0 // pred_fallthru
    _
  // Predicated region
  $region660: #{forward.1} parent=0 // pred_check
    %p1335 = pneg %p1331
  $region661: #{forward.1} parent=0 // pred_check_branch
    %1337 = sbr.rel (%p1335) target = $region663
  $region662: #{forward.1} parent=0 // pred_region
    %s1338 = sshll.u32 1, 48
    %s1339 = ssub.s32 %s1338, 1
    loop: start=0, step=1, limit=1
    $region664: #{forward.1} parent=662 // loop_pre_header
      _
    $region665: #{forward.1} parent=662 // loop_header
      %s1341 = sphi 0, %s1345
      %p1342 = scmp.ge.s32.totalorder %s1341, 1
      %s1346 = sphi %s21, %s21
      %s1347 = sphi %s1328, %s1328
    $region666: #{forward.1} parent=662 // loop_header_branch
      %1344 = sbr.rel (%p1342) target = $region670
    $region667: #{forward.1} parent=662 // loop_body
      %v1348 = vld [vmem:[%s1346] sm:%s1339]
      %1349 = vst [vmem:[%s1347] sm:%s1339] %v1348
    $region668: #{forward.1} parent=662 // loop_footer
      %s1345 = sadd.s32 1, %s1341
    $region669: #{forward.1} parent=662 // loop_footer_branch
      %1340 = sbr.rel target = $region665
    $region670: #{forward.1} parent=662 // loop_exit
      _
  $region663: #{forward.1} parent=0 // pred_fallthru
    _
  // Predicated region
  $region686: #{forward.1} parent=0 // pred_check
    _
  $region687: #{forward.1} parent=0 // pred_check_branch
    %1381 = sbr.rel (0) target = $region689
  $region688: #{forward.1} parent=0 // pred_region
    %1382 = vsyncadd %s1329, 768
  $region689: #{forward.1} parent=0 // pred_fallthru
    _
  %s1383 = scalar_lea.vmem %s23, 2016
  %s1384 = scalar_lea.sflag [#allocation4], 20
  %p1386 = scmp.lt.u32.totalorder 48, 8
  %p1387 = pneg %p1386
  // Predicated region
  $region690: #{forward.1} parent=0 // pred_check
    _
  $region691: #{forward.1} parent=0 // pred_check_branch
    %1389 = sbr.rel (%p1386) target = $region693
  $region692: #{forward.1} parent=0 // pred_region
    %s1405 = sand.u32 48, 7
    %p1406 = scmp.eq.s32.totalorder %s1405, 0
    // Predicated region
    $region705: #{forward.1} parent=692 // pred_check
      %p1407 = pneg %p1406
    $region706: #{forward.1} parent=692 // pred_check_branch
      %1409 = sbr.rel (%p1407) target = $region708
    $region707: #{forward.1} parent=692 // pred_region
      loop: start=0, step=1, limit=1
      $region709: #{forward.1} parent=707 // loop_pre_header
        _
      $region710: #{forward.1} parent=707 // loop_header
        %s1411 = sphi 0, %s1415
        %p1412 = scmp.ge.s32.totalorder %s1411, 1
        %s1416 = sphi %s22, %s22
        %s1417 = sphi %s1383, %s1383
      $region711: #{forward.1} parent=707 // loop_header_branch
        %1414 = sbr.rel (%p1412) target = $region715
      $region712: #{forward.1} parent=707 // loop_body
        %v1418 = vld [vmem:[%s1416] sm:$0xff]
        %1419 = vst [vmem:[%s1417] sm:$0xff] %v1418
        %v1420 = vld [vmem:[%s1416 + $0x8] sm:$0xff]
        %1421 = vst [vmem:[%s1417 + $0x8] sm:$0xff] %v1420
        %v1422 = vld [vmem:[%s1416 + $0x10] sm:$0xff]
        %1423 = vst [vmem:[%s1417 + $0x10] sm:$0xff] %v1422
        %v1424 = vld [vmem:[%s1416 + $0x18] sm:$0xff]
        %1425 = vst [vmem:[%s1417 + $0x18] sm:$0xff] %v1424
        %v1426 = vld [vmem:[%s1416 + $0x20] sm:$0xff]
        %1427 = vst [vmem:[%s1417 + $0x20] sm:$0xff] %v1426
        %v1428 = vld [vmem:[%s1416 + $0x28] sm:$0xff]
        %1429 = vst [vmem:[%s1417 + $0x28] sm:$0xff] %v1428
      $region713: #{forward.1} parent=707 // loop_footer
        %s1415 = sadd.s32 1, %s1411
      $region714: #{forward.1} parent=707 // loop_footer_branch
        %1410 = sbr.rel target = $region710
      $region715: #{forward.1} parent=707 // loop_exit
        _
    $region708: #{forward.1} parent=692 // pred_fallthru
      _
    %p1430 = pneg %p1406
    // Predicated region
    $region716: #{forward.1} parent=692 // pred_check
      _
    $region717: #{forward.1} parent=692 // pred_check_branch
      %1432 = sbr.rel (%p1406) target = $region719
    $region718: #{forward.1} parent=692 // pred_region
      %s1433 = sand.u32 48, 7
    $region719: #{forward.1} parent=692 // pred_fallthru
      _
  $region693: #{forward.1} parent=0 // pred_fallthru
    _
  // Predicated region
  $region694: #{forward.1} parent=0 // pred_check
    %p1390 = pneg %p1386
  $region695: #{forward.1} parent=0 // pred_check_branch
    %1392 = sbr.rel (%p1390) target = $region697
  $region696: #{forward.1} parent=0 // pred_region
    %s1393 = sshll.u32 1, 48
    %s1394 = ssub.s32 %s1393, 1
    loop: start=0, step=1, limit=1
    $region698: #{forward.1} parent=696 // loop_pre_header
      _
    $region699: #{forward.1} parent=696 // loop_header
      %s1396 = sphi 0, %s1400
      %p1397 = scmp.ge.s32.totalorder %s1396, 1
      %s1401 = sphi %s22, %s22
      %s1402 = sphi %s1383, %s1383
    $region700: #{forward.1} parent=696 // loop_header_branch
      %1399 = sbr.rel (%p1397) target = $region704
    $region701: #{forward.1} parent=696 // loop_body
      %v1403 = vld [vmem:[%s1401] sm:%s1394]
      %1404 = vst [vmem:[%s1402] sm:%s1394] %v1403
    $region702: #{forward.1} parent=696 // loop_footer
      %s1400 = sadd.s32 1, %s1396
    $region703: #{forward.1} parent=696 // loop_footer_branch
      %1395 = sbr.rel target = $region699
    $region704: #{forward.1} parent=696 // loop_exit
      _
  $region697: #{forward.1} parent=0 // pred_fallthru
    _
  // Predicated region
  $region720: #{forward.1} parent=0 // pred_check
    _
  $region721: #{forward.1} parent=0 // pred_check_branch
    %1436 = sbr.rel (0) target = $region723
  $region722: #{forward.1} parent=0 // pred_region
    %1437 = vsyncadd %s1384, 768
  $region723: #{forward.1} parent=0 // pred_fallthru
    _
  %1438 = vst [vmem:[#allocation2] sm:$0xf] 0
  %1439 = vst [vmem:[#allocation2 + $0x4] sm:$0xf] 0
  %1440 = vst [vmem:[#allocation2 + $0x8] sm:$0xf] 0
  %1441 = vst [vmem:[#allocation2 + $0xc] sm:$0xf] 0
  %1442 = vst [vmem:[#allocation2 + $0x10] sm:$0xf] 0
  %1443 = vst [vmem:[#allocation2 + $0x14] sm:$0xf] 0
  %1444 = vst [vmem:[#allocation2 + $0x18] sm:$0xf] 0
  %1445 = vst [vmem:[#allocation2 + $0x1c] sm:$0xf] 0
  %1446 = vst [vmem:[#allocation2 + $0x20] sm:$0xf] 0
  %1447 = vst [vmem:[#allocation2 + $0x24] sm:$0xf] 0
  %1448 = vst [vmem:[#allocation2 + $0x28] sm:$0xf] 0
  %1449 = vst [vmem:[#allocation2 + $0x2c] sm:$0xf] 0
  %1450 = vst [vmem:[#allocation2 + $0x30] sm:$0xf] 0
  %1451 = vst [vmem:[#allocation2 + $0x34] sm:$0xf] 0
  %1452 = vst [vmem:[#allocation2 + $0x38] sm:$0xf] 0
  %1453 = vst [vmem:[#allocation2 + $0x3c] sm:$0xf] 0
  %1454 = vst [vmem:[#allocation2 + $0x40] sm:$0xf] 0
  %1455 = vst [vmem:[#allocation2 + $0x44] sm:$0xf] 0
  %1456 = vst [vmem:[#allocation2 + $0x48] sm:$0xf] 0
  %1457 = vst [vmem:[#allocation2 + $0x4c] sm:$0xf] 0
  %1458 = vst [vmem:[#allocation2 + $0x50] sm:$0xf] 0
  %1459 = vst [vmem:[#allocation2 + $0x54] sm:$0xf] 0
  %1460 = vst [vmem:[#allocation2 + $0x58] sm:$0xf] 0
  %1461 = vst [vmem:[#allocation2 + $0x5c] sm:$0xf] 0
  %v1462 = vld [vmem:[%s0] sm:$0xf]
  %v1463 = vld [vmem:[%s0 + $0x4] sm:$0xf]
  %v1464 = vld [vmem:[%s0 + $0x8] sm:$0xf]
  %v1465 = vld [vmem:[%s0 + $0xc] sm:$0xf]
  %v1466 = vld [vmem:[%s0 + $0x10] sm:$0xf]
  %v1467 = vld [vmem:[%s0 + $0x14] sm:$0xf]
  %v1468 = vld [vmem:[%s0 + $0x18] sm:$0xf]
  %v1469 = vld [vmem:[%s0 + $0x1c] sm:$0xf]
  %v1470 = vld [vmem:[%s0 + $0x20] sm:$0xf]
  %v1471 = vld [vmem:[%s0 + $0x24] sm:$0xf]
  %v1472 = vld [vmem:[%s0 + $0x28] sm:$0xf]
  %v1473 = vld [vmem:[%s0 + $0x2c] sm:$0xf]
  %v1474 = vld [vmem:[%s0 + $0x30] sm:$0xf]
  %v1475 = vld [vmem:[%s0 + $0x34] sm:$0xf]
  %v1476 = vld [vmem:[%s0 + $0x38] sm:$0xf]
  %v1477 = vld [vmem:[%s0 + $0x3c] sm:$0xf]
  %v1478 = vld [vmem:[%s0 + $0x40] sm:$0xf]
  %v1479 = vld [vmem:[%s0 + $0x44] sm:$0xf]
  %v1480 = vld [vmem:[%s0 + $0x48] sm:$0xf]
  %v1481 = vld [vmem:[%s0 + $0x4c] sm:$0xf]
  %v1482 = vld [vmem:[%s0 + $0x50] sm:$0xf]
  %v1483 = vld [vmem:[%s0 + $0x54] sm:$0xf]
  %v1484 = vld [vmem:[%s0 + $0x58] sm:$0xf]
  %v1485 = vld [vmem:[%s0 + $0x5c] sm:$0xf]
  %1510 = vrot.lane.b32.xlu0 %v1462, 9
  %v1511 = vpop.permute.xlu0 %1510
  %1512 = vrot.lane.b32.xlu0 %v1463, 9
  %v1513 = vpop.permute.xlu0 %1512
  %1514 = vrot.lane.b32.xlu0 %v1464, 9
  %v1515 = vpop.permute.xlu0 %1514
  %1516 = vrot.lane.b32.xlu0 %v1465, 9
  %v1517 = vpop.permute.xlu0 %1516
  %1518 = vrot.lane.b32.xlu0 %v1466, 9
  %v1519 = vpop.permute.xlu0 %1518
  %1520 = vrot.lane.b32.xlu0 %v1467, 9
  %v1521 = vpop.permute.xlu0 %1520
  %1522 = vrot.lane.b32.xlu0 %v1468, 9
  %v1523 = vpop.permute.xlu0 %1522
  %1524 = vrot.lane.b32.xlu0 %v1469, 9
  %v1525 = vpop.permute.xlu0 %1524
  %1526 = vrot.lane.b32.xlu0 %v1470, 9
  %v1527 = vpop.permute.xlu0 %1526
  %1528 = vrot.lane.b32.xlu0 %v1471, 9
  %v1529 = vpop.permute.xlu0 %1528
  %1530 = vrot.lane.b32.xlu0 %v1472, 9
  %v1531 = vpop.permute.xlu0 %1530
  %1532 = vrot.lane.b32.xlu0 %v1473, 9
  %v1533 = vpop.permute.xlu0 %1532
  %1534 = vrot.lane.b32.xlu0 %v1474, 9
  %v1535 = vpop.permute.xlu0 %1534
  %1536 = vrot.lane.b32.xlu0 %v1475, 9
  %v1537 = vpop.permute.xlu0 %1536
  %1538 = vrot.lane.b32.xlu0 %v1476, 9
  %v1539 = vpop.permute.xlu0 %1538
  %1540 = vrot.lane.b32.xlu0 %v1477, 9
  %v1541 = vpop.permute.xlu0 %1540
  %1542 = vrot.lane.b32.xlu0 %v1478, 9
  %v1543 = vpop.permute.xlu0 %1542
  %1544 = vrot.lane.b32.xlu0 %v1479, 9
  %v1545 = vpop.permute.xlu0 %1544
  %1546 = vrot.lane.b32.xlu0 %v1480, 9
  %v1547 = vpop.permute.xlu0 %1546
  %1548 = vrot.lane.b32.xlu0 %v1481, 9
  %v1549 = vpop.permute.xlu0 %1548
  %1550 = vrot.lane.b32.xlu0 %v1482, 9
  %v1551 = vpop.permute.xlu0 %1550
  %1552 = vrot.lane.b32.xlu0 %v1483, 9
  %v1553 = vpop.permute.xlu0 %1552
  %1554 = vrot.lane.b32.xlu0 %v1484, 9
  %v1555 = vpop.permute.xlu0 %1554
  %1556 = vrot.lane.b32.xlu0 %v1485, 9
  %v1557 = vpop.permute.xlu0 %1556
  %vm1582 = vcmask 584776
  %1583 = vst.msk [vmem:[#allocation2] sm:$0xf] %vm1582, %v1511
  %1584 = vst.msk [vmem:[#allocation2 + $0x4] sm:$0xf] %vm1582, %v1513
  %1585 = vst.msk [vmem:[#allocation2 + $0x8] sm:$0xf] %vm1582, %v1515
  %1586 = vst.msk [vmem:[#allocation2 + $0xc] sm:$0xf] %vm1582, %v1517
  %1587 = vst.msk [vmem:[#allocation2 + $0x10] sm:$0xf] %vm1582, %v1519
  %1588 = vst.msk [vmem:[#allocation2 + $0x14] sm:$0xf] %vm1582, %v1521
  %1589 = vst.msk [vmem:[#allocation2 + $0x18] sm:$0xf] %vm1582, %v1523
  %1590 = vst.msk [vmem:[#allocation2 + $0x1c] sm:$0xf] %vm1582, %v1525
  %1591 = vst.msk [vmem:[#allocation2 + $0x20] sm:$0xf] %vm1582, %v1527
  %1592 = vst.msk [vmem:[#allocation2 + $0x24] sm:$0xf] %vm1582, %v1529
  %1593 = vst.msk [vmem:[#allocation2 + $0x28] sm:$0xf] %vm1582, %v1531
  %1594 = vst.msk [vmem:[#allocation2 + $0x2c] sm:$0xf] %vm1582, %v1533
  %1595 = vst.msk [vmem:[#allocation2 + $0x30] sm:$0xf] %vm1582, %v1535
  %1596 = vst.msk [vmem:[#allocation2 + $0x34] sm:$0xf] %vm1582, %v1537
  %1597 = vst.msk [vmem:[#allocation2 + $0x38] sm:$0xf] %vm1582, %v1539
  %1598 = vst.msk [vmem:[#allocation2 + $0x3c] sm:$0xf] %vm1582, %v1541
  %1599 = vst.msk [vmem:[#allocation2 + $0x40] sm:$0xf] %vm1582, %v1543
  %1600 = vst.msk [vmem:[#allocation2 + $0x44] sm:$0xf] %vm1582, %v1545
  %1601 = vst.msk [vmem:[#allocation2 + $0x48] sm:$0xf] %vm1582, %v1547
  %1602 = vst.msk [vmem:[#allocation2 + $0x4c] sm:$0xf] %vm1582, %v1549
  %1603 = vst.msk [vmem:[#allocation2 + $0x50] sm:$0xf] %vm1582, %v1551
  %1604 = vst.msk [vmem:[#allocation2 + $0x54] sm:$0xf] %vm1582, %v1553
  %1605 = vst.msk [vmem:[#allocation2 + $0x58] sm:$0xf] %vm1582, %v1555
  %1606 = vst.msk [vmem:[#allocation2 + $0x5c] sm:$0xf] %vm1582, %v1557
  %v1607 = vld [vmem:[%s1] sm:$0xff]
  %v1608 = vld [vmem:[%s1 + $0x8] sm:$0xff]
  %v1609 = vld [vmem:[%s1 + $0x10] sm:$0xff]
  %v1610 = vld [vmem:[%s1 + $0x18] sm:$0xff]
  %v1611 = vld [vmem:[%s1 + $0x20] sm:$0xff]
  %v1612 = vld [vmem:[%s1 + $0x28] sm:$0xff]
  %v1613 = vld [vmem:[%s1 + $0x30] sm:$0xff]
  %v1614 = vld [vmem:[%s1 + $0x38] sm:$0xff]
  %v1615 = vld [vmem:[%s1 + $0x40] sm:$0xff]
  %v1616 = vld [vmem:[%s1 + $0x48] sm:$0xff]
  %v1617 = vld [vmem:[%s1 + $0x50] sm:$0xff]
  %v1618 = vld [vmem:[%s1 + $0x58] sm:$0xff]
  %v1619 = vld [vmem:[%s1 + $0x60] sm:$0xff]
  %v1620 = vld [vmem:[%s1 + $0x68] sm:$0xff]
  %v1621 = vld [vmem:[%s1 + $0x70] sm:$0xff]
  %v1622 = vld [vmem:[%s1 + $0x78] sm:$0xff]
  %v1623 = vld [vmem:[%s1 + $0x80] sm:$0xff]
  %v1624 = vld [vmem:[%s1 + $0x88] sm:$0xff]
  %v1625 = vld [vmem:[%s1 + $0x90] sm:$0xff]
  %v1626 = vld [vmem:[%s1 + $0x98] sm:$0xff]
  %v1627 = vld [vmem:[%s1 + $0xa0] sm:$0xff]
  %v1628 = vld [vmem:[%s1 + $0xa8] sm:$0xff]
  %v1629 = vld [vmem:[%s1 + $0xb0] sm:$0xff]
  %v1630 = vld [vmem:[%s1 + $0xb8] sm:$0xff]
  %v1631 = vld [vmem:[%s1 + $0xc0] sm:$0xff]
  %v1632 = vld [vmem:[%s1 + $0xc8] sm:$0xff]
  %v1633 = vld [vmem:[%s1 + $0xd0] sm:$0xff]
  %v1634 = vld [vmem:[%s1 + $0xd8] sm:$0xff]
  %v1635 = vld [vmem:[%s1 + $0xe0] sm:$0xff]
  %v1636 = vld [vmem:[%s1 + $0xe8] sm:$0xff]
  %v1637 = vld [vmem:[%s1 + $0xf0] sm:$0xff]
  %v1638 = vld [vmem:[%s1 + $0xf8] sm:$0xff]
  %v1639 = vld [vmem:[%s1 + $0x100] sm:$0xff]
  %v1640 = vld [vmem:[%s1 + $0x108] sm:$0xff]
  %v1641 = vld [vmem:[%s1 + $0x110] sm:$0xff]
  %v1642 = vld [vmem:[%s1 + $0x118] sm:$0xff]
  %v1643 = vld [vmem:[%s1 + $0x120] sm:$0xff]
  %v1644 = vld [vmem:[%s1 + $0x128] sm:$0xff]
  %v1645 = vld [vmem:[%s1 + $0x130] sm:$0xff]
  %v1646 = vld [vmem:[%s1 + $0x138] sm:$0xff]
  %v1647 = vld [vmem:[%s1 + $0x140] sm:$0xff]
  %v1648 = vld [vmem:[%s1 + $0x148] sm:$0xff]
  %v1649 = vld [vmem:[%s1 + $0x150] sm:$0xff]
  %v1650 = vld [vmem:[%s1 + $0x158] sm:$0xff]
  %v1651 = vld [vmem:[%s1 + $0x160] sm:$0xff]
  %v1652 = vld [vmem:[%s1 + $0x168] sm:$0xff]
  %v1653 = vld [vmem:[%s1 + $0x170] sm:$0xff]
  %v1654 = vld [vmem:[%s1 + $0x178] sm:$0xff]
  %v1655 = vld [vmem:[%s1 + $0x180] sm:$0xff]
  %v1656 = vld [vmem:[%s1 + $0x188] sm:$0xff]
  %v1657 = vld [vmem:[%s1 + $0x190] sm:$0xff]
  %v1658 = vld [vmem:[%s1 + $0x198] sm:$0xff]
  %v1659 = vld [vmem:[%s1 + $0x1a0] sm:$0xff]
  %v1660 = vld [vmem:[%s1 + $0x1a8] sm:$0xff]
  %v1661 = vld [vmem:[#allocation2] sm:$0xf]
  %v1662 = vld [vmem:[#allocation2 + $0x4] sm:$0xf]
  %v1663 = vld [vmem:[#allocation2 + $0x8] sm:$0xf]
  %v1664 = vld [vmem:[#allocation2 + $0xc] sm:$0xf]
  %v1665 = vld [vmem:[#allocation2 + $0x10] sm:$0xf]
  %v1666 = vld [vmem:[#allocation2 + $0x14] sm:$0xf]
  %v1667 = vld [vmem:[#allocation2 + $0x18] sm:$0xf]
  %v1668 = vld [vmem:[#allocation2 + $0x1c] sm:$0xf]
  %v1669 = vld [vmem:[#allocation2 + $0x20] sm:$0xf]
  %v1670 = vld [vmem:[#allocation2 + $0x24] sm:$0xf]
  %v1671 = vld [vmem:[#allocation2 + $0x28] sm:$0xf]
  %v1672 = vld [vmem:[#allocation2 + $0x2c] sm:$0xf]
  %v1673 = vld [vmem:[#allocation2 + $0x30] sm:$0xf]
  %v1674 = vld [vmem:[#allocation2 + $0x34] sm:$0xf]
  %v1675 = vld [vmem:[#allocation2 + $0x38] sm:$0xf]
  %v1676 = vld [vmem:[#allocation2 + $0x3c] sm:$0xf]
  %v1677 = vld [vmem:[#allocation2 + $0x40] sm:$0xf]
  %v1678 = vld [vmem:[#allocation2 + $0x44] sm:$0xf]
  %v1679 = vld [vmem:[#allocation2 + $0x48] sm:$0xf]
  %v1680 = vld [vmem:[#allocation2 + $0x4c] sm:$0xf]
  %v1681 = vld [vmem:[#allocation2 + $0x50] sm:$0xf]
  %v1682 = vld [vmem:[#allocation2 + $0x54] sm:$0xf]
  %v1683 = vld [vmem:[#allocation2 + $0x58] sm:$0xf]
  %v1684 = vld [vmem:[#allocation2 + $0x5c] sm:$0xf]
  %v1739 = vunpack.c.l.b16 %v1607
  %v1740 = vunpack.c.h.b16 %v1607
  %v1741 = vunpack.c.l.b16 %v1608
  %v1742 = vunpack.c.h.b16 %v1608
  %v1743 = vunpack.c.l.b16 %v1609
  %v1744 = vunpack.c.h.b16 %v1609
  %v1745 = vunpack.c.l.b16 %v1610
  %v1746 = vunpack.c.h.b16 %v1610
  %v1747 = vunpack.c.l.b16 %v1611
  %v1748 = vunpack.c.h.b16 %v1611
  %v1749 = vunpack.c.l.b16 %v1612
  %v1750 = vunpack.c.h.b16 %v1612
  %v1751 = vunpack.c.l.b16 %v1613
  %v1752 = vunpack.c.h.b16 %v1613
  %v1753 = vunpack.c.l.b16 %v1614
  %v1754 = vunpack.c.h.b16 %v1614
  %v1755 = vunpack.c.l.b16 %v1615
  %v1756 = vunpack.c.h.b16 %v1615
  %v1757 = vunpack.c.l.b16 %v1616
  %v1758 = vunpack.c.h.b16 %v1616
  %v1759 = vunpack.c.l.b16 %v1617
  %v1760 = vunpack.c.h.b16 %v1617
  %v1761 = vunpack.c.l.b16 %v1618
  %v1762 = vunpack.c.h.b16 %v1618
  %v1763 = vunpack.c.l.b16 %v1619
  %v1764 = vunpack.c.h.b16 %v1619
  %v1765 = vunpack.c.l.b16 %v1620
  %v1766 = vunpack.c.h.b16 %v1620
  %v1767 = vunpack.c.l.b16 %v1621
  %v1768 = vunpack.c.h.b16 %v1621
  %v1769 = vunpack.c.l.b16 %v1622
  %v1770 = vunpack.c.h.b16 %v1622
  %v1771 = vunpack.c.l.b16 %v1623
  %v1772 = vunpack.c.h.b16 %v1623
  %v1773 = vunpack.c.l.b16 %v1624
  %v1774 = vunpack.c.h.b16 %v1624
  %v1775 = vunpack.c.l.b16 %v1625
  %v1776 = vunpack.c.h.b16 %v1625
  %v1777 = vunpack.c.l.b16 %v1626
  %v1778 = vunpack.c.h.b16 %v1626
  %v1779 = vunpack.c.l.b16 %v1627
  %v1780 = vunpack.c.h.b16 %v1627
  %v1781 = vunpack.c.l.b16 %v1628
  %v1782 = vunpack.c.h.b16 %v1628
  %v1783 = vunpack.c.l.b16 %v1629
  %v1784 = vunpack.c.h.b16 %v1629
  %v1785 = vunpack.c.l.b16 %v1630
  %v1786 = vunpack.c.h.b16 %v1630
  %v1787 = vunpack.c.l.b16 %v1631
  %v1788 = vunpack.c.h.b16 %v1631
  %v1789 = vunpack.c.l.b16 %v1632
  %v1790 = vunpack.c.h.b16 %v1632
  %v1791 = vunpack.c.l.b16 %v1633
  %v1792 = vunpack.c.h.b16 %v1633
  %v1793 = vunpack.c.l.b16 %v1634
  %v1794 = vunpack.c.h.b16 %v1634
  %v1795 = vunpack.c.l.b16 %v1635
  %v1796 = vunpack.c.h.b16 %v1635
  %v1797 = vunpack.c.l.b16 %v1636
  %v1798 = vunpack.c.h.b16 %v1636
  %v1799 = vunpack.c.l.b16 %v1637
  %v1800 = vunpack.c.h.b16 %v1637
  %v1801 = vunpack.c.l.b16 %v1638
  %v1802 = vunpack.c.h.b16 %v1638
  %v1803 = vunpack.c.l.b16 %v1639
  %v1804 = vunpack.c.h.b16 %v1639
  %v1805 = vunpack.c.l.b16 %v1640
  %v1806 = vunpack.c.h.b16 %v1640
  %v1807 = vunpack.c.l.b16 %v1641
  %v1808 = vunpack.c.h.b16 %v1641
  %v1809 = vunpack.c.l.b16 %v1642
  %v1810 = vunpack.c.h.b16 %v1642
  %v1811 = vunpack.c.l.b16 %v1643
  %v1812 = vunpack.c.h.b16 %v1643
  %v1813 = vunpack.c.l.b16 %v1644
  %v1814 = vunpack.c.h.b16 %v1644
  %v1815 = vunpack.c.l.b16 %v1645
  %v1816 = vunpack.c.h.b16 %v1645
  %v1817 = vunpack.c.l.b16 %v1646
  %v1818 = vunpack.c.h.b16 %v1646
  %v1819 = vunpack.c.l.b16 %v1647
  %v1820 = vunpack.c.h.b16 %v1647
  %v1821 = vunpack.c.l.b16 %v1648
  %v1822 = vunpack.c.h.b16 %v1648
  %v1823 = vunpack.c.l.b16 %v1649
  %v1824 = vunpack.c.h.b16 %v1649
  %v1825 = vunpack.c.l.b16 %v1650
  %v1826 = vunpack.c.h.b16 %v1650
  %v1827 = vunpack.c.l.b16 %v1651
  %v1828 = vunpack.c.h.b16 %v1651
  %v1829 = vunpack.c.l.b16 %v1652
  %v1830 = vunpack.c.h.b16 %v1652
  %v1831 = vunpack.c.l.b16 %v1653
  %v1832 = vunpack.c.h.b16 %v1653
  %v1833 = vunpack.c.l.b16 %v1654
  %v1834 = vunpack.c.h.b16 %v1654
  %v1835 = vunpack.c.l.b16 %v1655
  %v1836 = vunpack.c.h.b16 %v1655
  %v1837 = vunpack.c.l.b16 %v1656
  %v1838 = vunpack.c.h.b16 %v1656
  %v1839 = vunpack.c.l.b16 %v1657
  %v1840 = vunpack.c.h.b16 %v1657
  %v1841 = vunpack.c.l.b16 %v1658
  %v1842 = vunpack.c.h.b16 %v1658
  %v1843 = vunpack.c.l.b16 %v1659
  %v1844 = vunpack.c.h.b16 %v1659
  %v1845 = vunpack.c.l.b16 %v1660
  %v1846 = vunpack.c.h.b16 %v1660
  %v1847 = vpack.c.b16 %v1741, %v1739
  %v1848 = vpack.c.b16 %v1742, %v1740
  %v1849 = vpack.c.b16 %v1745, %v1743
  %v1850 = vpack.c.b16 %v1746, %v1744
  %v1851 = vpack.c.b16 %v1749, %v1747
  %v1852 = vpack.c.b16 %v1750, %v1748
  %v1853 = vpack.c.b16 %v1753, %v1751
  %v1854 = vpack.c.b16 %v1754, %v1752
  %v1855 = vpack.c.b16 %v1757, %v1755
  %v1856 = vpack.c.b16 %v1758, %v1756
  %v1857 = vpack.c.b16 %v1761, %v1759
  %v1858 = vpack.c.b16 %v1762, %v1760
  %v1859 = vpack.c.b16 %v1765, %v1763
  %v1860 = vpack.c.b16 %v1766, %v1764
  %v1861 = vpack.c.b16 %v1769, %v1767
  %v1862 = vpack.c.b16 %v1770, %v1768
  %v1863 = vpack.c.b16 %v1773, %v1771
  %v1864 = vpack.c.b16 %v1774, %v1772
  %v1865 = vpack.c.b16 %v1777, %v1775
  %v1866 = vpack.c.b16 %v1778, %v1776
  %v1867 = vpack.c.b16 %v1781, %v1779
  %v1868 = vpack.c.b16 %v1782, %v1780
  %v1869 = vpack.c.b16 %v1785, %v1783
  %v1870 = vpack.c.b16 %v1786, %v1784
  %v1871 = vpack.c.b16 %v1789, %v1787
  %v1872 = vpack.c.b16 %v1790, %v1788
  %v1873 = vpack.c.b16 %v1793, %v1791
  %v1874 = vpack.c.b16 %v1794, %v1792
  %v1875 = vpack.c.b16 %v1797, %v1795
  %v1876 = vpack.c.b16 %v1798, %v1796
  %v1877 = vpack.c.b16 %v1801, %v1799
  %v1878 = vpack.c.b16 %v1802, %v1800
  %v1879 = vpack.c.b16 %v1805, %v1803
  %v1880 = vpack.c.b16 %v1806, %v1804
  %v1881 = vpack.c.b16 %v1809, %v1807
  %v1882 = vpack.c.b16 %v1810, %v1808
  %v1883 = vpack.c.b16 %v1813, %v1811
  %v1884 = vpack.c.b16 %v1814, %v1812
  %v1885 = vpack.c.b16 %v1817, %v1815
  %v1886 = vpack.c.b16 %v1818, %v1816
  %v1887 = vpack.c.b16 %v1821, %v1819
  %v1888 = vpack.c.b16 %v1822, %v1820
  %v1889 = vpack.c.b16 %v1825, %v1823
  %v1890 = vpack.c.b16 %v1826, %v1824
  %v1891 = vpack.c.b16 %v1829, %v1827
  %v1892 = vpack.c.b16 %v1830, %v1828
  %v1893 = vpack.c.b16 %v1833, %v1831
  %v1894 = vpack.c.b16 %v1834, %v1832
  %v1895 = vpack.c.b16 %v1837, %v1835
  %v1896 = vpack.c.b16 %v1838, %v1836
  %v1897 = vpack.c.b16 %v1841, %v1839
  %v1898 = vpack.c.b16 %v1842, %v1840
  %v1899 = vpack.c.b16 %v1845, %v1843
  %v1900 = vpack.c.b16 %v1846, %v1844
  %v1952 = vunpack.c.l.b16 %v1661
  %v1953 = vunpack.c.l.b16 %v1662
  %v1954 = vunpack.c.l.b16 %v1663
  %v1955 = vunpack.c.l.b16 %v1664
  %v1956 = vunpack.c.l.b16 %v1665
  %v1957 = vunpack.c.l.b16 %v1666
  %v1958 = vunpack.c.l.b16 %v1667
  %v1959 = vunpack.c.l.b16 %v1668
  %v1960 = vunpack.c.l.b16 %v1669
  %v1961 = vunpack.c.l.b16 %v1670
  %v1962 = vunpack.c.l.b16 %v1671
  %v1963 = vunpack.c.l.b16 %v1672
  %v1964 = vunpack.c.l.b16 %v1673
  %v1965 = vunpack.c.l.b16 %v1674
  %v1966 = vunpack.c.l.b16 %v1675
  %v1967 = vunpack.c.l.b16 %v1676
  %v1968 = vunpack.c.l.b16 %v1677
  %v1969 = vunpack.c.l.b16 %v1678
  %v1970 = vunpack.c.l.b16 %v1679
  %v1971 = vunpack.c.l.b16 %v1680
  %v1972 = vunpack.c.l.b16 %v1681
  %v1973 = vunpack.c.l.b16 %v1682
  %v1974 = vunpack.c.l.b16 %v1683
  %v1975 = vunpack.c.l.b16 %v1684
  %v1976 = vpack.c.b16 %v1953, %v1952
  %v1977 = vpack.c.b16 %v1955, %v1954
  %v1978 = vpack.c.b16 %v1957, %v1956
  %v1979 = vpack.c.b16 %v1959, %v1958
  %v1980 = vpack.c.b16 %v1961, %v1960
  %v1981 = vpack.c.b16 %v1963, %v1962
  %v1982 = vpack.c.b16 %v1965, %v1964
  %v1983 = vpack.c.b16 %v1967, %v1966
  %v1984 = vpack.c.b16 %v1969, %v1968
  %v1985 = vpack.c.b16 %v1971, %v1970
  %v1986 = vpack.c.b16 %v1973, %v1972
  %v1987 = vpack.c.b16 %v1975, %v1974
  %vm2000 = vcmask 523264
  %v2002 = vsel %vm2000, %v1848, 0
  %v2005 = vsel %vm2000, %v1850, 0
  %v2008 = vsel %vm2000, %v1852, 0
  %v2011 = vsel %vm2000, %v1854, 0
  %v2014 = vsel %vm2000, %v1856, 0
  %v2017 = vsel %vm2000, %v1858, 0
  %v2020 = vsel %vm2000, %v1860, 0
  %v2023 = vsel %vm2000, %v1862, 0
  %v2026 = vsel %vm2000, %v1864, 0
  %v2029 = vsel %vm2000, %v1866, 0
  %v2032 = vsel %vm2000, %v1868, 0
  %v2035 = vsel %vm2000, %v1870, 0
  %v2038 = vsel %vm2000, %v1872, 0
  %v2041 = vsel %vm2000, %v1874, 0
  %v2044 = vsel %vm2000, %v1876, 0
  %v2047 = vsel %vm2000, %v1878, 0
  %v2050 = vsel %vm2000, %v1880, 0
  %v2053 = vsel %vm2000, %v1882, 0
  %v2056 = vsel %vm2000, %v1884, 0
  %v2059 = vsel %vm2000, %v1886, 0
  %v2062 = vsel %vm2000, %v1888, 0
  %v2065 = vsel %vm2000, %v1890, 0
  %v2068 = vsel %vm2000, %v1892, 0
  %v2071 = vsel %vm2000, %v1894, 0
  %v2074 = vsel %vm2000, %v1896, 0
  %v2077 = vsel %vm2000, %v1898, 0
  %v2080 = vsel %vm2000, %v1900, 0
  %2082 = vmatprep.subr.bf16.mxu0 0
  %2083 = vmatpush1.bf16.msra.mxu0 %v1983
  %2084 = vmatprep.subr.bf16.mxu0 0
  %2085 = vmatpush1.bf16.msra.mxu0 %v1982
  %2086 = vmatprep.subr.bf16.mxu0 0
  %2087 = vmatpush1.bf16.msra.mxu0 %v1981
  %2088 = vmatprep.subr.bf16.mxu0 0
  %2089 = vmatpush1.bf16.msra.mxu0 %v1980
  %2090 = vmatprep.subr.bf16.mxu0 0
  %2091 = vmatpush1.bf16.msra.mxu0 %v1979
  %2092 = vmatprep.subr.bf16.mxu0 0
  %2093 = vmatpush1.bf16.msra.mxu0 %v1978
  %2094 = vmatprep.subr.bf16.mxu0 0
  %2095 = vmatpush1.bf16.msra.mxu0 %v1977
  %2096 = vmatprep.subr.bf16.mxu0 0
  %2097 = vmatpush1.bf16.msra.mxu0 %v1976
  %2098 = vmatprep.subr.bf16.mxu0 0
  %2099 = vmatpush2.bf16.msra.mxu0 0
  %2100 = vmatprep.subr.bf16.mxu0 0
  %2101 = vmatpush2.bf16.msra.mxu0 0
  %2102 = vmatprep.subr.bf16.mxu0 0
  %2103 = vmatpush2.bf16.msra.mxu0 0
  %2104 = vmatprep.subr.bf16.mxu0 0
  %2105 = vmatpush2.bf16.msra.mxu0 0
  %2106 = vmatprep.subr.bf16.mxu0 0
  %2107 = vmatpush2.bf16.msra.mxu0 %v1987
  %2108 = vmatprep.subr.bf16.mxu0 0
  %2109 = vmatpush2.bf16.msra.mxu0 %v1986
  %2110 = vmatprep.subr.bf16.mxu0 0
  %2111 = vmatpush2.bf16.msra.mxu0 %v1985
  %2112 = vmatprep.subr.bf16.mxu0 0
  %2113 = vmatpush2.bf16.msra.mxu0 %v1984
  %2114 = vmatprep.mubr.bf16.mxu0 %v2002
  %2115 = vmatmul.mubr.bf16.gmra.mxu0 %v1847
  %v2116 = vpop.f32.mrf.mxu0
  %v2117 = vadd.f32 0.0, %v2116
  %v2118 = vpop.f32.mrf.mxu0
  %v2119 = vpop.f32.mrf.mxu0
  %v2120 = vadd.f32 0.0, %v2119
  %v2121 = vpop.f32.mrf.mxu0
  %2122 = vmatprep.mubr.bf16.mxu0 %v2005
  %2123 = vmatmul.mubr.bf16.gmra.mxu0 %v1849
  %v2124 = vpop.f32.mrf.mxu0
  %v2125 = vadd.f32 0.0, %v2124
  %v2126 = vpop.f32.mrf.mxu0
  %v2127 = vpop.f32.mrf.mxu0
  %v2128 = vadd.f32 0.0, %v2127
  %v2129 = vpop.f32.mrf.mxu0
  %2130 = vmatprep.mubr.bf16.mxu0 %v2008
  %2131 = vmatmul.mubr.bf16.gmra.mxu0 %v1851
  %v2132 = vpop.f32.mrf.mxu0
  %v2133 = vadd.f32 0.0, %v2132
  %v2134 = vpop.f32.mrf.mxu0
  %v2135 = vpop.f32.mrf.mxu0
  %v2136 = vadd.f32 0.0, %v2135
  %v2137 = vpop.f32.mrf.mxu0
  %2138 = vmatprep.mubr.bf16.mxu0 %v2011
  %2139 = vmatmul.mubr.bf16.gmra.mxu0 %v1853
  %v2140 = vpop.f32.mrf.mxu0
  %v2141 = vadd.f32 0.0, %v2140
  %v2142 = vpop.f32.mrf.mxu0
  %v2143 = vpop.f32.mrf.mxu0
  %v2144 = vadd.f32 0.0, %v2143
  %v2145 = vpop.f32.mrf.mxu0
  %2146 = vmatprep.mubr.bf16.mxu0 %v2014
  %2147 = vmatmul.mubr.bf16.gmra.mxu0 %v1855
  %v2148 = vpop.f32.mrf.mxu0
  %v2149 = vadd.f32 0.0, %v2148
  %v2150 = vpop.f32.mrf.mxu0
  %v2151 = vpop.f32.mrf.mxu0
  %v2152 = vadd.f32 0.0, %v2151
  %v2153 = vpop.f32.mrf.mxu0
  %2154 = vmatprep.mubr.bf16.mxu0 %v2017
  %2155 = vmatmul.mubr.bf16.gmra.mxu0 %v1857
  %v2156 = vpop.f32.mrf.mxu0
  %v2157 = vadd.f32 0.0, %v2156
  %v2158 = vpop.f32.mrf.mxu0
  %v2159 = vpop.f32.mrf.mxu0
  %v2160 = vadd.f32 0.0, %v2159
  %v2161 = vpop.f32.mrf.mxu0
  %2162 = vmatprep.mubr.bf16.mxu0 %v2020
  %2163 = vmatmul.mubr.bf16.gmra.mxu0 %v1859
  %v2164 = vpop.f32.mrf.mxu0
  %v2165 = vadd.f32 0.0, %v2164
  %v2166 = vpop.f32.mrf.mxu0
  %v2167 = vpop.f32.mrf.mxu0
  %v2168 = vadd.f32 0.0, %v2167
  %v2169 = vpop.f32.mrf.mxu0
  %2170 = vmatprep.mubr.bf16.mxu0 %v2023
  %2171 = vmatmul.mubr.bf16.gmra.mxu0 %v1861
  %v2172 = vpop.f32.mrf.mxu0
  %v2173 = vadd.f32 0.0, %v2172
  %v2174 = vpop.f32.mrf.mxu0
  %v2175 = vpop.f32.mrf.mxu0
  %v2176 = vadd.f32 0.0, %v2175
  %v2177 = vpop.f32.mrf.mxu0
  %2178 = vmatprep.mubr.bf16.mxu0 %v2026
  %2179 = vmatmul.mubr.bf16.gmra.mxu0 %v1863
  %v2180 = vpop.f32.mrf.mxu0
  %v2181 = vadd.f32 0.0, %v2180
  %v2182 = vpop.f32.mrf.mxu0
  %v2183 = vpop.f32.mrf.mxu0
  %v2184 = vadd.f32 0.0, %v2183
  %v2185 = vpop.f32.mrf.mxu0
  %2186 = vmatprep.mubr.bf16.mxu0 %v2029
  %2187 = vmatmul.mubr.bf16.gmra.mxu0 %v1865
  %v2188 = vpop.f32.mrf.mxu0
  %v2189 = vadd.f32 0.0, %v2188
  %v2190 = vpop.f32.mrf.mxu0
  %v2191 = vpop.f32.mrf.mxu0
  %v2192 = vadd.f32 0.0, %v2191
  %v2193 = vpop.f32.mrf.mxu0
  %2194 = vmatprep.mubr.bf16.mxu0 %v2032
  %2195 = vmatmul.mubr.bf16.gmra.mxu0 %v1867
  %v2196 = vpop.f32.mrf.mxu0
  %v2197 = vadd.f32 0.0, %v2196
  %v2198 = vpop.f32.mrf.mxu0
  %v2199 = vpop.f32.mrf.mxu0
  %v2200 = vadd.f32 0.0, %v2199
  %v2201 = vpop.f32.mrf.mxu0
  %2202 = vmatprep.mubr.bf16.mxu0 %v2035
  %2203 = vmatmul.mubr.bf16.gmra.mxu0 %v1869
  %v2204 = vpop.f32.mrf.mxu0
  %v2205 = vadd.f32 0.0, %v2204
  %v2206 = vpop.f32.mrf.mxu0
  %v2207 = vpop.f32.mrf.mxu0
  %v2208 = vadd.f32 0.0, %v2207
  %v2209 = vpop.f32.mrf.mxu0
  %2210 = vmatprep.mubr.bf16.mxu0 %v2038
  %2211 = vmatmul.mubr.bf16.gmra.mxu0 %v1871
  %v2212 = vpop.f32.mrf.mxu0
  %v2213 = vadd.f32 0.0, %v2212
  %v2214 = vpop.f32.mrf.mxu0
  %v2215 = vpop.f32.mrf.mxu0
  %v2216 = vadd.f32 0.0, %v2215
  %v2217 = vpop.f32.mrf.mxu0
  %2218 = vmatprep.mubr.bf16.mxu0 %v2041
  %2219 = vmatmul.mubr.bf16.gmra.mxu0 %v1873
  %v2220 = vpop.f32.mrf.mxu0
  %v2221 = vadd.f32 0.0, %v2220
  %v2222 = vpop.f32.mrf.mxu0
  %v2223 = vpop.f32.mrf.mxu0
  %v2224 = vadd.f32 0.0, %v2223
  %v2225 = vpop.f32.mrf.mxu0
  %2226 = vmatprep.mubr.bf16.mxu0 %v2044
  %2227 = vmatmul.mubr.bf16.gmra.mxu0 %v1875
  %v2228 = vpop.f32.mrf.mxu0
  %v2229 = vadd.f32 0.0, %v2228
  %v2230 = vpop.f32.mrf.mxu0
  %v2231 = vpop.f32.mrf.mxu0
  %v2232 = vadd.f32 0.0, %v2231
  %v2233 = vpop.f32.mrf.mxu0
  %2234 = vmatprep.mubr.bf16.mxu0 %v2047
  %2235 = vmatmul.mubr.bf16.gmra.mxu0 %v1877
  %v2236 = vpop.f32.mrf.mxu0
  %v2237 = vadd.f32 0.0, %v2236
  %v2238 = vpop.f32.mrf.mxu0
  %v2239 = vpop.f32.mrf.mxu0
  %v2240 = vadd.f32 0.0, %v2239
  %v2241 = vpop.f32.mrf.mxu0
  %2242 = vmatprep.mubr.bf16.mxu0 %v2050
  %2243 = vmatmul.mubr.bf16.gmra.mxu0 %v1879
  %v2244 = vpop.f32.mrf.mxu0
  %v2245 = vadd.f32 0.0, %v2244
  %v2246 = vpop.f32.mrf.mxu0
  %v2247 = vpop.f32.mrf.mxu0
  %v2248 = vadd.f32 0.0, %v2247
  %v2249 = vpop.f32.mrf.mxu0
  %2250 = vmatprep.mubr.bf16.mxu0 %v2053
  %2251 = vmatmul.mubr.bf16.gmra.mxu0 %v1881
  %v2252 = vpop.f32.mrf.mxu0
  %v2253 = vadd.f32 0.0, %v2252
  %v2254 = vpop.f32.mrf.mxu0
  %v2255 = vpop.f32.mrf.mxu0
  %v2256 = vadd.f32 0.0, %v2255
  %v2257 = vpop.f32.mrf.mxu0
  %2258 = vmatprep.mubr.bf16.mxu0 %v2056
  %2259 = vmatmul.mubr.bf16.gmra.mxu0 %v1883
  %v2260 = vpop.f32.mrf.mxu0
  %v2261 = vadd.f32 0.0, %v2260
  %v2262 = vpop.f32.mrf.mxu0
  %v2263 = vpop.f32.mrf.mxu0
  %v2264 = vadd.f32 0.0, %v2263
  %v2265 = vpop.f32.mrf.mxu0
  %2266 = vmatprep.mubr.bf16.mxu0 %v2059
  %2267 = vmatmul.mubr.bf16.gmra.mxu0 %v1885
  %v2268 = vpop.f32.mrf.mxu0
  %v2269 = vadd.f32 0.0, %v2268
  %v2270 = vpop.f32.mrf.mxu0
  %v2271 = vpop.f32.mrf.mxu0
  %v2272 = vadd.f32 0.0, %v2271
  %v2273 = vpop.f32.mrf.mxu0
  %2274 = vmatprep.mubr.bf16.mxu0 %v2062
  %2275 = vmatmul.mubr.bf16.gmra.mxu0 %v1887
  %v2276 = vpop.f32.mrf.mxu0
  %v2277 = vadd.f32 0.0, %v2276
  %v2278 = vpop.f32.mrf.mxu0
  %v2279 = vpop.f32.mrf.mxu0
  %v2280 = vadd.f32 0.0, %v2279
  %v2281 = vpop.f32.mrf.mxu0
  %2282 = vmatprep.mubr.bf16.mxu0 %v2065
  %2283 = vmatmul.mubr.bf16.gmra.mxu0 %v1889
  %v2284 = vpop.f32.mrf.mxu0
  %v2285 = vadd.f32 0.0, %v2284
  %v2286 = vpop.f32.mrf.mxu0
  %v2287 = vpop.f32.mrf.mxu0
  %v2288 = vadd.f32 0.0, %v2287
  %v2289 = vpop.f32.mrf.mxu0
  %2290 = vmatprep.mubr.bf16.mxu0 %v2068
  %2291 = vmatmul.mubr.bf16.gmra.mxu0 %v1891
  %v2292 = vpop.f32.mrf.mxu0
  %v2293 = vadd.f32 0.0, %v2292
  %v2294 = vpop.f32.mrf.mxu0
  %v2295 = vpop.f32.mrf.mxu0
  %v2296 = vadd.f32 0.0, %v2295
  %v2297 = vpop.f32.mrf.mxu0
  %2298 = vmatprep.mubr.bf16.mxu0 %v2071
  %2299 = vmatmul.mubr.bf16.gmra.mxu0 %v1893
  %v2300 = vpop.f32.mrf.mxu0
  %v2301 = vadd.f32 0.0, %v2300
  %v2302 = vpop.f32.mrf.mxu0
  %v2303 = vpop.f32.mrf.mxu0
  %v2304 = vadd.f32 0.0, %v2303
  %v2305 = vpop.f32.mrf.mxu0
  %2306 = vmatprep.mubr.bf16.mxu0 %v2074
  %2307 = vmatmul.mubr.bf16.gmra.mxu0 %v1895
  %v2308 = vpop.f32.mrf.mxu0
  %v2309 = vadd.f32 0.0, %v2308
  %v2310 = vpop.f32.mrf.mxu0
  %v2311 = vpop.f32.mrf.mxu0
  %v2312 = vadd.f32 0.0, %v2311
  %v2313 = vpop.f32.mrf.mxu0
  %2314 = vmatprep.mubr.bf16.mxu0 %v2077
  %2315 = vmatmul.mubr.bf16.gmra.mxu0 %v1897
  %v2316 = vpop.f32.mrf.mxu0
  %v2317 = vadd.f32 0.0, %v2316
  %v2318 = vpop.f32.mrf.mxu0
  %v2319 = vpop.f32.mrf.mxu0
  %v2320 = vadd.f32 0.0, %v2319
  %v2321 = vpop.f32.mrf.mxu0
  %2322 = vmatprep.mubr.bf16.mxu0 %v2080
  %2323 = vmatmul.mubr.bf16.gmra.mxu0 %v1899
  %v2324 = vpop.f32.mrf.mxu0
  %v2325 = vadd.f32 0.0, %v2324
  %v2326 = vpop.f32.mrf.mxu0
  %v2327 = vpop.f32.mrf.mxu0
  %v2328 = vadd.f32 0.0, %v2327
  %v2329 = vpop.f32.mrf.mxu0
  %2330 = vdwg.mxu0
  %2331 = vrot.lane.b32.xlu0 %v2141, 127
  %v2332 = vpop.permute.xlu0 %2331
  %2333 = vrot.lane.b32.xlu0 %v2144, 127
  %v2334 = vpop.permute.xlu0 %2333
  %2335 = vrot.lane.b32.xlu0 %v2149, 127
  %v2336 = vpop.permute.xlu0 %2335
  %2337 = vrot.lane.b32.xlu0 %v2152, 127
  %v2338 = vpop.permute.xlu0 %2337
  %2339 = vrot.lane.b32.xlu0 %v2157, 127
  %v2340 = vpop.permute.xlu0 %2339
  %2341 = vrot.lane.b32.xlu0 %v2160, 127
  %v2342 = vpop.permute.xlu0 %2341
  %v2343 = vadd.f32 %v2117, %v2332
  %v2344 = vadd.f32 %v2120, %v2334
  %v2345 = vadd.f32 %v2125, %v2336
  %v2346 = vadd.f32 %v2128, %v2338
  %v2347 = vadd.f32 %v2133, %v2340
  %v2348 = vadd.f32 %v2136, %v2342
  %2349 = vrot.lane.b32.xlu0 %v2165, 126
  %v2350 = vpop.permute.xlu0 %2349
  %2351 = vrot.lane.b32.xlu0 %v2168, 126
  %v2352 = vpop.permute.xlu0 %2351
  %2353 = vrot.lane.b32.xlu0 %v2173, 126
  %v2354 = vpop.permute.xlu0 %2353
  %2355 = vrot.lane.b32.xlu0 %v2176, 126
  %v2356 = vpop.permute.xlu0 %2355
  %2357 = vrot.lane.b32.xlu0 %v2181, 126
  %v2358 = vpop.permute.xlu0 %2357
  %2359 = vrot.lane.b32.xlu0 %v2184, 126
  %v2360 = vpop.permute.xlu0 %2359
  %v2361 = vadd.f32 %v2343, %v2350
  %v2362 = vadd.f32 %v2344, %v2352
  %v2363 = vadd.f32 %v2345, %v2354
  %v2364 = vadd.f32 %v2346, %v2356
  %v2365 = vadd.f32 %v2347, %v2358
  %v2366 = vadd.f32 %v2348, %v2360
  %2367 = vrot.lane.b32.xlu0 %v2189, 119
  %v2368 = vpop.permute.xlu0 %2367
  %2369 = vrot.lane.b32.xlu0 %v2192, 119
  %v2370 = vpop.permute.xlu0 %2369
  %2371 = vrot.lane.b32.xlu0 %v2197, 119
  %v2372 = vpop.permute.xlu0 %2371
  %2373 = vrot.lane.b32.xlu0 %v2200, 119
  %v2374 = vpop.permute.xlu0 %2373
  %2375 = vrot.lane.b32.xlu0 %v2205, 119
  %v2376 = vpop.permute.xlu0 %2375
  %2377 = vrot.lane.b32.xlu0 %v2208, 119
  %v2378 = vpop.permute.xlu0 %2377
  %v2379 = vadd.f32 %v2361, %v2368
  %v2380 = vadd.f32 %v2362, %v2370
  %v2381 = vadd.f32 %v2363, %v2372
  %v2382 = vadd.f32 %v2364, %v2374
  %v2383 = vadd.f32 %v2365, %v2376
  %v2384 = vadd.f32 %v2366, %v2378
  %2385 = vrot.lane.b32.xlu0 %v2213, 118
  %v2386 = vpop.permute.xlu0 %2385
  %2387 = vrot.lane.b32.xlu0 %v2216, 118
  %v2388 = vpop.permute.xlu0 %2387
  %2389 = vrot.lane.b32.xlu0 %v2221, 118
  %v2390 = vpop.permute.xlu0 %2389
  %2391 = vrot.lane.b32.xlu0 %v2224, 118
  %v2392 = vpop.permute.xlu0 %2391
  %2393 = vrot.lane.b32.xlu0 %v2229, 118
  %v2394 = vpop.permute.xlu0 %2393
  %2395 = vrot.lane.b32.xlu0 %v2232, 118
  %v2396 = vpop.permute.xlu0 %2395
  %v2397 = vadd.f32 %v2379, %v2386
  %v2398 = vadd.f32 %v2380, %v2388
  %v2399 = vadd.f32 %v2381, %v2390
  %v2400 = vadd.f32 %v2382, %v2392
  %v2401 = vadd.f32 %v2383, %v2394
  %v2402 = vadd.f32 %v2384, %v2396
  %2403 = vrot.lane.b32.xlu0 %v2237, 117
  %v2404 = vpop.permute.xlu0 %2403
  %2405 = vrot.lane.b32.xlu0 %v2240, 117
  %v2406 = vpop.permute.xlu0 %2405
  %2407 = vrot.lane.b32.xlu0 %v2245, 117
  %v2408 = vpop.permute.xlu0 %2407
  %2409 = vrot.lane.b32.xlu0 %v2248, 117
  %v2410 = vpop.permute.xlu0 %2409
  %2411 = vrot.lane.b32.xlu0 %v2253, 117
  %v2412 = vpop.permute.xlu0 %2411
  %2413 = vrot.lane.b32.xlu0 %v2256, 117
  %v2414 = vpop.permute.xlu0 %2413
  %v2415 = vadd.f32 %v2397, %v2404
  %v2416 = vadd.f32 %v2398, %v2406
  %v2417 = vadd.f32 %v2399, %v2408
  %v2418 = vadd.f32 %v2400, %v2410
  %v2419 = vadd.f32 %v2401, %v2412
  %v2420 = vadd.f32 %v2402, %v2414
  %2421 = vrot.lane.b32.xlu0 %v2261, 110
  %v2422 = vpop.permute.xlu0 %2421
  %2423 = vrot.lane.b32.xlu0 %v2264, 110
  %v2424 = vpop.permute.xlu0 %2423
  %2425 = vrot.lane.b32.xlu0 %v2269, 110
  %v2426 = vpop.permute.xlu0 %2425
  %2427 = vrot.lane.b32.xlu0 %v2272, 110
  %v2428 = vpop.permute.xlu0 %2427
  %2429 = vrot.lane.b32.xlu0 %v2277, 110
  %v2430 = vpop.permute.xlu0 %2429
  %2431 = vrot.lane.b32.xlu0 %v2280, 110
  %v2432 = vpop.permute.xlu0 %2431
  %v2433 = vadd.f32 %v2415, %v2422
  %v2434 = vadd.f32 %v2416, %v2424
  %v2435 = vadd.f32 %v2417, %v2426
  %v2436 = vadd.f32 %v2418, %v2428
  %v2437 = vadd.f32 %v2419, %v2430
  %v2438 = vadd.f32 %v2420, %v2432
  %2439 = vrot.lane.b32.xlu0 %v2285, 109
  %v2440 = vpop.permute.xlu0 %2439
  %2441 = vrot.lane.b32.xlu0 %v2288, 109
  %v2442 = vpop.permute.xlu0 %2441
  %2443 = vrot.lane.b32.xlu0 %v2293, 109
  %v2444 = vpop.permute.xlu0 %2443
  %2445 = vrot.lane.b32.xlu0 %v2296, 109
  %v2446 = vpop.permute.xlu0 %2445
  %2447 = vrot.lane.b32.xlu0 %v2301, 109
  %v2448 = vpop.permute.xlu0 %2447
  %2449 = vrot.lane.b32.xlu0 %v2304, 109
  %v2450 = vpop.permute.xlu0 %2449
  %v2451 = vadd.f32 %v2433, %v2440
  %v2452 = vadd.f32 %v2434, %v2442
  %v2453 = vadd.f32 %v2435, %v2444
  %v2454 = vadd.f32 %v2436, %v2446
  %v2455 = vadd.f32 %v2437, %v2448
  %v2456 = vadd.f32 %v2438, %v2450
  %2457 = vrot.lane.b32.xlu0 %v2309, 108
  %v2458 = vpop.permute.xlu0 %2457
  %2459 = vrot.lane.b32.xlu0 %v2312, 108
  %v2460 = vpop.permute.xlu0 %2459
  %2461 = vrot.lane.b32.xlu0 %v2317, 108
  %v2462 = vpop.permute.xlu0 %2461
  %2463 = vrot.lane.b32.xlu0 %v2320, 108
  %v2464 = vpop.permute.xlu0 %2463
  %2465 = vrot.lane.b32.xlu0 %v2325, 108
  %v2466 = vpop.permute.xlu0 %2465
  %2467 = vrot.lane.b32.xlu0 %v2328, 108
  %v2468 = vpop.permute.xlu0 %2467
  %v2469 = vadd.f32 %v2451, %v2458
  %v2470 = vadd.f32 %v2452, %v2460
  %v2471 = vadd.f32 %v2453, %v2462
  %v2472 = vadd.f32 %v2454, %v2464
  %v2473 = vadd.f32 %v2455, %v2466
  %v2474 = vadd.f32 %v2456, %v2468
  %vm2475 = vcmask 56320
  %2476 = vst.msk [vmem:[#allocation3] sm:$0xff] %vm2475, %v2469
  %2477 = vst.msk [vmem:[#allocation3 + $0x8] sm:$0xff] %vm2475, %v2470
  %2478 = vst.msk [vmem:[#allocation3 + $0x10] sm:$0xff] %vm2475, %v2471
  %2479 = vst.msk [vmem:[#allocation3 + $0x18] sm:$0xff] %vm2475, %v2472
  %2480 = vst.msk [vmem:[#allocation3 + $0x20] sm:$0xff] %vm2475, %v2473
  %2481 = vst.msk [vmem:[#allocation3 + $0x28] sm:$0xff] %vm2475, %v2474
  %2488 = vrot.lane.b32.xlu0 %v2469, 126
  %v2489 = vpop.permute.xlu0 %2488
  %2490 = vrot.lane.b32.xlu0 %v2470, 126
  %v2491 = vpop.permute.xlu0 %2490
  %2492 = vrot.lane.b32.xlu0 %v2471, 126
  %v2493 = vpop.permute.xlu0 %2492
  %2494 = vrot.lane.b32.xlu0 %v2472, 126
  %v2495 = vpop.permute.xlu0 %2494
  %2496 = vrot.lane.b32.xlu0 %v2473, 126
  %v2497 = vpop.permute.xlu0 %2496
  %2498 = vrot.lane.b32.xlu0 %v2474, 126
  %v2499 = vpop.permute.xlu0 %2498
  %vm2506 = vcmask 113720
  %2507 = vst.msk [vmem:[#allocation3] sm:$0xff] %vm2506, %v2489
  %2508 = vst.msk [vmem:[#allocation3 + $0x8] sm:$0xff] %vm2506, %v2491
  %2509 = vst.msk [vmem:[#allocation3 + $0x10] sm:$0xff] %vm2506, %v2493
  %2510 = vst.msk [vmem:[#allocation3 + $0x18] sm:$0xff] %vm2506, %v2495
  %2511 = vst.msk [vmem:[#allocation3 + $0x20] sm:$0xff] %vm2506, %v2497
  %2512 = vst.msk [vmem:[#allocation3 + $0x28] sm:$0xff] %vm2506, %v2499
  %2513 = vrot.lane.b32.xlu0 %v2469, 124
  %v2514 = vpop.permute.xlu0 %2513
  %2515 = vrot.lane.b32.xlu0 %v2470, 124
  %v2516 = vpop.permute.xlu0 %2515
  %2517 = vrot.lane.b32.xlu0 %v2471, 124
  %v2518 = vpop.permute.xlu0 %2517
  %2519 = vrot.lane.b32.xlu0 %v2472, 124
  %v2520 = vpop.permute.xlu0 %2519
  %2521 = vrot.lane.b32.xlu0 %v2473, 124
  %v2522 = vpop.permute.xlu0 %2521
  %2523 = vrot.lane.b32.xlu0 %v2474, 124
  %v2524 = vpop.permute.xlu0 %2523
  %vm2531 = vcmask 171120
  %2532 = vst.msk [vmem:[#allocation3] sm:$0xff] %vm2531, %v2514
  %2533 = vst.msk [vmem:[#allocation3 + $0x8] sm:$0xff] %vm2531, %v2516
  %2534 = vst.msk [vmem:[#allocation3 + $0x10] sm:$0xff] %vm2531, %v2518
  %2535 = vst.msk [vmem:[#allocation3 + $0x18] sm:$0xff] %vm2531, %v2520
  %2536 = vst.msk [vmem:[#allocation3 + $0x20] sm:$0xff] %vm2531, %v2522
  %2537 = vst.msk [vmem:[#allocation3 + $0x28] sm:$0xff] %vm2531, %v2524
  %2538 = vrot.lane.b32.xlu0 %v2469, 122
  %v2539 = vpop.permute.xlu0 %2538
  %2540 = vrot.lane.b32.xlu0 %v2470, 122
  %v2541 = vpop.permute.xlu0 %2540
  %2542 = vrot.lane.b32.xlu0 %v2471, 122
  %v2543 = vpop.permute.xlu0 %2542
  %2544 = vrot.lane.b32.xlu0 %v2472, 122
  %v2545 = vpop.permute.xlu0 %2544
  %2546 = vrot.lane.b32.xlu0 %v2473, 122
  %v2547 = vpop.permute.xlu0 %2546
  %2548 = vrot.lane.b32.xlu0 %v2474, 122
  %v2549 = vpop.permute.xlu0 %2548
  %vm2556 = vcmask 228520
  %2557 = vst.msk [vmem:[#allocation3] sm:$0xff] %vm2556, %v2539
  %2558 = vst.msk [vmem:[#allocation3 + $0x8] sm:$0xff] %vm2556, %v2541
  %2559 = vst.msk [vmem:[#allocation3 + $0x10] sm:$0xff] %vm2556, %v2543
  %2560 = vst.msk [vmem:[#allocation3 + $0x18] sm:$0xff] %vm2556, %v2545
  %2561 = vst.msk [vmem:[#allocation3 + $0x20] sm:$0xff] %vm2556, %v2547
  %2562 = vst.msk [vmem:[#allocation3 + $0x28] sm:$0xff] %vm2556, %v2549
  %2563 = vrot.lane.b32.xlu0 %v2469, 120
  %v2564 = vpop.permute.xlu0 %2563
  %2565 = vrot.lane.b32.xlu0 %v2470, 120
  %v2566 = vpop.permute.xlu0 %2565
  %2567 = vrot.lane.b32.xlu0 %v2471, 120
  %v2568 = vpop.permute.xlu0 %2567
  %2569 = vrot.lane.b32.xlu0 %v2472, 120
  %v2570 = vpop.permute.xlu0 %2569
  %2571 = vrot.lane.b32.xlu0 %v2473, 120
  %v2572 = vpop.permute.xlu0 %2571
  %2573 = vrot.lane.b32.xlu0 %v2474, 120
  %v2574 = vpop.permute.xlu0 %2573
  %vm2581 = vcmask 285920
  %2582 = vst.msk [vmem:[#allocation3] sm:$0xff] %vm2581, %v2564
  %2583 = vst.msk [vmem:[#allocation3 + $0x8] sm:$0xff] %vm2581, %v2566
  %2584 = vst.msk [vmem:[#allocation3 + $0x10] sm:$0xff] %vm2581, %v2568
  %2585 = vst.msk [vmem:[#allocation3 + $0x18] sm:$0xff] %vm2581, %v2570
  %2586 = vst.msk [vmem:[#allocation3 + $0x20] sm:$0xff] %vm2581, %v2572
  %2587 = vst.msk [vmem:[#allocation3 + $0x28] sm:$0xff] %vm2581, %v2574
  %2588 = vrot.lane.b32.xlu0 %v2469, 118
  %v2589 = vpop.permute.xlu0 %2588
  %2590 = vrot.lane.b32.xlu0 %v2470, 118
  %v2591 = vpop.permute.xlu0 %2590
  %2592 = vrot.lane.b32.xlu0 %v2471, 118
  %v2593 = vpop.permute.xlu0 %2592
  %2594 = vrot.lane.b32.xlu0 %v2472, 118
  %v2595 = vpop.permute.xlu0 %2594
  %2596 = vrot.lane.b32.xlu0 %v2473, 118
  %v2597 = vpop.permute.xlu0 %2596
  %2598 = vrot.lane.b32.xlu0 %v2474, 118
  %v2599 = vpop.permute.xlu0 %2598
  %vm2606 = vcmask 343320
  %2607 = vst.msk [vmem:[#allocation3] sm:$0xff] %vm2606, %v2589
  %2608 = vst.msk [vmem:[#allocation3 + $0x8] sm:$0xff] %vm2606, %v2591
  %2609 = vst.msk [vmem:[#allocation3 + $0x10] sm:$0xff] %vm2606, %v2593
  %2610 = vst.msk [vmem:[#allocation3 + $0x18] sm:$0xff] %vm2606, %v2595
  %2611 = vst.msk [vmem:[#allocation3 + $0x20] sm:$0xff] %vm2606, %v2597
  %2612 = vst.msk [vmem:[#allocation3 + $0x28] sm:$0xff] %vm2606, %v2599
  %2613 = vrot.lane.b32.xlu0 %v2469, 116
  %v2614 = vpop.permute.xlu0 %2613
  %2615 = vrot.lane.b32.xlu0 %v2470, 116
  %v2616 = vpop.permute.xlu0 %2615
  %2617 = vrot.lane.b32.xlu0 %v2471, 116
  %v2618 = vpop.permute.xlu0 %2617
  %2619 = vrot.lane.b32.xlu0 %v2472, 116
  %v2620 = vpop.permute.xlu0 %2619
  %2621 = vrot.lane.b32.xlu0 %v2473, 116
  %v2622 = vpop.permute.xlu0 %2621
  %2623 = vrot.lane.b32.xlu0 %v2474, 116
  %v2624 = vpop.permute.xlu0 %2623
  %vm2631 = vcmask 400720
  %2632 = vst.msk [vmem:[#allocation3] sm:$0xff] %vm2631, %v2614
  %2633 = vst.msk [vmem:[#allocation3 + $0x8] sm:$0xff] %vm2631, %v2616
  %2634 = vst.msk [vmem:[#allocation3 + $0x10] sm:$0xff] %vm2631, %v2618
  %2635 = vst.msk [vmem:[#allocation3 + $0x18] sm:$0xff] %vm2631, %v2620
  %2636 = vst.msk [vmem:[#allocation3 + $0x20] sm:$0xff] %vm2631, %v2622
  %2637 = vst.msk [vmem:[#allocation3 + $0x28] sm:$0xff] %vm2631, %v2624
  %s2638 = scalar_lea.vmem %s23, 1968
  %s2639 = scalar_lea.sflag [#allocation4], 21
  %p2641 = scmp.lt.u32.totalorder 48, 8
  %p2642 = pneg %p2641
  // Predicated region
  $region724: #{forward.1} parent=0 // pred_check
    _
  $region725: #{forward.1} parent=0 // pred_check_branch
    %2644 = sbr.rel (%p2641) target = $region727
  $region726: #{forward.1} parent=0 // pred_region
    %s2660 = sand.u32 48, 7
    %p2661 = scmp.eq.s32.totalorder %s2660, 0
    // Predicated region
    $region739: #{forward.1} parent=726 // pred_check
      %p2662 = pneg %p2661
    $region740: #{forward.1} parent=726 // pred_check_branch
      %2664 = sbr.rel (%p2662) target = $region742
    $region741: #{forward.1} parent=726 // pred_region
      loop: start=0, step=1, limit=1
      $region743: #{forward.1} parent=741 // loop_pre_header
        _
      $region744: #{forward.1} parent=741 // loop_header
        %s2666 = sphi 0, %s2670
        %p2667 = scmp.ge.s32.totalorder %s2666, 1
        %s2671 = sphi [#allocation3], [#allocation3]
        %s2672 = sphi %s2638, %s2638
      $region745: #{forward.1} parent=741 // loop_header_branch
        %2669 = sbr.rel (%p2667) target = $region749
      $region746: #{forward.1} parent=741 // loop_body
        %v2673 = vld [vmem:[%s2671] sm:$0xff]
        %2674 = vst [vmem:[%s2672] sm:$0xff] %v2673
        %v2675 = vld [vmem:[%s2671 + $0x8] sm:$0xff]
        %2676 = vst [vmem:[%s2672 + $0x8] sm:$0xff] %v2675
        %v2677 = vld [vmem:[%s2671 + $0x10] sm:$0xff]
        %2678 = vst [vmem:[%s2672 + $0x10] sm:$0xff] %v2677
        %v2679 = vld [vmem:[%s2671 + $0x18] sm:$0xff]
        %2680 = vst [vmem:[%s2672 + $0x18] sm:$0xff] %v2679
        %v2681 = vld [vmem:[%s2671 + $0x20] sm:$0xff]
        %2682 = vst [vmem:[%s2672 + $0x20] sm:$0xff] %v2681
        %v2683 = vld [vmem:[%s2671 + $0x28] sm:$0xff]
        %2684 = vst [vmem:[%s2672 + $0x28] sm:$0xff] %v2683
      $region747: #{forward.1} parent=741 // loop_footer
        %s2670 = sadd.s32 1, %s2666
      $region748: #{forward.1} parent=741 // loop_footer_branch
        %2665 = sbr.rel target = $region744
      $region749: #{forward.1} parent=741 // loop_exit
        _
    $region742: #{forward.1} parent=726 // pred_fallthru
      _
    %p2685 = pneg %p2661
    // Predicated region
    $region750: #{forward.1} parent=726 // pred_check
      _
    $region751: #{forward.1} parent=726 // pred_check_branch
      %2687 = sbr.rel (%p2661) target = $region753
    $region752: #{forward.1} parent=726 // pred_region
      %s2688 = sand.u32 48, 7
    $region753: #{forward.1} parent=726 // pred_fallthru
      _
  $region727: #{forward.1} parent=0 // pred_fallthru
    _
  // Predicated region
  $region728: #{forward.1} parent=0 // pred_check
    %p2645 = pneg %p2641
  $region729: #{forward.1} parent=0 // pred_check_branch
    %2647 = sbr.rel (%p2645) target = $region731
  $region730: #{forward.1} parent=0 // pred_region
    %s2648 = sshll.u32 1, 48
    %s2649 = ssub.s32 %s2648, 1
    loop: start=0, step=1, limit=1
    $region732: #{forward.1} parent=730 // loop_pre_header
      _
    $region733: #{forward.1} parent=730 // loop_header
      %s2651 = sphi 0, %s2655
      %p2652 = scmp.ge.s32.totalorder %s2651, 1
      %s2656 = sphi [#allocation3], [#allocation3]
      %s2657 = sphi %s2638, %s2638
    $region734: #{forward.1} parent=730 // loop_header_branch
      %2654 = sbr.rel (%p2652) target = $region738
    $region735: #{forward.1} parent=730 // loop_body
      %v2658 = vld [vmem:[%s2656] sm:%s2649]
      %2659 = vst [vmem:[%s2657] sm:%s2649] %v2658
    $region736: #{forward.1} parent=730 // loop_footer
      %s2655 = sadd.s32 1, %s2651
    $region737: #{forward.1} parent=730 // loop_footer_branch
      %2650 = sbr.rel target = $region733
    $region738: #{forward.1} parent=730 // loop_exit
      _
  $region731: #{forward.1} parent=0 // pred_fallthru
    _
  // Predicated region
  $region754: #{forward.1} parent=0 // pred_check
    _
  $region755: #{forward.1} parent=0 // pred_check_branch
    %2691 = sbr.rel (0) target = $region757
  $region756: #{forward.1} parent=0 // pred_region
    %2692 = vsyncadd %s2639, 768
  $region757: #{forward.1} parent=0 // pred_fallthru
    _
  %s2693 = smul.u32 48, 1
  %s2694 = sshll.u32 %s2693, 4
  %2695 = dma.done %s2639, %s2694
  %s2696 = smul.u32 1056, 1
  %s2697 = sshll.u32 %s2696, 4
  %2698 = dma.done [#allocation4], %s2697
  %s2699 = sshll.u32 %s2693, 4
  %2700 = dma.done %s339, %s2699
  %s2701 = sshll.u32 %s2693, 4
  %2702 = dma.done %s394, %s2701
  %s2703 = sshll.u32 %s2693, 4
  %2704 = dma.done %s449, %s2703
  %s2705 = sshll.u32 %s2693, 4
  %2706 = dma.done %s504, %s2705
  %s2707 = sshll.u32 %s2693, 4
  %2708 = dma.done %s559, %s2707
  %s2709 = sshll.u32 %s2693, 4
  %2710 = dma.done %s614, %s2709
  %s2711 = sshll.u32 %s2693, 4
  %2712 = dma.done %s669, %s2711
  %s2713 = sshll.u32 %s2693, 4
  %2714 = dma.done %s724, %s2713
  %s2715 = sshll.u32 %s2693, 4
  %2716 = dma.done %s779, %s2715
  %s2717 = sshll.u32 %s2693, 4
  %2718 = dma.done %s834, %s2717
  %s2719 = sshll.u32 %s2693, 4
  %2720 = dma.done %s889, %s2719
  %s2721 = sshll.u32 %s2693, 4
  %2722 = dma.done %s944, %s2721
  %s2723 = sshll.u32 %s2693, 4
  %2724 = dma.done %s999, %s2723
  %s2725 = sshll.u32 %s2693, 4
  %2726 = dma.done %s1054, %s2725
  %s2727 = sshll.u32 %s2693, 4
  %2728 = dma.done %s1109, %s2727
  %s2729 = sshll.u32 %s2693, 4
  %2730 = dma.done %s1164, %s2729
  %s2731 = sshll.u32 %s2693, 4
  %2732 = dma.done %s1219, %s2731
  %s2733 = sshll.u32 %s2693, 4
  %2734 = dma.done %s1274, %s2733
  %s2735 = sshll.u32 %s2693, 4
  %2736 = dma.done %s1329, %s2735
  %s2737 = sshll.u32 %s2693, 4
  %2738 = dma.done %s1384, %s2737
  %2739 = vsyncmov [#allocation4]
  %s2740 = vpop.sfrf %2739
  %p2741 = scmp.eq.s32.totalorder %s2740, 0
  %p2742 = pneg %p2741
  %2744 = shalt.err (%p2742)
  %s2745 = scalar_lea.sflag [#allocation4], 1
  %2746 = vsyncmov %s2745
  %s2747 = vpop.sfrf %2746
  %p2748 = scmp.eq.s32.totalorder %s2747, 0
  %p2749 = pneg %p2748
  %2751 = shalt.err (%p2749)
  %s2752 = scalar_lea.sflag [#allocation4], 2
  %2753 = vsyncmov %s2752
  %s2754 = vpop.sfrf %2753
  %p2755 = scmp.eq.s32.totalorder %s2754, 0
  %p2756 = pneg %p2755
  %2758 = shalt.err (%p2756)
  %s2759 = scalar_lea.sflag [#allocation4], 3
  %2760 = vsyncmov %s2759
  %s2761 = vpop.sfrf %2760
  %p2762 = scmp.eq.s32.totalorder %s2761, 0
  %p2763 = pneg %p2762
  %2765 = shalt.err (%p2763)
  %s2766 = scalar_lea.sflag [#allocation4], 4
  %2767 = vsyncmov %s2766
  %s2768 = vpop.sfrf %2767
  %p2769 = scmp.eq.s32.totalorder %s2768, 0
  %p2770 = pneg %p2769
  %2772 = shalt.err (%p2770)
  %s2773 = scalar_lea.sflag [#allocation4], 5
  %2774 = vsyncmov %s2773
  %s2775 = vpop.sfrf %2774
  %p2776 = scmp.eq.s32.totalorder %s2775, 0
  %p2777 = pneg %p2776
  %2779 = shalt.err (%p2777)
  %s2780 = scalar_lea.sflag [#allocation4], 6
  %2781 = vsyncmov %s2780
  %s2782 = vpop.sfrf %2781
  %p2783 = scmp.eq.s32.totalorder %s2782, 0
  %p2784 = pneg %p2783
  %2786 = shalt.err (%p2784)
  %s2787 = scalar_lea.sflag [#allocation4], 7
  %2788 = vsyncmov %s2787
  %s2789 = vpop.sfrf %2788
  %p2790 = scmp.eq.s32.totalorder %s2789, 0
  %p2791 = pneg %p2790
  %2793 = shalt.err (%p2791)
  %s2794 = scalar_lea.sflag [#allocation4], 8
  %2795 = vsyncmov %s2794
  %s2796 = vpop.sfrf %2795
  %p2797 = scmp.eq.s32.totalorder %s2796, 0
  %p2798 = pneg %p2797
  %2800 = shalt.err (%p2798)
  %s2801 = scalar_lea.sflag [#allocation4], 9
  %2802 = vsyncmov %s2801
  %s2803 = vpop.sfrf %2802
  %p2804 = scmp.eq.s32.totalorder %s2803, 0
  %p2805 = pneg %p2804
  %2807 = shalt.err (%p2805)
  %s2808 = scalar_lea.sflag [#allocation4], 10
  %2809 = vsyncmov %s2808
  %s2810 = vpop.sfrf %2809
  %p2811 = scmp.eq.s32.totalorder %s2810, 0
  %p2812 = pneg %p2811
  %2814 = shalt.err (%p2812)
  %s2815 = scalar_lea.sflag [#allocation4], 11
  %2816 = vsyncmov %s2815
  %s2817 = vpop.sfrf %2816
  %p2818 = scmp.eq.s32.totalorder %s2817, 0
  %p2819 = pneg %p2818
  %2821 = shalt.err (%p2819)
  %s2822 = scalar_lea.sflag [#allocation4], 12
  %2823 = vsyncmov %s2822
  %s2824 = vpop.sfrf %2823
  %p2825 = scmp.eq.s32.totalorder %s2824, 0
  %p2826 = pneg %p2825
  %2828 = shalt.err (%p2826)
  %s2829 = scalar_lea.sflag [#allocation4], 13
  %2830 = vsyncmov %s2829
  %s2831 = vpop.sfrf %2830
  %p2832 = scmp.eq.s32.totalorder %s2831, 0
  %p2833 = pneg %p2832
  %2835 = shalt.err (%p2833)
  %s2836 = scalar_lea.sflag [#allocation4], 14
  %2837 = vsyncmov %s2836
  %s2838 = vpop.sfrf %2837
  %p2839 = scmp.eq.s32.totalorder %s2838, 0
  %p2840 = pneg %p2839
  %2842 = shalt.err (%p2840)
  %s2843 = scalar_lea.sflag [#allocation4], 15
  %2844 = vsyncmov %s2843
  %s2845 = vpop.sfrf %2844
  %p2846 = scmp.eq.s32.totalorder %s2845, 0
  %p2847 = pneg %p2846
  %2849 = shalt.err (%p2847)
  %s2850 = scalar_lea.sflag [#allocation4], 16
  %2851 = vsyncmov %s2850
  %s2852 = vpop.sfrf %2851
  %p2853 = scmp.eq.s32.totalorder %s2852, 0
  %p2854 = pneg %p2853
  %2856 = shalt.err (%p2854)
  %s2857 = scalar_lea.sflag [#allocation4], 17
  %2858 = vsyncmov %s2857
  %s2859 = vpop.sfrf %2858
  %p2860 = scmp.eq.s32.totalorder %s2859, 0
  %p2861 = pneg %p2860
  %2863 = shalt.err (%p2861)
  %s2864 = scalar_lea.sflag [#allocation4], 18
  %2865 = vsyncmov %s2864
  %s2866 = vpop.sfrf %2865
  %p2867 = scmp.eq.s32.totalorder %s2866, 0
  %p2868 = pneg %p2867
  %2870 = shalt.err (%p2868)
  %s2871 = scalar_lea.sflag [#allocation4], 19
  %2872 = vsyncmov %s2871
  %s2873 = vpop.sfrf %2872
  %p2874 = scmp.eq.s32.totalorder %s2873, 0
  %p2875 = pneg %p2874
  %2877 = shalt.err (%p2875)
  %s2878 = scalar_lea.sflag [#allocation4], 20
  %2879 = vsyncmov %s2878
  %s2880 = vpop.sfrf %2879
  %p2881 = scmp.eq.s32.totalorder %s2880, 0
  %p2882 = pneg %p2881
  %2884 = shalt.err (%p2882)
  %s2885 = scalar_lea.sflag [#allocation4], 21
  %2886 = vsyncmov %s2885
  %s2887 = vpop.sfrf %2886
  %p2888 = scmp.eq.s32.totalorder %s2887, 0
  %p2889 = pneg %p2888
  %2891 = shalt.err (%p2889)

</llo_original>
